<compile_context>
chip_gen: v7x
topology: tpu7x:2x2x1
jax: 0.10.0
libtpu: 0.0.40
codegen_flags: <defaults>
</compile_context>

<pallas_src>
import math

import jax
import jax.numpy as jnp
from jax import lax
from jax.experimental import pallas as pl
from jax.experimental.pallas import tpu as pltpu

MXU_DTYPE = jnp.bfloat16            # matmul input dtype (accumulation stays f32)
LN_EPS = 1e-5


def _tpu_defaults():
    """Generation-dependent scoped-VMEM cap and row-tile target."""
    vmem = None
    try:
        info = pltpu.get_tpu_info()
        for name in ("vmem_capacity_bytes", "vmem_size_bytes", "vmem_bytes"):
            v = getattr(info, name, None)
            if v:
                vmem = int(v)
                break
    except Exception:
        vmem = None
    if not vmem:
        vmem = 64 * 1024 * 1024                       # conservative (v7x per-TC)
    vmem_limit = min(int(vmem * 3 // 4), 112 * 1024 * 1024)
    row_tile = 1024 if vmem >= 96 * 1024 * 1024 else 512
    return vmem_limit, row_tile


VMEM_LIMIT_BYTES, ROW_TILE = _tpu_defaults()
ATTN_Q_TILE = 256                    # query-row tile for the attention sub-layers


# ---------------------------------------------------------------------------
# Small helpers
# ---------------------------------------------------------------------------
def _cparams(n_axes):
    return pltpu.CompilerParams(
        dimension_semantics=("parallel",) * n_axes,
        vmem_limit_bytes=VMEM_LIMIT_BYTES)


def _row_tile(m, target):
    """cdiv-friendly row tile: full array if it fits, else a fixed multiple-of-8
    tile (the ragged last block is handled by Pallas' masked writes)."""
    if m <= target:
        return m
    return target


def _bf16(x):
    return x.astype(jnp.bfloat16)


def _layernorm_f32(h, g, b):
    mu = jnp.mean(h, axis=-1, keepdims=True)
    var = jnp.mean(jnp.square(h - mu), axis=-1, keepdims=True)
    return (h - mu) * lax.rsqrt(var + LN_EPS) * g + b


def _mha_out(q_all, k_all, v_all, wo, nhead, dh):
    """Per-head scaled-dot-product attention with the head concat folded into the
    out-projection: returns sum_h softmax(q_h k_h^T) v_h @ wo[h*dh:(h+1)*dh, :].
    q_all (Tq, D), k_all/v_all (Tk, D), wo (D, D) -- all already MXU_DTYPE.
    The softmax scale is already folded into the Q projection."""
    acc = None
    for h in range(nhead):
        sl = slice(h * dh, (h + 1) * dh)
        # contract the dh dims directly (no materialized transpose of K)
        s = lax.dot_general(q_all[:, sl], k_all[:, sl], (((1,), (1,)), ((), ())),
                            preferred_element_type=jnp.float32)
        s = s - jnp.max(s, axis=-1, keepdims=True)
        p = jnp.exp(s)
        p = p * pl.reciprocal(jnp.sum(p, axis=-1, keepdims=True), approx=True)
        o_h = jnp.dot(p.astype(MXU_DTYPE), v_all[:, sl],
                      preferred_element_type=jnp.float32)           # (Tq, dh)
        c = jnp.dot(o_h.astype(MXU_DTYPE), wo[sl, :],
                    preferred_element_type=jnp.float32)              # (Tq, D)
        acc = c if acc is None else acc + c
    return acc


# ---------------------------------------------------------------------------
# Pallas kernels
# ---------------------------------------------------------------------------
def _make_self_attn_sublayer_kernel(nhead, d):
    dh = d // nhead

    def kernel(xq_ref, xf_ref, wq_ref, bq_ref, wkv_ref, bkv_ref,
               wo_ref, bo_ref, g_ref, beta_ref, o_ref):
        xq = xq_ref[...]                                          # (tq, D)
        q = (jnp.dot(xq.astype(MXU_DTYPE), wq_ref[...],
                     preferred_element_type=jnp.float32)
             + bq_ref[...]).astype(MXU_DTYPE)
        kv = (jnp.dot(xf_ref[...].astype(MXU_DTYPE), wkv_ref[...],
                      preferred_element_type=jnp.float32)
              + bkv_ref[...]).astype(MXU_DTYPE)                    # (T, 2D)
        attn = _mha_out(q, kv[:, :d], kv[:, d:], wo_ref[...], nhead, dh)
        h = xq.astype(jnp.float32) + attn + bo_ref[...]           # residual
        o_ref[...] = _layernorm_f32(h, g_ref[...], beta_ref[...]).astype(o_ref.dtype)

    return kernel


def _make_cross_attn_sublayer_kernel(nhead, d):
    dh = d // nhead

    def kernel(xq_ref, wq_ref, bq_ref, kv_ref, wo_ref, bo_ref, g_ref, beta_ref, o_ref):
        xq = xq_ref[...]                                          # (tq, D)
        q = (jnp.dot(xq.astype(MXU_DTYPE), wq_ref[...],
                     preferred_element_type=jnp.float32)
             + bq_ref[...]).astype(MXU_DTYPE)
        kv = kv_ref[...]                                          # (Nk, 2D) bf16, shared
        attn = _mha_out(q, kv[:, :d], kv[:, d:], wo_ref[...], nhead, dh)
        h = xq.astype(jnp.float32) + attn + bo_ref[...]
        o_ref[...] = _layernorm_f32(h, g_ref[...], beta_ref[...]).astype(o_ref.dtype)

    return kernel


def _ffn_sublayer_kernel(h_ref, w1_ref, b1_ref, w2_ref, b2_ref, g_ref, beta_ref, o_ref):
    h = h_ref[...].astype(jnp.float32)
    f = jnp.dot(h_ref[...].astype(MXU_DTYPE), w1_ref[...],
                preferred_element_type=jnp.float32) + b1_ref[...]
    f = jnp.maximum(f, 0.0)
    y = jnp.dot(f.astype(MXU_DTYPE), w2_ref[...],
                preferred_element_type=jnp.float32) + b2_ref[...]
    o_ref[...] = _layernorm_f32(h + y, g_ref[...], beta_ref[...]).astype(o_ref.dtype)


def _knowledge_kv_kernel(feats_ref, wkp_ref, bkp_ref, wkv_ref, bkv_ref, o_ref):
    # knowledge_proj + all 3 cross blocks' K/V projections in one kernel (bf16 out).
    e = jnp.dot(feats_ref[...].astype(MXU_DTYPE), wkp_ref[...],
                preferred_element_type=jnp.float32) + bkp_ref[...]
    kv = jnp.dot(e.astype(MXU_DTYPE), wkv_ref[...],
                 preferred_element_type=jnp.float32) + bkv_ref[...]
    o_ref[...] = kv.astype(o_ref.dtype)


def _make_heads_kernel(T):
    inv = 1.0 / float(T - 1)

    def kernel(x_ref, cls_ref, wdis_ref, bdis_ref, wmuc_ref, bmuc_ref,
               dis_ref, muc_ref):
        # fused tail: mean over patch (non-CLS) tokens + disease head + mucosa head.
        # patch mean computed as (sum over all T - row 0)/(T-1) to avoid the
        # tile-boundary-crossing x[:, 1:, :] slice.
        x = x_ref[...].astype(jnp.float32)                        # (B, T, D)
        total = jnp.sum(x, axis=1)                                # (B, D)
        first = jnp.sum(x[:, 0:1, :], axis=1)                     # (B, D)
        pooled = (total - first) * inv
        dis_ref[...] = (jnp.dot(pooled.astype(MXU_DTYPE), wdis_ref[...],
                                preferred_element_type=jnp.float32)
                        + bdis_ref[...]).astype(dis_ref.dtype)
        muc_ref[...] = (jnp.dot(cls_ref[...].astype(MXU_DTYPE), wmuc_ref[...],
                                preferred_element_type=jnp.float32)
                        + bmuc_ref[...]).astype(muc_ref.dtype)

    return kernel


def _make_linear_kernel(relu):
    def kernel(x_ref, w_ref, b_ref, o_ref):
        y = jnp.dot(x_ref[...].astype(MXU_DTYPE), w_ref[...],
                    preferred_element_type=jnp.float32) + b_ref[...]
        if relu:
            y = jnp.maximum(y, 0.0)
        o_ref[...] = y.astype(o_ref.dtype)
    return kernel


# ---------------------------------------------------------------------------
# Pallas wrappers
# ---------------------------------------------------------------------------
def pallas_linear(x2d, w, b, relu=False):
    m, din = x2d.shape
    dout = w.shape[1]
    tm = _row_tile(m, ROW_TILE)
    return pl.pallas_call(
        _make_linear_kernel(relu),
        out_shape=jax.ShapeDtypeStruct((m, dout), x2d.dtype),
        grid=(pl.cdiv(m, tm),),
        in_specs=[pl.BlockSpec((tm, din), lambda i: (i, 0)),
                  pl.BlockSpec((din, dout), lambda i: (0, 0)),
                  pl.BlockSpec((1, dout), lambda i: (0, 0))],
        out_specs=pl.BlockSpec((tm, dout), lambda i: (i, 0)),
        compiler_params=_cparams(1),
    )(x2d, w, b.reshape(1, dout))


def self_attn_sublayer(x, p, nhead):
    B, T, D = x.shape
    tq = _row_tile(T, ATTN_Q_TILE)
    return pl.pallas_call(
        _make_self_attn_sublayer_kernel(nhead, D),
        out_shape=jax.ShapeDtypeStruct((B, T, D), x.dtype),
        grid=(B, pl.cdiv(T, tq)),
        in_specs=[pl.BlockSpec((None, tq, D), lambda b, q: (b, q, 0)),   # Q rows
                  pl.BlockSpec((None, T, D), lambda b, q: (b, 0, 0)),    # full K/V src
                  pl.BlockSpec((D, D), lambda b, q: (0, 0)),
                  pl.BlockSpec((1, D), lambda b, q: (0, 0)),
                  pl.BlockSpec((D, 2 * D), lambda b, q: (0, 0)),
                  pl.BlockSpec((1, 2 * D), lambda b, q: (0, 0)),
                  pl.BlockSpec((D, D), lambda b, q: (0, 0)),
                  pl.BlockSpec((1, D), lambda b, q: (0, 0)),
                  pl.BlockSpec((1, D), lambda b, q: (0, 0)),
                  pl.BlockSpec((1, D), lambda b, q: (0, 0))],
        out_specs=pl.BlockSpec((None, tq, D), lambda b, q: (b, q, 0)),
        compiler_params=_cparams(2),
    )(x, x, p["wq"], p["bq"].reshape(1, -1), p["w_kv"], p["b_kv"].reshape(1, -1),
      p["wo"], p["bo"].reshape(1, -1), p["ln1_g"].reshape(1, -1),
      p["ln1_b"].reshape(1, -1))


def cross_attn_sublayer(x, know_kv, p, nhead):
    B, T, D = x.shape
    nk = know_kv.shape[0]
    tq = _row_tile(T, ATTN_Q_TILE)
    return pl.pallas_call(
        _make_cross_attn_sublayer_kernel(nhead, D),
        out_shape=jax.ShapeDtypeStruct((B, T, D), x.dtype),
        grid=(B, pl.cdiv(T, tq)),
        in_specs=[pl.BlockSpec((None, tq, D), lambda b, q: (b, q, 0)),
                  pl.BlockSpec((D, D), lambda b, q: (0, 0)),
                  pl.BlockSpec((1, D), lambda b, q: (0, 0)),
                  # shared knowledge K/V (bf16): broadcast across batch via index_map
                  pl.BlockSpec((nk, 2 * D), lambda b, q: (0, 0)),
                  pl.BlockSpec((D, D), lambda b, q: (0, 0)),
                  pl.BlockSpec((1, D), lambda b, q: (0, 0)),
                  pl.BlockSpec((1, D), lambda b, q: (0, 0)),
                  pl.BlockSpec((1, D), lambda b, q: (0, 0))],
        out_specs=pl.BlockSpec((None, tq, D), lambda b, q: (b, q, 0)),
        compiler_params=_cparams(2),
    )(x, p["wq"], p["bq"].reshape(1, -1), know_kv, p["wo"], p["bo"].reshape(1, -1),
      p["ln1_g"].reshape(1, -1), p["ln1_b"].reshape(1, -1))


def ffn_sublayer(h3d, p):
    B, T, D = h3d.shape
    ff = p["w1"].shape[1]
    m = B * T
    tm = _row_tile(m, ROW_TILE)
    out = pl.pallas_call(
        _ffn_sublayer_kernel,
        out_shape=jax.ShapeDtypeStruct((m, D), h3d.dtype),
        grid=(pl.cdiv(m, tm),),
        in_specs=[pl.BlockSpec((tm, D), lambda i: (i, 0)),
                  pl.BlockSpec((D, ff), lambda i: (0, 0)),
                  pl.BlockSpec((1, ff), lambda i: (0, 0)),
                  pl.BlockSpec((ff, D), lambda i: (0, 0)),
                  pl.BlockSpec((1, D), lambda i: (0, 0)),
                  pl.BlockSpec((1, D), lambda i: (0, 0)),
                  pl.BlockSpec((1, D), lambda i: (0, 0))],
        out_specs=pl.BlockSpec((tm, D), lambda i: (i, 0)),
        compiler_params=_cparams(1),
    )(h3d.reshape(m, D), p["w1"], p["b1"].reshape(1, -1), p["w2"],
      p["b2"].reshape(1, -1), p["ln2_g"].reshape(1, -1), p["ln2_b"].reshape(1, -1))
    return out.reshape(B, T, D)


def knowledge_kv_all(knowledge_feats, kproj, w_kv_all, b_kv_all):
    nk, tw = knowledge_feats.shape
    d = kproj["w"].shape[1]
    dout = w_kv_all.shape[1]
    return pl.pallas_call(
        _knowledge_kv_kernel,
        out_shape=jax.ShapeDtypeStruct((nk, dout), jnp.bfloat16),
        grid=(1,),
        in_specs=[pl.BlockSpec((nk, tw), lambda i: (0, 0)),
                  pl.BlockSpec((tw, d), lambda i: (0, 0)),
                  pl.BlockSpec((1, d), lambda i: (0, 0)),
                  pl.BlockSpec((d, dout), lambda i: (0, 0)),
                  pl.BlockSpec((1, dout), lambda i: (0, 0))],
        out_specs=pl.BlockSpec((nk, dout), lambda i: (0, 0)),
        compiler_params=_cparams(1),
    )(knowledge_feats, kproj["w"], kproj["b"].reshape(1, -1),
      w_kv_all, b_kv_all.reshape(1, -1))


def classifier_heads(visual_embeds, cls_tokens, dis_p, muc_p):
    B, T, D = visual_embeds.shape
    ndis = dis_p["w"].shape[1]
    nmuc = muc_p["w"].shape[1]
    return pl.pallas_call(
        _make_heads_kernel(T),
        out_shape=(jax.ShapeDtypeStruct((B, ndis), visual_embeds.dtype),
                   jax.ShapeDtypeStruct((B, nmuc), visual_embeds.dtype)),
        grid=(1,),
        in_specs=[pl.BlockSpec((B, T, D), lambda i: (0, 0, 0)),
                  pl.BlockSpec((B, D), lambda i: (0, 0)),
                  pl.BlockSpec((D, ndis), lambda i: (0, 0)),
                  pl.BlockSpec((1, ndis), lambda i: (0, 0)),
                  pl.BlockSpec((D, nmuc), lambda i: (0, 0)),
                  pl.BlockSpec((1, nmuc), lambda i: (0, 0))],
        out_specs=(pl.BlockSpec((B, ndis), lambda i: (0, 0)),
                   pl.BlockSpec((B, nmuc), lambda i: (0, 0))),
        compiler_params=_cparams(1),
    )(visual_embeds, cls_tokens, dis_p["w"], dis_p["b"].reshape(1, -1),
      muc_p["w"], muc_p["b"].reshape(1, -1))


# ---------------------------------------------------------------------------
# Model blocks (post-LN, relu activation, dropout = identity / eval)
# ---------------------------------------------------------------------------
def transformer_encoder_layer(x, p, nhead):
    h = self_attn_sublayer(x, p, nhead)      # attn + out-proj + residual + LN1
    return ffn_sublayer(h, p)                # FFN + residual + LN2


def cross_attention_block(x, know_kv, p, nhead):
    # TODO(synk): CrossAttentionBlock is not defined in the reference source;
    # implemented as the canonical post-LN cross-attn + FFN residual block.
    h = cross_attn_sublayer(x, know_kv, p, nhead)
    return ffn_sublayer(h, p)


# ---------------------------------------------------------------------------
# Deterministic parameter construction (bf16 weights, scale folding, K|V fusion)
# ---------------------------------------------------------------------------
def _lin(key, din, dout):
    return {"w": _bf16(jax.random.normal(key, (din, dout), jnp.float32) * 0.02),
            "b": jnp.zeros((dout,), jnp.float32)}


def _block_params(key, d, ff, nhead):
    ks = jax.random.split(key, 6)
    scale = 1.0 / math.sqrt(d // nhead)
    wq = jax.random.normal(ks[0], (d, d), jnp.float32) * 0.02
    wk = jax.random.normal(ks[1], (d, d), jnp.float32) * 0.02
    wv = jax.random.normal(ks[2], (d, d), jnp.float32) * 0.02
    # 1/sqrt(dh) softmax scale folded into the Q projection (bias is zero so the
    # folded bias stays zero); K|V projections fused into one (D, 2D) matmul.
    return {
        "wq": _bf16(wq * scale), "bq": jnp.zeros((d,), jnp.float32),
        "w_kv": _bf16(jnp.concatenate([wk, wv], axis=1)),
        "b_kv": jnp.zeros((2 * d,), jnp.float32),
        "wo": _bf16(jax.random.normal(ks[3], (d, d), jnp.float32) * 0.02),
        "bo": jnp.zeros((d,), jnp.float32),
        "ln1_g": jnp.ones((d,), jnp.float32), "ln1_b": jnp.zeros((d,), jnp.float32),
        "w1": _bf16(jax.random.normal(ks[4], (d, ff), jnp.float32) * 0.02),
        "b1": jnp.zeros((ff,), jnp.float32),
        "w2": _bf16(jax.random.normal(ks[5], (ff, d), jnp.float32) * 0.02),
        "b2": jnp.zeros((d,), jnp.float32),
        "ln2_g": jnp.ones((d,), jnp.float32), "ln2_b": jnp.zeros((d,), jnp.float32),
    }


def build_params(key, vision_width, text_width, dec_hidden,
                 n_mucosa, n_disease, ff_dim, nhead):
    ks = jax.random.split(key, 8)
    cross_blocks = [_block_params(ks[1 + i], vision_width, ff_dim, nhead)
                    for i in range(3)]
    return {
        "self_attn": _block_params(ks[0], vision_width, ff_dim, nhead),
        "cross_blocks": cross_blocks,
        # all three cross blocks' knowledge K/V projections fused into one matmul
        "w_kv_all": jnp.concatenate([b["w_kv"] for b in cross_blocks], axis=1),
        "b_kv_all": jnp.concatenate([b["b_kv"] for b in cross_blocks]),
        "kproj": _lin(ks[4], text_width, vision_width),
        "vproj": _lin(ks[5], vision_width, dec_hidden),
        "mucosa": _lin(ks[6], vision_width, n_mucosa),
        "disease": _lin(ks[7], vision_width, n_disease),
    }


# ---------------------------------------------------------------------------
# Image2ReportModel forward (trainable-head portion)
# ---------------------------------------------------------------------------
def image2report_forward(params, visual_tokens, cls_tokens, knowledge_feats,
                         prompt_embeds, nhead=8):
    """visual_tokens/cls_tokens stand in for the frozen CLIP vision encoder +
    adaptive-avg-pool outputs of encode_images(); knowledge_feats stands in for
    the frozen CLIP text CLS features read from the excel knowledge base."""
    B, T, D = visual_tokens.shape

    # self_attn = nn.TransformerEncoder(1 layer) over pooled visual tokens
    visual_embeds = transformer_encoder_layer(visual_tokens, params["self_attn"], nhead)

    # knowledge_proj + K/V projections for all 3 cross blocks, computed ONCE for the
    # shared knowledge table (bf16; the attention kernels reuse it for every batch
    # element and every q-tile through a constant index_map).
    know_kv = knowledge_kv_all(knowledge_feats, params["kproj"],
                               params["w_kv_all"], params["b_kv_all"])

    for i, blk in enumerate(params["cross_blocks"]):
        kv_i = know_kv[:, i * 2 * D:(i + 1) * 2 * D]
        visual_embeds = cross_attention_block(visual_embeds, kv_i, blk, nhead)

    # visual_proj -> decoder hidden size, concat with prompt embeddings
    vproj = pallas_linear(visual_embeds.reshape(B * T, D),
                          params["vproj"]["w"], params["vproj"]["b"])
    prefix_embeds = jnp.concatenate([prompt_embeds, vproj.reshape(B, T, -1)], axis=1)

    # fused tail: mean over patch (non-CLS) tokens + disease head + mucosa head
    disease_logits, mucosa_logits = classifier_heads(
        visual_embeds, cls_tokens, params["disease"], params["mucosa"])

    # TODO(synk): the frozen CLIP encoders/tokenizers and the HuggingFace causal-LM
    # decoder call (LM loss/logits over [prefix_embeds; target_embeds]) have no clean
    # Pallas equivalent; prefix_embeds is returned in place of (loss, logits).
    return prefix_embeds, mucosa_logits, disease_logits


# ---------------------------------------------------------------------------
if __name__ == "__main__":
    B = 2                    # batch
    num_frames = 2
    tokens_per_frame = 3
    T = num_frames * (tokens_per_frame + 1)   # 8 pooled visual tokens
    vision_width = 32        # CLIP vision hidden (must divide by nhead=8)
    text_width = 24          # CLIP text hidden
    dec_hidden = 32          # decoder hidden size
    n_mucosa, n_disease = 5, 6
    n_knowledge = 4          # rows of the knowledge excel
    prompt_len = 4
    ff_dim = 64              # (torch default is 2048; shrunk for the synthetic test)
    nhead = 8

    key = jax.random.PRNGKey(0)
    k_params, k_vis, k_cls, k_know, k_prompt = jax.random.split(key, 5)

    params = build_params(k_params, vision_width, text_width, dec_hidden,
                          n_mucosa, n_disease, ff_dim, nhead)

    visual_tokens = jax.random.normal(k_vis, (B, T, vision_width), jnp.float32)
    cls_tokens = jax.random.normal(k_cls, (B, vision_width), jnp.float32)
    knowledge_feats = jax.random.normal(k_know, (n_knowledge, text_width), jnp.float32)
    prompt_embeds = jax.random.normal(k_prompt, (B, prompt_len, dec_hidden), jnp.float32)

    fwd = jax.jit(image2report_forward, static_argnames="nhead")
    prefix_embeds, mucosa_logits, disease_logits = fwd(
        params, visual_tokens, cls_tokens, knowledge_feats, prompt_embeds, nhead=nhead)

    jax.block_until_ready((prefix_embeds, mucosa_logits, disease_logits))
    assert prefix_embeds.shape == (B, prompt_len + T, dec_hidden)
    assert mucosa_logits.shape == (B, n_mucosa)
    assert disease_logits.shape == (B, n_disease)
    assert bool(jnp.all(jnp.isfinite(prefix_embeds)))
    assert bool(jnp.all(jnp.isfinite(mucosa_logits)))
    assert bool(jnp.all(jnp.isfinite(disease_logits)))
    print("KERNEL_OK")
</pallas_src>

<mosaic_0001>
module attributes {stable_mosaic.version = 11 : i64} {
  func.func @_knowledge_kv_kernel(%arg0: i32, %arg1: memref<4x24xf32, #tpu.memory_space<vmem>>, %arg2: memref<24x32xbf16, #tpu.memory_space<vmem>>, %arg3: memref<1x32xf32, #tpu.memory_space<vmem>>, %arg4: memref<32x192xbf16, #tpu.memory_space<vmem>>, %arg5: memref<1x192xf32, #tpu.memory_space<vmem>>, %arg6: memref<4x192xbf16, #tpu.memory_space<vmem>>) attributes {dimension_semantics = [#tpu.dimension_semantics<parallel>], iteration_bounds = array<i64: 1>, scalar_prefetch = 0 : i64, scratch_operands = 0 : i64, tpu.core_type = #tpu.core_type<tc>, window_params = [{pipeline_mode = #tpu.pipeline_mode<synchronous>, transform_indices = @transform_0, window_bounds = array<i64: 4, 24>}, {pipeline_mode = #tpu.pipeline_mode<synchronous>, transform_indices = @transform_1, window_bounds = array<i64: 24, 32>}, {pipeline_mode = #tpu.pipeline_mode<synchronous>, transform_indices = @transform_2, window_bounds = array<i64: 1, 32>}, {pipeline_mode = #tpu.pipeline_mode<synchronous>, transform_indices = @transform_3, window_bounds = array<i64: 32, 192>}, {pipeline_mode = #tpu.pipeline_mode<synchronous>, transform_indices = @transform_4, window_bounds = array<i64: 1, 192>}, {pipeline_mode = #tpu.pipeline_mode<synchronous>, transform_indices = @transform_5, window_bounds = array<i64: 4, 192>}]} {
    %c0 = arith.constant 0 : index
    %c0_0 = arith.constant 0 : index
    %0 = vector.load %arg1[%c0, %c0_0] : memref<4x24xf32, #tpu.memory_space<vmem>>, vector<4x24xf32>
    %1 = arith.truncf %0 : vector<4x24xf32> to vector<4x24xbf16>
    %c0_1 = arith.constant 0 : index
    %c0_2 = arith.constant 0 : index
    %2 = vector.load %arg2[%c0_1, %c0_2] : memref<24x32xbf16, #tpu.memory_space<vmem>>, vector<24x32xbf16>
    %cst = arith.constant dense<0.000000e+00> : vector<4x32xf32>
    %3 = tpu.matmul %1, %2, %cst {dimension_numbers = #tpu.dot_dimension_numbers<[1], [0], [0], [1], [0, 0, 1, 1], [], []>} : vector<4x24xbf16>, vector<24x32xbf16>, vector<4x32xf32> -> vector<4x32xf32>
    %c0_3 = arith.constant 0 : index
    %c0_4 = arith.constant 0 : index
    %4 = vector.load %arg3[%c0_3, %c0_4] : memref<1x32xf32, #tpu.memory_space<vmem>>, vector<1x32xf32>
    %5 = vector.broadcast %4 : vector<1x32xf32> to vector<4x32xf32>
    %6 = arith.addf %3, %5 : vector<4x32xf32>
    %7 = arith.truncf %6 : vector<4x32xf32> to vector<4x32xbf16>
    %c0_5 = arith.constant 0 : index
    %c0_6 = arith.constant 0 : index
    %8 = vector.load %arg4[%c0_5, %c0_6] : memref<32x192xbf16, #tpu.memory_space<vmem>>, vector<32x192xbf16>
    %cst_7 = arith.constant dense<0.000000e+00> : vector<4x192xf32>
    %9 = tpu.matmul %7, %8, %cst_7 {dimension_numbers = #tpu.dot_dimension_numbers<[1], [0], [0], [1], [0, 0, 1, 1], [], []>} : vector<4x32xbf16>, vector<32x192xbf16>, vector<4x192xf32> -> vector<4x192xf32>
    %c0_8 = arith.constant 0 : index
    %c0_9 = arith.constant 0 : index
    %10 = vector.load %arg5[%c0_8, %c0_9] : memref<1x192xf32, #tpu.memory_space<vmem>>, vector<1x192xf32>
    %11 = vector.broadcast %10 : vector<1x192xf32> to vector<4x192xf32>
    %12 = arith.addf %9, %11 : vector<4x192xf32>
    %13 = arith.truncf %12 : vector<4x192xf32> to vector<4x192xbf16>
    %c0_10 = arith.constant 0 : index
    %c0_11 = arith.constant 0 : index
    %14 = vector.load %arg6[%c0_10, %c0_11] : memref<4x192xbf16, #tpu.memory_space<vmem>>, vector<4x192xbf16>
    tpu.vector_store %arg6[%c0_10, %c0_11], %13 {strides = array<i32>} : memref<4x192xbf16, #tpu.memory_space<vmem>>, vector<4x192xbf16>,
    return
  }
  func.func @transform_0(%arg0: i32) -> (i32, i32) {
    %c0_i32 = arith.constant 0 : i32
    %c0_i32_0 = arith.constant 0 : i32
    %c0_i32_1 = arith.constant 0 : i32
    return %c0_i32, %c0_i32_0 : i32, i32
  }
  func.func @transform_1(%arg0: i32) -> (i32, i32) {
    %c0_i32 = arith.constant 0 : i32
    %c0_i32_0 = arith.constant 0 : i32
    %c0_i32_1 = arith.constant 0 : i32
    return %c0_i32, %c0_i32_0 : i32, i32
  }
  func.func @transform_2(%arg0: i32) -> (i32, i32) {
    %c0_i32 = arith.constant 0 : i32
    %c0_i32_0 = arith.constant 0 : i32
    %c0_i32_1 = arith.constant 0 : i32
    return %c0_i32, %c0_i32_0 : i32, i32
  }
  func.func @transform_3(%arg0: i32) -> (i32, i32) {
    %c0_i32 = arith.constant 0 : i32
    %c0_i32_0 = arith.constant 0 : i32
    %c0_i32_1 = arith.constant 0 : i32
    return %c0_i32, %c0_i32_0 : i32, i32
  }
  func.func @transform_4(%arg0: i32) -> (i32, i32) {
    %c0_i32 = arith.constant 0 : i32
    %c0_i32_0 = arith.constant 0 : i32
    %c0_i32_1 = arith.constant 0 : i32
    return %c0_i32, %c0_i32_0 : i32, i32
  }
  func.func @transform_5(%arg0: i32) -> (i32, i32) {
    %c0_i32 = arith.constant 0 : i32
    %c0_i32_0 = arith.constant 0 : i32
    %c0_i32_1 = arith.constant 0 : i32
    return %c0_i32, %c0_i32_0 : i32, i32
  }
}

module attributes {stable_mosaic.version = 11 : i64} {
  func.func @kernel(%arg0: i32, %arg1: i32, %arg2: memref<1x8x32xf32, #tpu.memory_space<vmem>>, %arg3: memref<1x8x32xf32, #tpu.memory_space<vmem>>, %arg4: memref<32x32xbf16, #tpu.memory_space<vmem>>, %arg5: memref<1x32xf32, #tpu.memory_space<vmem>>, %arg6: memref<32x64xbf16, #tpu.memory_space<vmem>>, %arg7: memref<1x64xf32, #tpu.memory_space<vmem>>, %arg8: memref<32x32xbf16, #tpu.memory_space<vmem>>, %arg9: memref<1x32xf32, #tpu.memory_space<vmem>>, %arg10: memref<1x32xf32, #tpu.memory_space<vmem>>, %arg11: memref<1x32xf32, #tpu.memory_space<vmem>>, %arg12: memref<1x8x32xf32, #tpu.memory_space<vmem>>) attributes {dimension_semantics = [#tpu.dimension_semantics<parallel>, #tpu.dimension_semantics<parallel>], iteration_bounds = array<i64: 2, 1>, scalar_prefetch = 0 : i64, scratch_operands = 0 : i64, tpu.core_type = #tpu.core_type<tc>, window_params = [{transform_indices = @transform_0, window_bounds = array<i64: 1, 8, 32>}, {transform_indices = @transform_1, window_bounds = array<i64: 1, 8, 32>}, {pipeline_mode = #tpu.pipeline_mode<synchronous>, transform_indices = @transform_2, window_bounds = array<i64: 32, 32>}, {pipeline_mode = #tpu.pipeline_mode<synchronous>, transform_indices = @transform_3, window_bounds = array<i64: 1, 32>}, {pipeline_mode = #tpu.pipeline_mode<synchronous>, transform_indices = @transform_4, window_bounds = array<i64: 32, 64>}, {pipeline_mode = #tpu.pipeline_mode<synchronous>, transform_indices = @transform_5, window_bounds = array<i64: 1, 64>}, {pipeline_mode = #tpu.pipeline_mode<synchronous>, transform_indices = @transform_6, window_bounds = array<i64: 32, 32>}, {pipeline_mode = #tpu.pipeline_mode<synchronous>, transform_indices = @transform_7, window_bounds = array<i64: 1, 32>}, {pipeline_mode = #tpu.pipeline_mode<synchronous>, transform_indices = @transform_8, window_bounds = array<i64: 1, 32>}, {pipeline_mode = #tpu.pipeline_mode<synchronous>, transform_indices = @transform_9, window_bounds = array<i64: 1, 32>}, {transform_indices = @transform_10, window_bounds = array<i64: 1, 8, 32>}]} {
    %c0 = arith.constant 0 : index
    %c0_0 = arith.constant 0 : index
    %c0_1 = arith.constant 0 : index
    %0 = vector.load %arg2[%c0, %c0_0, %c0_1] : memref<1x8x32xf32, #tpu.memory_space<vmem>>, vector<1x8x32xf32>
    %1 = vector.shape_cast %0 : vector<1x8x32xf32> to vector<8x32xf32>
    %2 = arith.truncf %1 : vector<8x32xf32> to vector<8x32xbf16>
    %c0_2 = arith.constant 0 : index
    %c0_3 = arith.constant 0 : index
    %3 = vector.load %arg4[%c0_2, %c0_3] : memref<32x32xbf16, #tpu.memory_space<vmem>>, vector<32x32xbf16>
    %cst = arith.constant dense<0.000000e+00> : vector<8x32xf32>
    %4 = tpu.matmul %2, %3, %cst {dimension_numbers = #tpu.dot_dimension_numbers<[1], [0], [0], [1], [0, 0, 1, 1], [], []>} : vector<8x32xbf16>, vector<32x32xbf16>, vector<8x32xf32> -> vector<8x32xf32>
    %c0_4 = arith.constant 0 : index
    %c0_5 = arith.constant 0 : index
    %5 = vector.load %arg5[%c0_4, %c0_5] : memref<1x32xf32, #tpu.memory_space<vmem>>, vector<1x32xf32>
    %6 = vector.broadcast %5 : vector<1x32xf32> to vector<8x32xf32>
    %7 = arith.addf %4, %6 : vector<8x32xf32>
    %8 = arith.truncf %7 : vector<8x32xf32> to vector<8x32xbf16>
    %c0_6 = arith.constant 0 : index
    %c0_7 = arith.constant 0 : index
    %c0_8 = arith.constant 0 : index
    %9 = vector.load %arg3[%c0_6, %c0_7, %c0_8] : memref<1x8x32xf32, #tpu.memory_space<vmem>>, vector<1x8x32xf32>
    %10 = vector.shape_cast %9 : vector<1x8x32xf32> to vector<8x32xf32>
    %11 = arith.truncf %10 : vector<8x32xf32> to vector<8x32xbf16>
    %c0_9 = arith.constant 0 : index
    %c0_10 = arith.constant 0 : index
    %12 = vector.load %arg6[%c0_9, %c0_10] : memref<32x64xbf16, #tpu.memory_space<vmem>>, vector<32x64xbf16>
    %cst_11 = arith.constant dense<0.000000e+00> : vector<8x64xf32>
    %13 = tpu.matmul %11, %12, %cst_11 {dimension_numbers = #tpu.dot_dimension_numbers<[1], [0], [0], [1], [0, 0, 1, 1], [], []>} : vector<8x32xbf16>, vector<32x64xbf16>, vector<8x64xf32> -> vector<8x64xf32>
    %c0_12 = arith.constant 0 : index
    %c0_13 = arith.constant 0 : index
    %14 = vector.load %arg7[%c0_12, %c0_13] : memref<1x64xf32, #tpu.memory_space<vmem>>, vector<1x64xf32>
    %15 = vector.broadcast %14 : vector<1x64xf32> to vector<8x64xf32>
    %16 = arith.addf %13, %15 : vector<8x64xf32>
    %17 = arith.truncf %16 : vector<8x64xf32> to vector<8x64xbf16>
    %18 = vector.extract_strided_slice %17 {offsets = [0, 0], sizes = [8, 32], strides = [1, 1]} : vector<8x64xbf16> to vector<8x32xbf16>
    %19 = vector.extract_strided_slice %17 {offsets = [0, 32], sizes = [8, 32], strides = [1, 1]} : vector<8x64xbf16> to vector<8x32xbf16>
    %c0_14 = arith.constant 0 : index
    %c0_15 = arith.constant 0 : index
    %20 = vector.load %arg8[%c0_14, %c0_15] : memref<32x32xbf16, #tpu.memory_space<vmem>>, vector<32x32xbf16>
    %21 = vector.extract_strided_slice %8 {offsets = [0, 0], sizes = [8, 4], strides = [1, 1]} : vector<8x32xbf16> to vector<8x4xbf16>
    %22 = vector.extract_strided_slice %18 {offsets = [0, 0], sizes = [8, 4], strides = [1, 1]} : vector<8x32xbf16> to vector<8x4xbf16>
    %cst_16 = arith.constant dense<0.000000e+00> : vector<8x8xf32>
    %23 = tpu.matmul %21, %22, %cst_16 {dimension_numbers = #tpu.dot_dimension_numbers<[1], [1], [0], [0], [0, 0, 1, 0], [], []>} : vector<8x4xbf16>, vector<8x4xbf16>, vector<8x8xf32> -> vector<8x8xf32>
    %cst_17 = arith.constant dense<0xFF800000> : vector<8xf32>
    %24 = vector.multi_reduction <maximumf>, %23, %cst_17 [1] : vector<8x8xf32> to vector<8xf32>
    %25 = vector.shape_cast %24 : vector<8xf32> to vector<8x1xf32>
    %26 = vector.broadcast %25 : vector<8x1xf32> to vector<8x8xf32>
    %27 = arith.subf %23, %26 : vector<8x8xf32>
    %28 = math.exp %27 : vector<8x8xf32>
    %cst_18 = arith.constant dense<0.000000e+00> : vector<8xf32>
    %29 = vector.multi_reduction <add>, %28, %cst_18 [1] : vector<8x8xf32> to vector<8xf32>
    %30 = vector.shape_cast %29 : vector<8xf32> to vector<8x1xf32>
    %31 = tpu.reciprocal %30 {approx = true} : vector<8x1xf32> -> vector<8x1xf32>
    %32 = vector.broadcast %31 : vector<8x1xf32> to vector<8x8xf32>
    %33 = arith.mulf %28, %32 : vector<8x8xf32>
    %34 = arith.truncf %33 : vector<8x8xf32> to vector<8x8xbf16>
    %35 = vector.extract_strided_slice %19 {offsets = [0, 0], sizes = [8, 4], strides = [1, 1]} : vector<8x32xbf16> to vector<8x4xbf16>
    %cst_19 = arith.constant dense<0.000000e+00> : vector<8x4xf32>
    %36 = tpu.matmul %34, %35, %cst_19 {dimension_numbers = #tpu.dot_dimension_numbers<[1], [0], [0], [1], [0, 0, 1, 1], [], []>} : vector<8x8xbf16>, vector<8x4xbf16>, vector<8x4xf32> -> vector<8x4xf32>
    %37 = arith.truncf %36 : vector<8x4xf32> to vector<8x4xbf16>
    %38 = vector.extract_strided_slice %20 {offsets = [0, 0], sizes = [4, 32], strides = [1, 1]} : vector<32x32xbf16> to vector<4x32xbf16>
    %cst_20 = arith.constant dense<0.000000e+00> : vector<8x32xf32>
    %39 = tpu.matmul %37, %38, %cst_20 {dimension_numbers = #tpu.dot_dimension_numbers<[1], [0], [0], [1], [0, 0, 1, 1], [], []>} : vector<8x4xbf16>, vector<4x32xbf16>, vector<8x32xf32> -> vector<8x32xf32>
    %40 = vector.extract_strided_slice %8 {offsets = [0, 4], sizes = [8, 4], strides = [1, 1]} : vector<8x32xbf16> to vector<8x4xbf16>
    %41 = vector.extract_strided_slice %18 {offsets = [0, 4], sizes = [8, 4], strides = [1, 1]} : vector<8x32xbf16> to vector<8x4xbf16>
    %cst_21 = arith.constant dense<0.000000e+00> : vector<8x8xf32>
    %42 = tpu.matmul %40, %41, %cst_21 {dimension_numbers = #tpu.dot_dimension_numbers<[1], [1], [0], [0], [0, 0, 1, 0], [], []>} : vector<8x4xbf16>, vector<8x4xbf16>, vector<8x8xf32> -> vector<8x8xf32>
    %cst_22 = arith.constant dense<0xFF800000> : vector<8xf32>
    %43 = vector.multi_reduction <maximumf>, %42, %cst_22 [1] : vector<8x8xf32> to vector<8xf32>
    %44 = vector.shape_cast %43 : vector<8xf32> to vector<8x1xf32>
    %45 = vector.broadcast %44 : vector<8x1xf32> to vector<8x8xf32>
    %46 = arith.subf %42, %45 : vector<8x8xf32>
    %47 = math.exp %46 : vector<8x8xf32>
    %cst_23 = arith.constant dense<0.000000e+00> : vector<8xf32>
    %48 = vector.multi_reduction <add>, %47, %cst_23 [1] : vector<8x8xf32> to vector<8xf32>
    %49 = vector.shape_cast %48 : vector<8xf32> to vector<8x1xf32>
    %50 = tpu.reciprocal %49 {approx = true} : vector<8x1xf32> -> vector<8x1xf32>
    %51 = vector.broadcast %50 : vector<8x1xf32> to vector<8x8xf32>
    %52 = arith.mulf %47, %51 : vector<8x8xf32>
    %53 = arith.truncf %52 : vector<8x8xf32> to vector<8x8xbf16>
    %54 = vector.extract_strided_slice %19 {offsets = [0, 4], sizes = [8, 4], strides = [1, 1]} : vector<8x32xbf16> to vector<8x4xbf16>
    %cst_24 = arith.constant dense<0.000000e+00> : vector<8x4xf32>
    %55 = tpu.matmul %53, %54, %cst_24 {dimension_numbers = #tpu.dot_dimension_numbers<[1], [0], [0], [1], [0, 0, 1, 1], [], []>} : vector<8x8xbf16>, vector<8x4xbf16>, vector<8x4xf32> -> vector<8x4xf32>
    %56 = arith.truncf %55 : vector<8x4xf32> to vector<8x4xbf16>
    %57 = vector.extract_strided_slice %20 {offsets = [4, 0], sizes = [4, 32], strides = [1, 1]} : vector<32x32xbf16> to vector<4x32xbf16>
    %cst_25 = arith.constant dense<0.000000e+00> : vector<8x32xf32>
    %58 = tpu.matmul %56, %57, %cst_25 {dimension_numbers = #tpu.dot_dimension_numbers<[1], [0], [0], [1], [0, 0, 1, 1], [], []>} : vector<8x4xbf16>, vector<4x32xbf16>, vector<8x32xf32> -> vector<8x32xf32>
    %59 = arith.addf %39, %58 : vector<8x32xf32>
    %60 = vector.extract_strided_slice %8 {offsets = [0, 8], sizes = [8, 4], strides = [1, 1]} : vector<8x32xbf16> to vector<8x4xbf16>
    %61 = vector.extract_strided_slice %18 {offsets = [0, 8], sizes = [8, 4], strides = [1, 1]} : vector<8x32xbf16> to vector<8x4xbf16>
    %cst_26 = arith.constant dense<0.000000e+00> : vector<8x8xf32>
    %62 = tpu.matmul %60, %61, %cst_26 {dimension_numbers = #tpu.dot_dimension_numbers<[1], [1], [0], [0], [0, 0, 1, 0], [], []>} : vector<8x4xbf16>, vector<8x4xbf16>, vector<8x8xf32> -> vector<8x8xf32>
    %cst_27 = arith.constant dense<0xFF800000> : vector<8xf32>
    %63 = vector.multi_reduction <maximumf>, %62, %cst_27 [1] : vector<8x8xf32> to vector<8xf32>
    %64 = vector.shape_cast %63 : vector<8xf32> to vector<8x1xf32>
    %65 = vector.broadcast %64 : vector<8x1xf32> to vector<8x8xf32>
    %66 = arith.subf %62, %65 : vector<8x8xf32>
    %67 = math.exp %66 : vector<8x8xf32>
    %cst_28 = arith.constant dense<0.000000e+00> : vector<8xf32>
    %68 = vector.multi_reduction <add>, %67, %cst_28 [1] : vector<8x8xf32> to vector<8xf32>
    %69 = vector.shape_cast %68 : vector<8xf32> to vector<8x1xf32>
    %70 = tpu.reciprocal %69 {approx = true} : vector<8x1xf32> -> vector<8x1xf32>
    %71 = vector.broadcast %70 : vector<8x1xf32> to vector<8x8xf32>
    %72 = arith.mulf %67, %71 : vector<8x8xf32>
    %73 = arith.truncf %72 : vector<8x8xf32> to vector<8x8xbf16>
    %74 = vector.extract_strided_slice %19 {offsets = [0, 8], sizes = [8, 4], strides = [1, 1]} : vector<8x32xbf16> to vector<8x4xbf16>
    %cst_29 = arith.constant dense<0.000000e+00> : vector<8x4xf32>
    %75 = tpu.matmul %73, %74, %cst_29 {dimension_numbers = #tpu.dot_dimension_numbers<[1], [0], [0], [1], [0, 0, 1, 1], [], []>} : vector<8x8xbf16>, vector<8x4xbf16>, vector<8x4xf32> -> vector<8x4xf32>
    %76 = arith.truncf %75 : vector<8x4xf32> to vector<8x4xbf16>
    %77 = vector.extract_strided_slice %20 {offsets = [8, 0], sizes = [4, 32], strides = [1, 1]} : vector<32x32xbf16> to vector<4x32xbf16>
    %cst_30 = arith.constant dense<0.000000e+00> : vector<8x32xf32>
    %78 = tpu.matmul %76, %77, %cst_30 {dimension_numbers = #tpu.dot_dimension_numbers<[1], [0], [0], [1], [0, 0, 1, 1], [], []>} : vector<8x4xbf16>, vector<4x32xbf16>, vector<8x32xf32> -> vector<8x32xf32>
    %79 = arith.addf %59, %78 : vector<8x32xf32>
    %80 = vector.extract_strided_slice %8 {offsets = [0, 12], sizes = [8, 4], strides = [1, 1]} : vector<8x32xbf16> to vector<8x4xbf16>
    %81 = vector.extract_strided_slice %18 {offsets = [0, 12], sizes = [8, 4], strides = [1, 1]} : vector<8x32xbf16> to vector<8x4xbf16>
    %cst_31 = arith.constant dense<0.000000e+00> : vector<8x8xf32>
    %82 = tpu.matmul %80, %81, %cst_31 {dimension_numbers = #tpu.dot_dimension_numbers<[1], [1], [0], [0], [0, 0, 1, 0], [], []>} : vector<8x4xbf16>, vector<8x4xbf16>, vector<8x8xf32> -> vector<8x8xf32>
    %cst_32 = arith.constant dense<0xFF800000> : vector<8xf32>
    %83 = vector.multi_reduction <maximumf>, %82, %cst_32 [1] : vector<8x8xf32> to vector<8xf32>
    %84 = vector.shape_cast %83 : vector<8xf32> to vector<8x1xf32>
    %85 = vector.broadcast %84 : vector<8x1xf32> to vector<8x8xf32>
    %86 = arith.subf %82, %85 : vector<8x8xf32>
    %87 = math.exp %86 : vector<8x8xf32>
    %cst_33 = arith.constant dense<0.000000e+00> : vector<8xf32>
    %88 = vector.multi_reduction <add>, %87, %cst_33 [1] : vector<8x8xf32> to vector<8xf32>
    %89 = vector.shape_cast %88 : vector<8xf32> to vector<8x1xf32>
    %90 = tpu.reciprocal %89 {approx = true} : vector<8x1xf32> -> vector<8x1xf32>
    %91 = vector.broadcast %90 : vector<8x1xf32> to vector<8x8xf32>
    %92 = arith.mulf %87, %91 : vector<8x8xf32>
    %93 = arith.truncf %92 : vector<8x8xf32> to vector<8x8xbf16>
    %94 = vector.extract_strided_slice %19 {offsets = [0, 12], sizes = [8, 4], strides = [1, 1]} : vector<8x32xbf16> to vector<8x4xbf16>
    %cst_34 = arith.constant dense<0.000000e+00> : vector<8x4xf32>
    %95 = tpu.matmul %93, %94, %cst_34 {dimension_numbers = #tpu.dot_dimension_numbers<[1], [0], [0], [1], [0, 0, 1, 1], [], []>} : vector<8x8xbf16>, vector<8x4xbf16>, vector<8x4xf32> -> vector<8x4xf32>
    %96 = arith.truncf %95 : vector<8x4xf32> to vector<8x4xbf16>
    %97 = vector.extract_strided_slice %20 {offsets = [12, 0], sizes = [4, 32], strides = [1, 1]} : vector<32x32xbf16> to vector<4x32xbf16>
    %cst_35 = arith.constant dense<0.000000e+00> : vector<8x32xf32>
    %98 = tpu.matmul %96, %97, %cst_35 {dimension_numbers = #tpu.dot_dimension_numbers<[1], [0], [0], [1], [0, 0, 1, 1], [], []>} : vector<8x4xbf16>, vector<4x32xbf16>, vector<8x32xf32> -> vector<8x32xf32>
    %99 = arith.addf %79, %98 : vector<8x32xf32>
    %100 = vector.extract_strided_slice %8 {offsets = [0, 16], sizes = [8, 4], strides = [1, 1]} : vector<8x32xbf16> to vector<8x4xbf16>
    %101 = vector.extract_strided_slice %18 {offsets = [0, 16], sizes = [8, 4], strides = [1, 1]} : vector<8x32xbf16> to vector<8x4xbf16>
    %cst_36 = arith.constant dense<0.000000e+00> : vector<8x8xf32>
    %102 = tpu.matmul %100, %101, %cst_36 {dimension_numbers = #tpu.dot_dimension_numbers<[1], [1], [0], [0], [0, 0, 1, 0], [], []>} : vector<8x4xbf16>, vector<8x4xbf16>, vector<8x8xf32> -> vector<8x8xf32>
    %cst_37 = arith.constant dense<0xFF800000> : vector<8xf32>
    %103 = vector.multi_reduction <maximumf>, %102, %cst_37 [1] : vector<8x8xf32> to vector<8xf32>
    %104 = vector.shape_cast %103 : vector<8xf32> to vector<8x1xf32>
    %105 = vector.broadcast %104 : vector<8x1xf32> to vector<8x8xf32>
    %106 = arith.subf %102, %105 : vector<8x8xf32>
    %107 = math.exp %106 : vector<8x8xf32>
    %cst_38 = arith.constant dense<0.000000e+00> : vector<8xf32>
    %108 = vector.multi_reduction <add>, %107, %cst_38 [1] : vector<8x8xf32> to vector<8xf32>
    %109 = vector.shape_cast %108 : vector<8xf32> to vector<8x1xf32>
    %110 = tpu.reciprocal %109 {approx = true} : vector<8x1xf32> -> vector<8x1xf32>
    %111 = vector.broadcast %110 : vector<8x1xf32> to vector<8x8xf32>
    %112 = arith.mulf %107, %111 : vector<8x8xf32>
    %113 = arith.truncf %112 : vector<8x8xf32> to vector<8x8xbf16>
    %114 = vector.extract_strided_slice %19 {offsets = [0, 16], sizes = [8, 4], strides = [1, 1]} : vector<8x32xbf16> to vector<8x4xbf16>
    %cst_39 = arith.constant dense<0.000000e+00> : vector<8x4xf32>
    %115 = tpu.matmul %113, %114, %cst_39 {dimension_numbers = #tpu.dot_dimension_numbers<[1], [0], [0], [1], [0, 0, 1, 1], [], []>} : vector<8x8xbf16>, vector<8x4xbf16>, vector<8x4xf32> -> vector<8x4xf32>
    %116 = arith.truncf %115 : vector<8x4xf32> to vector<8x4xbf16>
    %117 = vector.extract_strided_slice %20 {offsets = [16, 0], sizes = [4, 32], strides = [1, 1]} : vector<32x32xbf16> to vector<4x32xbf16>
    %cst_40 = arith.constant dense<0.000000e+00> : vector<8x32xf32>
    %118 = tpu.matmul %116, %117, %cst_40 {dimension_numbers = #tpu.dot_dimension_numbers<[1], [0], [0], [1], [0, 0, 1, 1], [], []>} : vector<8x4xbf16>, vector<4x32xbf16>, vector<8x32xf32> -> vector<8x32xf32>
    %119 = arith.addf %99, %118 : vector<8x32xf32>
    %120 = vector.extract_strided_slice %8 {offsets = [0, 20], sizes = [8, 4], strides = [1, 1]} : vector<8x32xbf16> to vector<8x4xbf16>
    %121 = vector.extract_strided_slice %18 {offsets = [0, 20], sizes = [8, 4], strides = [1, 1]} : vector<8x32xbf16> to vector<8x4xbf16>
    %cst_41 = arith.constant dense<0.000000e+00> : vector<8x8xf32>
    %122 = tpu.matmul %120, %121, %cst_41 {dimension_numbers = #tpu.dot_dimension_numbers<[1], [1], [0], [0], [0, 0, 1, 0], [], []>} : vector<8x4xbf16>, vector<8x4xbf16>, vector<8x8xf32> -> vector<8x8xf32>
    %cst_42 = arith.constant dense<0xFF800000> : vector<8xf32>
    %123 = vector.multi_reduction <maximumf>, %122, %cst_42 [1] : vector<8x8xf32> to vector<8xf32>
    %124 = vector.shape_cast %123 : vector<8xf32> to vector<8x1xf32>
    %125 = vector.broadcast %124 : vector<8x1xf32> to vector<8x8xf32>
    %126 = arith.subf %122, %125 : vector<8x8xf32>
    %127 = math.exp %126 : vector<8x8xf32>
    %cst_43 = arith.constant dense<0.000000e+00> : vector<8xf32>
    %128 = vector.multi_reduction <add>, %127, %cst_43 [1] : vector<8x8xf32> to vector<8xf32>
    %129 = vector.shape_cast %128 : vector<8xf32> to vector<8x1xf32>
    %130 = tpu.reciprocal %129 {approx = true} : vector<8x1xf32> -> vector<8x1xf32>
    %131 = vector.broadcast %130 : vector<8x1xf32> to vector<8x8xf32>
    %132 = arith.mulf %127, %131 : vector<8x8xf32>
    %133 = arith.truncf %132 : vector<8x8xf32> to vector<8x8xbf16>
    %134 = vector.extract_strided_slice %19 {offsets = [0, 20], sizes = [8, 4], strides = [1, 1]} : vector<8x32xbf16> to vector<8x4xbf16>
    %cst_44 = arith.constant dense<0.000000e+00> : vector<8x4xf32>
    %135 = tpu.matmul %133, %134, %cst_44 {dimension_numbers = #tpu.dot_dimension_numbers<[1], [0], [0], [1], [0, 0, 1, 1], [], []>} : vector<8x8xbf16>, vector<8x4xbf16>, vector<8x4xf32> -> vector<8x4xf32>
    %136 = arith.truncf %135 : vector<8x4xf32> to vector<8x4xbf16>
    %137 = vector.extract_strided_slice %20 {offsets = [20, 0], sizes = [4, 32], strides = [1, 1]} : vector<32x32xbf16> to vector<4x32xbf16>
    %cst_45 = arith.constant dense<0.000000e+00> : vector<8x32xf32>
    %138 = tpu.matmul %136, %137, %cst_45 {dimension_numbers = #tpu.dot_dimension_numbers<[1], [0], [0], [1], [0, 0, 1, 1], [], []>} : vector<8x4xbf16>, vector<4x32xbf16>, vector<8x32xf32> -> vector<8x32xf32>
    %139 = arith.addf %119, %138 : vector<8x32xf32>
    %140 = vector.extract_strided_slice %8 {offsets = [0, 24], sizes = [8, 4], strides = [1, 1]} : vector<8x32xbf16> to vector<8x4xbf16>
    %141 = vector.extract_strided_slice %18 {offsets = [0, 24], sizes = [8, 4], strides = [1, 1]} : vector<8x32xbf16> to vector<8x4xbf16>
    %cst_46 = arith.constant dense<0.000000e+00> : vector<8x8xf32>
    %142 = tpu.matmul %140, %141, %cst_46 {dimension_numbers = #tpu.dot_dimension_numbers<[1], [1], [0], [0], [0, 0, 1, 0], [], []>} : vector<8x4xbf16>, vector<8x4xbf16>, vector<8x8xf32> -> vector<8x8xf32>
    %cst_47 = arith.constant dense<0xFF800000> : vector<8xf32>
    %143 = vector.multi_reduction <maximumf>, %142, %cst_47 [1] : vector<8x8xf32> to vector<8xf32>
    %144 = vector.shape_cast %143 : vector<8xf32> to vector<8x1xf32>
    %145 = vector.broadcast %144 : vector<8x1xf32> to vector<8x8xf32>
    %146 = arith.subf %142, %145 : vector<8x8xf32>
    %147 = math.exp %146 : vector<8x8xf32>
    %cst_48 = arith.constant dense<0.000000e+00> : vector<8xf32>
    %148 = vector.multi_reduction <add>, %147, %cst_48 [1] : vector<8x8xf32> to vector<8xf32>
    %149 = vector.shape_cast %148 : vector<8xf32> to vector<8x1xf32>
    %150 = tpu.reciprocal %149 {approx = true} : vector<8x1xf32> -> vector<8x1xf32>
    %151 = vector.broadcast %150 : vector<8x1xf32> to vector<8x8xf32>
    %152 = arith.mulf %147, %151 : vector<8x8xf32>
    %153 = arith.truncf %152 : vector<8x8xf32> to vector<8x8xbf16>
    %154 = vector.extract_strided_slice %19 {offsets = [0, 24], sizes = [8, 4], strides = [1, 1]} : vector<8x32xbf16> to vector<8x4xbf16>
    %cst_49 = arith.constant dense<0.000000e+00> : vector<8x4xf32>
    %155 = tpu.matmul %153, %154, %cst_49 {dimension_numbers = #tpu.dot_dimension_numbers<[1], [0], [0], [1], [0, 0, 1, 1], [], []>} : vector<8x8xbf16>, vector<8x4xbf16>, vector<8x4xf32> -> vector<8x4xf32>
    %156 = arith.truncf %155 : vector<8x4xf32> to vector<8x4xbf16>
    %157 = vector.extract_strided_slice %20 {offsets = [24, 0], sizes = [4, 32], strides = [1, 1]} : vector<32x32xbf16> to vector<4x32xbf16>
    %cst_50 = arith.constant dense<0.000000e+00> : vector<8x32xf32>
    %158 = tpu.matmul %156, %157, %cst_50 {dimension_numbers = #tpu.dot_dimension_numbers<[1], [0], [0], [1], [0, 0, 1, 1], [], []>} : vector<8x4xbf16>, vector<4x32xbf16>, vector<8x32xf32> -> vector<8x32xf32>
    %159 = arith.addf %139, %158 : vector<8x32xf32>
    %160 = vector.extract_strided_slice %8 {offsets = [0, 28], sizes = [8, 4], strides = [1, 1]} : vector<8x32xbf16> to vector<8x4xbf16>
    %161 = vector.extract_strided_slice %18 {offsets = [0, 28], sizes = [8, 4], strides = [1, 1]} : vector<8x32xbf16> to vector<8x4xbf16>
    %cst_51 = arith.constant dense<0.000000e+00> : vector<8x8xf32>
    %162 = tpu.matmul %160, %161, %cst_51 {dimension_numbers = #tpu.dot_dimension_numbers<[1], [1], [0], [0], [0, 0, 1, 0], [], []>} : vector<8x4xbf16>, vector<8x4xbf16>, vector<8x8xf32> -> vector<8x8xf32>
    %cst_52 = arith.constant dense<0xFF800000> : vector<8xf32>
    %163 = vector.multi_reduction <maximumf>, %162, %cst_52 [1] : vector<8x8xf32> to vector<8xf32>
    %164 = vector.shape_cast %163 : vector<8xf32> to vector<8x1xf32>
    %165 = vector.broadcast %164 : vector<8x1xf32> to vector<8x8xf32>
    %166 = arith.subf %162, %165 : vector<8x8xf32>
    %167 = math.exp %166 : vector<8x8xf32>
    %cst_53 = arith.constant dense<0.000000e+00> : vector<8xf32>
    %168 = vector.multi_reduction <add>, %167, %cst_53 [1] : vector<8x8xf32> to vector<8xf32>
    %169 = vector.shape_cast %168 : vector<8xf32> to vector<8x1xf32>
    %170 = tpu.reciprocal %169 {approx = true} : vector<8x1xf32> -> vector<8x1xf32>
    %171 = vector.broadcast %170 : vector<8x1xf32> to vector<8x8xf32>
    %172 = arith.mulf %167, %171 : vector<8x8xf32>
    %173 = arith.truncf %172 : vector<8x8xf32> to vector<8x8xbf16>
    %174 = vector.extract_strided_slice %19 {offsets = [0, 28], sizes = [8, 4], strides = [1, 1]} : vector<8x32xbf16> to vector<8x4xbf16>
    %cst_54 = arith.constant dense<0.000000e+00> : vector<8x4xf32>
    %175 = tpu.matmul %173, %174, %cst_54 {dimension_numbers = #tpu.dot_dimension_numbers<[1], [0], [0], [1], [0, 0, 1, 1], [], []>} : vector<8x8xbf16>, vector<8x4xbf16>, vector<8x4xf32> -> vector<8x4xf32>
    %176 = arith.truncf %175 : vector<8x4xf32> to vector<8x4xbf16>
    %177 = vector.extract_strided_slice %20 {offsets = [28, 0], sizes = [4, 32], strides = [1, 1]} : vector<32x32xbf16> to vector<4x32xbf16>
    %cst_55 = arith.constant dense<0.000000e+00> : vector<8x32xf32>
    %178 = tpu.matmul %176, %177, %cst_55 {dimension_numbers = #tpu.dot_dimension_numbers<[1], [0], [0], [1], [0, 0, 1, 1], [], []>} : vector<8x4xbf16>, vector<4x32xbf16>, vector<8x32xf32> -> vector<8x32xf32>
    %179 = arith.addf %159, %178 : vector<8x32xf32>
    %180 = arith.addf %1, %179 : vector<8x32xf32>
    %c0_56 = arith.constant 0 : index
    %c0_57 = arith.constant 0 : index
    %181 = vector.load %arg9[%c0_56, %c0_57] : memref<1x32xf32, #tpu.memory_space<vmem>>, vector<1x32xf32>
    %182 = vector.broadcast %181 : vector<1x32xf32> to vector<8x32xf32>
    %183 = arith.addf %180, %182 : vector<8x32xf32>
    %c0_58 = arith.constant 0 : index
    %c0_59 = arith.constant 0 : index
    %184 = vector.load %arg10[%c0_58, %c0_59] : memref<1x32xf32, #tpu.memory_space<vmem>>, vector<1x32xf32>
    %c0_60 = arith.constant 0 : index
    %c0_61 = arith.constant 0 : index
    %185 = vector.load %arg11[%c0_60, %c0_61] : memref<1x32xf32, #tpu.memory_space<vmem>>, vector<1x32xf32>
    %cst_62 = arith.constant dense<0.000000e+00> : vector<8xf32>
    %186 = vector.multi_reduction <add>, %183, %cst_62 [1] : vector<8x32xf32> to vector<8xf32>
    %187 = vector.shape_cast %186 : vector<8xf32> to vector<8x1xf32>
    %cst_63 = arith.constant 3.200000e+01 : f32
    %188 = vector.broadcast %cst_63 : f32 to vector<8x1xf32>
    %189 = arith.divf %187, %188 : vector<8x1xf32>
    %190 = vector.broadcast %189 : vector<8x1xf32> to vector<8x32xf32>
    %191 = arith.subf %183, %190 : vector<8x32xf32>
    %192 = arith.mulf %191, %191 : vector<8x32xf32>
    %cst_64 = arith.constant dense<0.000000e+00> : vector<8xf32>
    %193 = vector.multi_reduction <add>, %192, %cst_64 [1] : vector<8x32xf32> to vector<8xf32>
    %194 = vector.shape_cast %193 : vector<8xf32> to vector<8x1xf32>
    %cst_65 = arith.constant 3.200000e+01 : f32
    %195 = vector.broadcast %cst_65 : f32 to vector<8x1xf32>
    %196 = arith.divf %194, %195 : vector<8x1xf32>
    %197 = vector.broadcast %189 : vector<8x1xf32> to vector<8x32xf32>
    %198 = arith.subf %183, %197 : vector<8x32xf32>
    %cst_66 = arith.constant 9.99999974E-6 : f32
    %199 = vector.broadcast %cst_66 : f32 to vector<8x1xf32>
    %200 = arith.addf %196, %199 : vector<8x1xf32>
    %201 = math.rsqrt %200 : vector<8x1xf32>
    %202 = vector.broadcast %201 : vector<8x1xf32> to vector<8x32xf32>
    %203 = arith.mulf %198, %202 : vector<8x32xf32>
    %204 = vector.broadcast %184 : vector<1x32xf32> to vector<8x32xf32>
    %205 = arith.mulf %203, %204 : vector<8x32xf32>
    %206 = vector.broadcast %185 : vector<1x32xf32> to vector<8x32xf32>
    %207 = arith.addf %205, %206 : vector<8x32xf32>
    %c0_67 = arith.constant 0 : index
    %c0_68 = arith.constant 0 : index
    %c0_69 = arith.constant 0 : index
    %208 = vector.load %arg12[%c0_67, %c0_68, %c0_69] : memref<1x8x32xf32, #tpu.memory_space<vmem>>, vector<1x8x32xf32>
    %209 = vector.shape_cast %208 : vector<1x8x32xf32> to vector<8x32xf32>
    %210 = vector.shape_cast %207 : vector<8x32xf32> to vector<1x8x32xf32>
    tpu.vector_store %arg12[%c0_67, %c0_68, %c0_69], %210 {strides = array<i32>} : memref<1x8x32xf32, #tpu.memory_space<vmem>>, vector<1x8x32xf32>,
    return
  }
  func.func @transform_0(%arg0: i32, %arg1: i32) -> (i32, i32, i32) {
    %c0_i32 = arith.constant 0 : i32
    %c0_i32_0 = arith.constant 0 : i32
    return %arg0, %arg1, %c0_i32 : i32, i32, i32
  }
  func.func @transform_1(%arg0: i32, %arg1: i32) -> (i32, i32, i32) {
    %c0_i32 = arith.constant 0 : i32
    %c0_i32_0 = arith.constant 0 : i32
    %c0_i32_1 = arith.constant 0 : i32
    return %arg0, %c0_i32, %c0_i32_0 : i32, i32, i32
  }
  func.func @transform_2(%arg0: i32, %arg1: i32) -> (i32, i32) {
    %c0_i32 = arith.constant 0 : i32
    %c0_i32_0 = arith.constant 0 : i32
    %c0_i32_1 = arith.constant 0 : i32
    return %c0_i32, %c0_i32_0 : i32, i32
  }
  func.func @transform_3(%arg0: i32, %arg1: i32) -> (i32, i32) {
    %c0_i32 = arith.constant 0 : i32
    %c0_i32_0 = arith.constant 0 : i32
    %c0_i32_1 = arith.constant 0 : i32
    return %c0_i32, %c0_i32_0 : i32, i32
  }
  func.func @transform_4(%arg0: i32, %arg1: i32) -> (i32, i32) {
    %c0_i32 = arith.constant 0 : i32
    %c0_i32_0 = arith.constant 0 : i32
    %c0_i32_1 = arith.constant 0 : i32
    return %c0_i32, %c0_i32_0 : i32, i32
  }
  func.func @transform_5(%arg0: i32, %arg1: i32) -> (i32, i32) {
    %c0_i32 = arith.constant 0 : i32
    %c0_i32_0 = arith.constant 0 : i32
    %c0_i32_1 = arith.constant 0 : i32
    return %c0_i32, %c0_i32_0 : i32, i32
  }
  func.func @transform_6(%arg0: i32, %arg1: i32) -> (i32, i32) {
    %c0_i32 = arith.constant 0 : i32
    %c0_i32_0 = arith.constant 0 : i32
    %c0_i32_1 = arith.constant 0 : i32
    return %c0_i32, %c0_i32_0 : i32, i32
  }
  func.func @transform_7(%arg0: i32, %arg1: i32) -> (i32, i32) {
    %c0_i32 = arith.constant 0 : i32
    %c0_i32_0 = arith.constant 0 : i32
    %c0_i32_1 = arith.constant 0 : i32
    return %c0_i32, %c0_i32_0 : i32, i32
  }
  func.func @transform_8(%arg0: i32, %arg1: i32) -> (i32, i32) {
    %c0_i32 = arith.constant 0 : i32
    %c0_i32_0 = arith.constant 0 : i32
    %c0_i32_1 = arith.constant 0 : i32
    return %c0_i32, %c0_i32_0 : i32, i32
  }
  func.func @transform_9(%arg0: i32, %arg1: i32) -> (i32, i32) {
    %c0_i32 = arith.constant 0 : i32
    %c0_i32_0 = arith.constant 0 : i32
    %c0_i32_1 = arith.constant 0 : i32
    return %c0_i32, %c0_i32_0 : i32, i32
  }
  func.func @transform_10(%arg0: i32, %arg1: i32) -> (i32, i32, i32) {
    %c0_i32 = arith.constant 0 : i32
    %c0_i32_0 = arith.constant 0 : i32
    return %arg0, %arg1, %c0_i32 : i32, i32, i32
  }
}

module attributes {stable_mosaic.version = 11 : i64} {
  func.func @_ffn_sublayer_kernel(%arg0: i32, %arg1: memref<16x32xf32, #tpu.memory_space<vmem>>, %arg2: memref<32x64xbf16, #tpu.memory_space<vmem>>, %arg3: memref<1x64xf32, #tpu.memory_space<vmem>>, %arg4: memref<64x32xbf16, #tpu.memory_space<vmem>>, %arg5: memref<1x32xf32, #tpu.memory_space<vmem>>, %arg6: memref<1x32xf32, #tpu.memory_space<vmem>>, %arg7: memref<1x32xf32, #tpu.memory_space<vmem>>, %arg8: memref<16x32xf32, #tpu.memory_space<vmem>>) attributes {dimension_semantics = [#tpu.dimension_semantics<parallel>], iteration_bounds = array<i64: 1>, scalar_prefetch = 0 : i64, scratch_operands = 0 : i64, tpu.core_type = #tpu.core_type<tc>, window_params = [{transform_indices = @transform_0, window_bounds = array<i64: 16, 32>}, {pipeline_mode = #tpu.pipeline_mode<synchronous>, transform_indices = @transform_1, window_bounds = array<i64: 32, 64>}, {pipeline_mode = #tpu.pipeline_mode<synchronous>, transform_indices = @transform_2, window_bounds = array<i64: 1, 64>}, {pipeline_mode = #tpu.pipeline_mode<synchronous>, transform_indices = @transform_3, window_bounds = array<i64: 64, 32>}, {pipeline_mode = #tpu.pipeline_mode<synchronous>, transform_indices = @transform_4, window_bounds = array<i64: 1, 32>}, {pipeline_mode = #tpu.pipeline_mode<synchronous>, transform_indices = @transform_5, window_bounds = array<i64: 1, 32>}, {pipeline_mode = #tpu.pipeline_mode<synchronous>, transform_indices = @transform_6, window_bounds = array<i64: 1, 32>}, {transform_indices = @transform_7, window_bounds = array<i64: 16, 32>}]} {
    %c0 = arith.constant 0 : index
    %c0_0 = arith.constant 0 : index
    %0 = vector.load %arg1[%c0, %c0_0] : memref<16x32xf32, #tpu.memory_space<vmem>>, vector<16x32xf32>
    %c0_1 = arith.constant 0 : index
    %c0_2 = arith.constant 0 : index
    %1 = vector.load %arg1[%c0_1, %c0_2] : memref<16x32xf32, #tpu.memory_space<vmem>>, vector<16x32xf32>
    %2 = arith.truncf %1 : vector<16x32xf32> to vector<16x32xbf16>
    %c0_3 = arith.constant 0 : index
    %c0_4 = arith.constant 0 : index
    %3 = vector.load %arg2[%c0_3, %c0_4] : memref<32x64xbf16, #tpu.memory_space<vmem>>, vector<32x64xbf16>
    %cst = arith.constant dense<0.000000e+00> : vector<16x64xf32>
    %4 = tpu.matmul %2, %3, %cst {dimension_numbers = #tpu.dot_dimension_numbers<[1], [0], [0], [1], [0, 0, 1, 1], [], []>} : vector<16x32xbf16>, vector<32x64xbf16>, vector<16x64xf32> -> vector<16x64xf32>
    %c0_5 = arith.constant 0 : index
    %c0_6 = arith.constant 0 : index
    %5 = vector.load %arg3[%c0_5, %c0_6] : memref<1x64xf32, #tpu.memory_space<vmem>>, vector<1x64xf32>
    %6 = vector.broadcast %5 : vector<1x64xf32> to vector<16x64xf32>
    %7 = arith.addf %4, %6 : vector<16x64xf32>
    %cst_7 = arith.constant 0.000000e+00 : f32
    %8 = vector.broadcast %cst_7 : f32 to vector<16x64xf32>
    %9 = arith.maximumf %7, %8 : vector<16x64xf32>
    %10 = arith.truncf %9 : vector<16x64xf32> to vector<16x64xbf16>
    %c0_8 = arith.constant 0 : index
    %c0_9 = arith.constant 0 : index
    %11 = vector.load %arg4[%c0_8, %c0_9] : memref<64x32xbf16, #tpu.memory_space<vmem>>, vector<64x32xbf16>
    %cst_10 = arith.constant dense<0.000000e+00> : vector<16x32xf32>
    %12 = tpu.matmul %10, %11, %cst_10 {dimension_numbers = #tpu.dot_dimension_numbers<[1], [0], [0], [1], [0, 0, 1, 1], [], []>} : vector<16x64xbf16>, vector<64x32xbf16>, vector<16x32xf32> -> vector<16x32xf32>
    %c0_11 = arith.constant 0 : index
    %c0_12 = arith.constant 0 : index
    %13 = vector.load %arg5[%c0_11, %c0_12] : memref<1x32xf32, #tpu.memory_space<vmem>>, vector<1x32xf32>
    %14 = vector.broadcast %13 : vector<1x32xf32> to vector<16x32xf32>
    %15 = arith.addf %12, %14 : vector<16x32xf32>
    %16 = arith.addf %0, %15 : vector<16x32xf32>
    %c0_13 = arith.constant 0 : index
    %c0_14 = arith.constant 0 : index
    %17 = vector.load %arg6[%c0_13, %c0_14] : memref<1x32xf32, #tpu.memory_space<vmem>>, vector<1x32xf32>
    %c0_15 = arith.constant 0 : index
    %c0_16 = arith.constant 0 : index
    %18 = vector.load %arg7[%c0_15, %c0_16] : memref<1x32xf32, #tpu.memory_space<vmem>>, vector<1x32xf32>
    %cst_17 = arith.constant dense<0.000000e+00> : vector<16xf32>
    %19 = vector.multi_reduction <add>, %16, %cst_17 [1] : vector<16x32xf32> to vector<16xf32>
    %20 = vector.shape_cast %19 : vector<16xf32> to vector<16x1xf32>
    %cst_18 = arith.constant 3.200000e+01 : f32
    %21 = vector.broadcast %cst_18 : f32 to vector<16x1xf32>
    %22 = arith.divf %20, %21 : vector<16x1xf32>
    %23 = vector.broadcast %22 : vector<16x1xf32> to vector<16x32xf32>
    %24 = arith.subf %16, %23 : vector<16x32xf32>
    %25 = arith.mulf %24, %24 : vector<16x32xf32>
    %cst_19 = arith.constant dense<0.000000e+00> : vector<16xf32>
    %26 = vector.multi_reduction <add>, %25, %cst_19 [1] : vector<16x32xf32> to vector<16xf32>
    %27 = vector.shape_cast %26 : vector<16xf32> to vector<16x1xf32>
    %cst_20 = arith.constant 3.200000e+01 : f32
    %28 = vector.broadcast %cst_20 : f32 to vector<16x1xf32>
    %29 = arith.divf %27, %28 : vector<16x1xf32>
    %30 = vector.broadcast %22 : vector<16x1xf32> to vector<16x32xf32>
    %31 = arith.subf %16, %30 : vector<16x32xf32>
    %cst_21 = arith.constant 9.99999974E-6 : f32
    %32 = vector.broadcast %cst_21 : f32 to vector<16x1xf32>
    %33 = arith.addf %29, %32 : vector<16x1xf32>
    %34 = math.rsqrt %33 : vector<16x1xf32>
    %35 = vector.broadcast %34 : vector<16x1xf32> to vector<16x32xf32>
    %36 = arith.mulf %31, %35 : vector<16x32xf32>
    %37 = vector.broadcast %17 : vector<1x32xf32> to vector<16x32xf32>
    %38 = arith.mulf %36, %37 : vector<16x32xf32>
    %39 = vector.broadcast %18 : vector<1x32xf32> to vector<16x32xf32>
    %40 = arith.addf %38, %39 : vector<16x32xf32>
    %c0_22 = arith.constant 0 : index
    %c0_23 = arith.constant 0 : index
    %41 = vector.load %arg8[%c0_22, %c0_23] : memref<16x32xf32, #tpu.memory_space<vmem>>, vector<16x32xf32>
    tpu.vector_store %arg8[%c0_22, %c0_23], %40 {strides = array<i32>} : memref<16x32xf32, #tpu.memory_space<vmem>>, vector<16x32xf32>,
    return
  }
  func.func @transform_0(%arg0: i32) -> (i32, i32) {
    %c0_i32 = arith.constant 0 : i32
    %c0_i32_0 = arith.constant 0 : i32
    return %arg0, %c0_i32 : i32, i32
  }
  func.func @transform_1(%arg0: i32) -> (i32, i32) {
    %c0_i32 = arith.constant 0 : i32
    %c0_i32_0 = arith.constant 0 : i32
    %c0_i32_1 = arith.constant 0 : i32
    return %c0_i32, %c0_i32_0 : i32, i32
  }
  func.func @transform_2(%arg0: i32) -> (i32, i32) {
    %c0_i32 = arith.constant 0 : i32
    %c0_i32_0 = arith.constant 0 : i32
    %c0_i32_1 = arith.constant 0 : i32
    return %c0_i32, %c0_i32_0 : i32, i32
  }
  func.func @transform_3(%arg0: i32) -> (i32, i32) {
    %c0_i32 = arith.constant 0 : i32
    %c0_i32_0 = arith.constant 0 : i32
    %c0_i32_1 = arith.constant 0 : i32
    return %c0_i32, %c0_i32_0 : i32, i32
  }
  func.func @transform_4(%arg0: i32) -> (i32, i32) {
    %c0_i32 = arith.constant 0 : i32
    %c0_i32_0 = arith.constant 0 : i32
    %c0_i32_1 = arith.constant 0 : i32
    return %c0_i32, %c0_i32_0 : i32, i32
  }
  func.func @transform_5(%arg0: i32) -> (i32, i32) {
    %c0_i32 = arith.constant 0 : i32
    %c0_i32_0 = arith.constant 0 : i32
    %c0_i32_1 = arith.constant 0 : i32
    return %c0_i32, %c0_i32_0 : i32, i32
  }
  func.func @transform_6(%arg0: i32) -> (i32, i32) {
    %c0_i32 = arith.constant 0 : i32
    %c0_i32_0 = arith.constant 0 : i32
    %c0_i32_1 = arith.constant 0 : i32
    return %c0_i32, %c0_i32_0 : i32, i32
  }
  func.func @transform_7(%arg0: i32) -> (i32, i32) {
    %c0_i32 = arith.constant 0 : i32
    %c0_i32_0 = arith.constant 0 : i32
    return %arg0, %c0_i32 : i32, i32
  }
}

module attributes {stable_mosaic.version = 11 : i64} {
  func.func @kernel(%arg0: i32, %arg1: i32, %arg2: memref<1x8x32xf32, #tpu.memory_space<vmem>>, %arg3: memref<32x32xbf16, #tpu.memory_space<vmem>>, %arg4: memref<1x32xf32, #tpu.memory_space<vmem>>, %arg5: memref<4x64xbf16, #tpu.memory_space<vmem>>, %arg6: memref<32x32xbf16, #tpu.memory_space<vmem>>, %arg7: memref<1x32xf32, #tpu.memory_space<vmem>>, %arg8: memref<1x32xf32, #tpu.memory_space<vmem>>, %arg9: memref<1x32xf32, #tpu.memory_space<vmem>>, %arg10: memref<1x8x32xf32, #tpu.memory_space<vmem>>) attributes {dimension_semantics = [#tpu.dimension_semantics<parallel>, #tpu.dimension_semantics<parallel>], iteration_bounds = array<i64: 2, 1>, scalar_prefetch = 0 : i64, scratch_operands = 0 : i64, tpu.core_type = #tpu.core_type<tc>, window_params = [{transform_indices = @transform_0, window_bounds = array<i64: 1, 8, 32>}, {pipeline_mode = #tpu.pipeline_mode<synchronous>, transform_indices = @transform_1, window_bounds = array<i64: 32, 32>}, {pipeline_mode = #tpu.pipeline_mode<synchronous>, transform_indices = @transform_2, window_bounds = array<i64: 1, 32>}, {pipeline_mode = #tpu.pipeline_mode<synchronous>, transform_indices = @transform_3, window_bounds = array<i64: 4, 64>}, {pipeline_mode = #tpu.pipeline_mode<synchronous>, transform_indices = @transform_4, window_bounds = array<i64: 32, 32>}, {pipeline_mode = #tpu.pipeline_mode<synchronous>, transform_indices = @transform_5, window_bounds = array<i64: 1, 32>}, {pipeline_mode = #tpu.pipeline_mode<synchronous>, transform_indices = @transform_6, window_bounds = array<i64: 1, 32>}, {pipeline_mode = #tpu.pipeline_mode<synchronous>, transform_indices = @transform_7, window_bounds = array<i64: 1, 32>}, {transform_indices = @transform_8, window_bounds = array<i64: 1, 8, 32>}]} {
    %c0 = arith.constant 0 : index
    %c0_0 = arith.constant 0 : index
    %c0_1 = arith.constant 0 : index
    %0 = vector.load %arg2[%c0, %c0_0, %c0_1] : memref<1x8x32xf32, #tpu.memory_space<vmem>>, vector<1x8x32xf32>
    %1 = vector.shape_cast %0 : vector<1x8x32xf32> to vector<8x32xf32>
    %2 = arith.truncf %1 : vector<8x32xf32> to vector<8x32xbf16>
    %c0_2 = arith.constant 0 : index
    %c0_3 = arith.constant 0 : index
    %3 = vector.load %arg3[%c0_2, %c0_3] : memref<32x32xbf16, #tpu.memory_space<vmem>>, vector<32x32xbf16>
    %cst = arith.constant dense<0.000000e+00> : vector<8x32xf32>
    %4 = tpu.matmul %2, %3, %cst {dimension_numbers = #tpu.dot_dimension_numbers<[1], [0], [0], [1], [0, 0, 1, 1], [], []>} : vector<8x32xbf16>, vector<32x32xbf16>, vector<8x32xf32> -> vector<8x32xf32>
    %c0_4 = arith.constant 0 : index
    %c0_5 = arith.constant 0 : index
    %5 = vector.load %arg4[%c0_4, %c0_5] : memref<1x32xf32, #tpu.memory_space<vmem>>, vector<1x32xf32>
    %6 = vector.broadcast %5 : vector<1x32xf32> to vector<8x32xf32>
    %7 = arith.addf %4, %6 : vector<8x32xf32>
    %8 = arith.truncf %7 : vector<8x32xf32> to vector<8x32xbf16>
    %c0_6 = arith.constant 0 : index
    %c0_7 = arith.constant 0 : index
    %9 = vector.load %arg5[%c0_6, %c0_7] : memref<4x64xbf16, #tpu.memory_space<vmem>>, vector<4x64xbf16>
    %10 = vector.extract_strided_slice %9 {offsets = [0, 0], sizes = [4, 32], strides = [1, 1]} : vector<4x64xbf16> to vector<4x32xbf16>
    %11 = vector.extract_strided_slice %9 {offsets = [0, 32], sizes = [4, 32], strides = [1, 1]} : vector<4x64xbf16> to vector<4x32xbf16>
    %c0_8 = arith.constant 0 : index
    %c0_9 = arith.constant 0 : index
    %12 = vector.load %arg6[%c0_8, %c0_9] : memref<32x32xbf16, #tpu.memory_space<vmem>>, vector<32x32xbf16>
    %13 = vector.extract_strided_slice %8 {offsets = [0, 0], sizes = [8, 4], strides = [1, 1]} : vector<8x32xbf16> to vector<8x4xbf16>
    %14 = vector.extract_strided_slice %10 {offsets = [0, 0], sizes = [4, 4], strides = [1, 1]} : vector<4x32xbf16> to vector<4x4xbf16>
    %cst_10 = arith.constant dense<0.000000e+00> : vector<8x4xf32>
    %15 = tpu.matmul %13, %14, %cst_10 {dimension_numbers = #tpu.dot_dimension_numbers<[1], [1], [0], [0], [0, 0, 1, 0], [], []>} : vector<8x4xbf16>, vector<4x4xbf16>, vector<8x4xf32> -> vector<8x4xf32>
    %cst_11 = arith.constant dense<0xFF800000> : vector<8xf32>
    %16 = vector.multi_reduction <maximumf>, %15, %cst_11 [1] : vector<8x4xf32> to vector<8xf32>
    %17 = vector.shape_cast %16 : vector<8xf32> to vector<8x1xf32>
    %18 = vector.broadcast %17 : vector<8x1xf32> to vector<8x4xf32>
    %19 = arith.subf %15, %18 : vector<8x4xf32>
    %20 = math.exp %19 : vector<8x4xf32>
    %cst_12 = arith.constant dense<0.000000e+00> : vector<8xf32>
    %21 = vector.multi_reduction <add>, %20, %cst_12 [1] : vector<8x4xf32> to vector<8xf32>
    %22 = vector.shape_cast %21 : vector<8xf32> to vector<8x1xf32>
    %23 = tpu.reciprocal %22 {approx = true} : vector<8x1xf32> -> vector<8x1xf32>
    %24 = vector.broadcast %23 : vector<8x1xf32> to vector<8x4xf32>
    %25 = arith.mulf %20, %24 : vector<8x4xf32>
    %26 = arith.truncf %25 : vector<8x4xf32> to vector<8x4xbf16>
    %27 = vector.extract_strided_slice %11 {offsets = [0, 0], sizes = [4, 4], strides = [1, 1]} : vector<4x32xbf16> to vector<4x4xbf16>
    %cst_13 = arith.constant dense<0.000000e+00> : vector<8x4xf32>
    %28 = tpu.matmul %26, %27, %cst_13 {dimension_numbers = #tpu.dot_dimension_numbers<[1], [0], [0], [1], [0, 0, 1, 1], [], []>} : vector<8x4xbf16>, vector<4x4xbf16>, vector<8x4xf32> -> vector<8x4xf32>
    %29 = arith.truncf %28 : vector<8x4xf32> to vector<8x4xbf16>
    %30 = vector.extract_strided_slice %12 {offsets = [0, 0], sizes = [4, 32], strides = [1, 1]} : vector<32x32xbf16> to vector<4x32xbf16>
    %cst_14 = arith.constant dense<0.000000e+00> : vector<8x32xf32>
    %31 = tpu.matmul %29, %30, %cst_14 {dimension_numbers = #tpu.dot_dimension_numbers<[1], [0], [0], [1], [0, 0, 1, 1], [], []>} : vector<8x4xbf16>, vector<4x32xbf16>, vector<8x32xf32> -> vector<8x32xf32>
    %32 = vector.extract_strided_slice %8 {offsets = [0, 4], sizes = [8, 4], strides = [1, 1]} : vector<8x32xbf16> to vector<8x4xbf16>
    %33 = vector.extract_strided_slice %10 {offsets = [0, 4], sizes = [4, 4], strides = [1, 1]} : vector<4x32xbf16> to vector<4x4xbf16>
    %cst_15 = arith.constant dense<0.000000e+00> : vector<8x4xf32>
    %34 = tpu.matmul %32, %33, %cst_15 {dimension_numbers = #tpu.dot_dimension_numbers<[1], [1], [0], [0], [0, 0, 1, 0], [], []>} : vector<8x4xbf16>, vector<4x4xbf16>, vector<8x4xf32> -> vector<8x4xf32>
    %cst_16 = arith.constant dense<0xFF800000> : vector<8xf32>
    %35 = vector.multi_reduction <maximumf>, %34, %cst_16 [1] : vector<8x4xf32> to vector<8xf32>
    %36 = vector.shape_cast %35 : vector<8xf32> to vector<8x1xf32>
    %37 = vector.broadcast %36 : vector<8x1xf32> to vector<8x4xf32>
    %38 = arith.subf %34, %37 : vector<8x4xf32>
    %39 = math.exp %38 : vector<8x4xf32>
    %cst_17 = arith.constant dense<0.000000e+00> : vector<8xf32>
    %40 = vector.multi_reduction <add>, %39, %cst_17 [1] : vector<8x4xf32> to vector<8xf32>
    %41 = vector.shape_cast %40 : vector<8xf32> to vector<8x1xf32>
    %42 = tpu.reciprocal %41 {approx = true} : vector<8x1xf32> -> vector<8x1xf32>
    %43 = vector.broadcast %42 : vector<8x1xf32> to vector<8x4xf32>
    %44 = arith.mulf %39, %43 : vector<8x4xf32>
    %45 = arith.truncf %44 : vector<8x4xf32> to vector<8x4xbf16>
    %46 = vector.extract_strided_slice %11 {offsets = [0, 4], sizes = [4, 4], strides = [1, 1]} : vector<4x32xbf16> to vector<4x4xbf16>
    %cst_18 = arith.constant dense<0.000000e+00> : vector<8x4xf32>
    %47 = tpu.matmul %45, %46, %cst_18 {dimension_numbers = #tpu.dot_dimension_numbers<[1], [0], [0], [1], [0, 0, 1, 1], [], []>} : vector<8x4xbf16>, vector<4x4xbf16>, vector<8x4xf32> -> vector<8x4xf32>
    %48 = arith.truncf %47 : vector<8x4xf32> to vector<8x4xbf16>
    %49 = vector.extract_strided_slice %12 {offsets = [4, 0], sizes = [4, 32], strides = [1, 1]} : vector<32x32xbf16> to vector<4x32xbf16>
    %cst_19 = arith.constant dense<0.000000e+00> : vector<8x32xf32>
    %50 = tpu.matmul %48, %49, %cst_19 {dimension_numbers = #tpu.dot_dimension_numbers<[1], [0], [0], [1], [0, 0, 1, 1], [], []>} : vector<8x4xbf16>, vector<4x32xbf16>, vector<8x32xf32> -> vector<8x32xf32>
    %51 = arith.addf %31, %50 : vector<8x32xf32>
    %52 = vector.extract_strided_slice %8 {offsets = [0, 8], sizes = [8, 4], strides = [1, 1]} : vector<8x32xbf16> to vector<8x4xbf16>
    %53 = vector.extract_strided_slice %10 {offsets = [0, 8], sizes = [4, 4], strides = [1, 1]} : vector<4x32xbf16> to vector<4x4xbf16>
    %cst_20 = arith.constant dense<0.000000e+00> : vector<8x4xf32>
    %54 = tpu.matmul %52, %53, %cst_20 {dimension_numbers = #tpu.dot_dimension_numbers<[1], [1], [0], [0], [0, 0, 1, 0], [], []>} : vector<8x4xbf16>, vector<4x4xbf16>, vector<8x4xf32> -> vector<8x4xf32>
    %cst_21 = arith.constant dense<0xFF800000> : vector<8xf32>
    %55 = vector.multi_reduction <maximumf>, %54, %cst_21 [1] : vector<8x4xf32> to vector<8xf32>
    %56 = vector.shape_cast %55 : vector<8xf32> to vector<8x1xf32>
    %57 = vector.broadcast %56 : vector<8x1xf32> to vector<8x4xf32>
    %58 = arith.subf %54, %57 : vector<8x4xf32>
    %59 = math.exp %58 : vector<8x4xf32>
    %cst_22 = arith.constant dense<0.000000e+00> : vector<8xf32>
    %60 = vector.multi_reduction <add>, %59, %cst_22 [1] : vector<8x4xf32> to vector<8xf32>
    %61 = vector.shape_cast %60 : vector<8xf32> to vector<8x1xf32>
    %62 = tpu.reciprocal %61 {approx = true} : vector<8x1xf32> -> vector<8x1xf32>
    %63 = vector.broadcast %62 : vector<8x1xf32> to vector<8x4xf32>
    %64 = arith.mulf %59, %63 : vector<8x4xf32>
    %65 = arith.truncf %64 : vector<8x4xf32> to vector<8x4xbf16>
    %66 = vector.extract_strided_slice %11 {offsets = [0, 8], sizes = [4, 4], strides = [1, 1]} : vector<4x32xbf16> to vector<4x4xbf16>
    %cst_23 = arith.constant dense<0.000000e+00> : vector<8x4xf32>
    %67 = tpu.matmul %65, %66, %cst_23 {dimension_numbers = #tpu.dot_dimension_numbers<[1], [0], [0], [1], [0, 0, 1, 1], [], []>} : vector<8x4xbf16>, vector<4x4xbf16>, vector<8x4xf32> -> vector<8x4xf32>
    %68 = arith.truncf %67 : vector<8x4xf32> to vector<8x4xbf16>
    %69 = vector.extract_strided_slice %12 {offsets = [8, 0], sizes = [4, 32], strides = [1, 1]} : vector<32x32xbf16> to vector<4x32xbf16>
    %cst_24 = arith.constant dense<0.000000e+00> : vector<8x32xf32>
    %70 = tpu.matmul %68, %69, %cst_24 {dimension_numbers = #tpu.dot_dimension_numbers<[1], [0], [0], [1], [0, 0, 1, 1], [], []>} : vector<8x4xbf16>, vector<4x32xbf16>, vector<8x32xf32> -> vector<8x32xf32>
    %71 = arith.addf %51, %70 : vector<8x32xf32>
    %72 = vector.extract_strided_slice %8 {offsets = [0, 12], sizes = [8, 4], strides = [1, 1]} : vector<8x32xbf16> to vector<8x4xbf16>
    %73 = vector.extract_strided_slice %10 {offsets = [0, 12], sizes = [4, 4], strides = [1, 1]} : vector<4x32xbf16> to vector<4x4xbf16>
    %cst_25 = arith.constant dense<0.000000e+00> : vector<8x4xf32>
    %74 = tpu.matmul %72, %73, %cst_25 {dimension_numbers = #tpu.dot_dimension_numbers<[1], [1], [0], [0], [0, 0, 1, 0], [], []>} : vector<8x4xbf16>, vector<4x4xbf16>, vector<8x4xf32> -> vector<8x4xf32>
    %cst_26 = arith.constant dense<0xFF800000> : vector<8xf32>
    %75 = vector.multi_reduction <maximumf>, %74, %cst_26 [1] : vector<8x4xf32> to vector<8xf32>
    %76 = vector.shape_cast %75 : vector<8xf32> to vector<8x1xf32>
    %77 = vector.broadcast %76 : vector<8x1xf32> to vector<8x4xf32>
    %78 = arith.subf %74, %77 : vector<8x4xf32>
    %79 = math.exp %78 : vector<8x4xf32>
    %cst_27 = arith.constant dense<0.000000e+00> : vector<8xf32>
    %80 = vector.multi_reduction <add>, %79, %cst_27 [1] : vector<8x4xf32> to vector<8xf32>
    %81 = vector.shape_cast %80 : vector<8xf32> to vector<8x1xf32>
    %82 = tpu.reciprocal %81 {approx = true} : vector<8x1xf32> -> vector<8x1xf32>
    %83 = vector.broadcast %82 : vector<8x1xf32> to vector<8x4xf32>
    %84 = arith.mulf %79, %83 : vector<8x4xf32>
    %85 = arith.truncf %84 : vector<8x4xf32> to vector<8x4xbf16>
    %86 = vector.extract_strided_slice %11 {offsets = [0, 12], sizes = [4, 4], strides = [1, 1]} : vector<4x32xbf16> to vector<4x4xbf16>
    %cst_28 = arith.constant dense<0.000000e+00> : vector<8x4xf32>
    %87 = tpu.matmul %85, %86, %cst_28 {dimension_numbers = #tpu.dot_dimension_numbers<[1], [0], [0], [1], [0, 0, 1, 1], [], []>} : vector<8x4xbf16>, vector<4x4xbf16>, vector<8x4xf32> -> vector<8x4xf32>
    %88 = arith.truncf %87 : vector<8x4xf32> to vector<8x4xbf16>
    %89 = vector.extract_strided_slice %12 {offsets = [12, 0], sizes = [4, 32], strides = [1, 1]} : vector<32x32xbf16> to vector<4x32xbf16>
    %cst_29 = arith.constant dense<0.000000e+00> : vector<8x32xf32>
    %90 = tpu.matmul %88, %89, %cst_29 {dimension_numbers = #tpu.dot_dimension_numbers<[1], [0], [0], [1], [0, 0, 1, 1], [], []>} : vector<8x4xbf16>, vector<4x32xbf16>, vector<8x32xf32> -> vector<8x32xf32>
    %91 = arith.addf %71, %90 : vector<8x32xf32>
    %92 = vector.extract_strided_slice %8 {offsets = [0, 16], sizes = [8, 4], strides = [1, 1]} : vector<8x32xbf16> to vector<8x4xbf16>
    %93 = vector.extract_strided_slice %10 {offsets = [0, 16], sizes = [4, 4], strides = [1, 1]} : vector<4x32xbf16> to vector<4x4xbf16>
    %cst_30 = arith.constant dense<0.000000e+00> : vector<8x4xf32>
    %94 = tpu.matmul %92, %93, %cst_30 {dimension_numbers = #tpu.dot_dimension_numbers<[1], [1], [0], [0], [0, 0, 1, 0], [], []>} : vector<8x4xbf16>, vector<4x4xbf16>, vector<8x4xf32> -> vector<8x4xf32>
    %cst_31 = arith.constant dense<0xFF800000> : vector<8xf32>
    %95 = vector.multi_reduction <maximumf>, %94, %cst_31 [1] : vector<8x4xf32> to vector<8xf32>
    %96 = vector.shape_cast %95 : vector<8xf32> to vector<8x1xf32>
    %97 = vector.broadcast %96 : vector<8x1xf32> to vector<8x4xf32>
    %98 = arith.subf %94, %97 : vector<8x4xf32>
    %99 = math.exp %98 : vector<8x4xf32>
    %cst_32 = arith.constant dense<0.000000e+00> : vector<8xf32>
    %100 = vector.multi_reduction <add>, %99, %cst_32 [1] : vector<8x4xf32> to vector<8xf32>
    %101 = vector.shape_cast %100 : vector<8xf32> to vector<8x1xf32>
    %102 = tpu.reciprocal %101 {approx = true} : vector<8x1xf32> -> vector<8x1xf32>
    %103 = vector.broadcast %102 : vector<8x1xf32> to vector<8x4xf32>
    %104 = arith.mulf %99, %103 : vector<8x4xf32>
    %105 = arith.truncf %104 : vector<8x4xf32> to vector<8x4xbf16>
    %106 = vector.extract_strided_slice %11 {offsets = [0, 16], sizes = [4, 4], strides = [1, 1]} : vector<4x32xbf16> to vector<4x4xbf16>
    %cst_33 = arith.constant dense<0.000000e+00> : vector<8x4xf32>
    %107 = tpu.matmul %105, %106, %cst_33 {dimension_numbers = #tpu.dot_dimension_numbers<[1], [0], [0], [1], [0, 0, 1, 1], [], []>} : vector<8x4xbf16>, vector<4x4xbf16>, vector<8x4xf32> -> vector<8x4xf32>
    %108 = arith.truncf %107 : vector<8x4xf32> to vector<8x4xbf16>
    %109 = vector.extract_strided_slice %12 {offsets = [16, 0], sizes = [4, 32], strides = [1, 1]} : vector<32x32xbf16> to vector<4x32xbf16>
    %cst_34 = arith.constant dense<0.000000e+00> : vector<8x32xf32>
    %110 = tpu.matmul %108, %109, %cst_34 {dimension_numbers = #tpu.dot_dimension_numbers<[1], [0], [0], [1], [0, 0, 1, 1], [], []>} : vector<8x4xbf16>, vector<4x32xbf16>, vector<8x32xf32> -> vector<8x32xf32>
    %111 = arith.addf %91, %110 : vector<8x32xf32>
    %112 = vector.extract_strided_slice %8 {offsets = [0, 20], sizes = [8, 4], strides = [1, 1]} : vector<8x32xbf16> to vector<8x4xbf16>
    %113 = vector.extract_strided_slice %10 {offsets = [0, 20], sizes = [4, 4], strides = [1, 1]} : vector<4x32xbf16> to vector<4x4xbf16>
    %cst_35 = arith.constant dense<0.000000e+00> : vector<8x4xf32>
    %114 = tpu.matmul %112, %113, %cst_35 {dimension_numbers = #tpu.dot_dimension_numbers<[1], [1], [0], [0], [0, 0, 1, 0], [], []>} : vector<8x4xbf16>, vector<4x4xbf16>, vector<8x4xf32> -> vector<8x4xf32>
    %cst_36 = arith.constant dense<0xFF800000> : vector<8xf32>
    %115 = vector.multi_reduction <maximumf>, %114, %cst_36 [1] : vector<8x4xf32> to vector<8xf32>
    %116 = vector.shape_cast %115 : vector<8xf32> to vector<8x1xf32>
    %117 = vector.broadcast %116 : vector<8x1xf32> to vector<8x4xf32>
    %118 = arith.subf %114, %117 : vector<8x4xf32>
    %119 = math.exp %118 : vector<8x4xf32>
    %cst_37 = arith.constant dense<0.000000e+00> : vector<8xf32>
    %120 = vector.multi_reduction <add>, %119, %cst_37 [1] : vector<8x4xf32> to vector<8xf32>
    %121 = vector.shape_cast %120 : vector<8xf32> to vector<8x1xf32>
    %122 = tpu.reciprocal %121 {approx = true} : vector<8x1xf32> -> vector<8x1xf32>
    %123 = vector.broadcast %122 : vector<8x1xf32> to vector<8x4xf32>
    %124 = arith.mulf %119, %123 : vector<8x4xf32>
    %125 = arith.truncf %124 : vector<8x4xf32> to vector<8x4xbf16>
    %126 = vector.extract_strided_slice %11 {offsets = [0, 20], sizes = [4, 4], strides = [1, 1]} : vector<4x32xbf16> to vector<4x4xbf16>
    %cst_38 = arith.constant dense<0.000000e+00> : vector<8x4xf32>
    %127 = tpu.matmul %125, %126, %cst_38 {dimension_numbers = #tpu.dot_dimension_numbers<[1], [0], [0], [1], [0, 0, 1, 1], [], []>} : vector<8x4xbf16>, vector<4x4xbf16>, vector<8x4xf32> -> vector<8x4xf32>
    %128 = arith.truncf %127 : vector<8x4xf32> to vector<8x4xbf16>
    %129 = vector.extract_strided_slice %12 {offsets = [20, 0], sizes = [4, 32], strides = [1, 1]} : vector<32x32xbf16> to vector<4x32xbf16>
    %cst_39 = arith.constant dense<0.000000e+00> : vector<8x32xf32>
    %130 = tpu.matmul %128, %129, %cst_39 {dimension_numbers = #tpu.dot_dimension_numbers<[1], [0], [0], [1], [0, 0, 1, 1], [], []>} : vector<8x4xbf16>, vector<4x32xbf16>, vector<8x32xf32> -> vector<8x32xf32>
    %131 = arith.addf %111, %130 : vector<8x32xf32>
    %132 = vector.extract_strided_slice %8 {offsets = [0, 24], sizes = [8, 4], strides = [1, 1]} : vector<8x32xbf16> to vector<8x4xbf16>
    %133 = vector.extract_strided_slice %10 {offsets = [0, 24], sizes = [4, 4], strides = [1, 1]} : vector<4x32xbf16> to vector<4x4xbf16>
    %cst_40 = arith.constant dense<0.000000e+00> : vector<8x4xf32>
    %134 = tpu.matmul %132, %133, %cst_40 {dimension_numbers = #tpu.dot_dimension_numbers<[1], [1], [0], [0], [0, 0, 1, 0], [], []>} : vector<8x4xbf16>, vector<4x4xbf16>, vector<8x4xf32> -> vector<8x4xf32>
    %cst_41 = arith.constant dense<0xFF800000> : vector<8xf32>
    %135 = vector.multi_reduction <maximumf>, %134, %cst_41 [1] : vector<8x4xf32> to vector<8xf32>
    %136 = vector.shape_cast %135 : vector<8xf32> to vector<8x1xf32>
    %137 = vector.broadcast %136 : vector<8x1xf32> to vector<8x4xf32>
    %138 = arith.subf %134, %137 : vector<8x4xf32>
    %139 = math.exp %138 : vector<8x4xf32>
    %cst_42 = arith.constant dense<0.000000e+00> : vector<8xf32>
    %140 = vector.multi_reduction <add>, %139, %cst_42 [1] : vector<8x4xf32> to vector<8xf32>
    %141 = vector.shape_cast %140 : vector<8xf32> to vector<8x1xf32>
    %142 = tpu.reciprocal %141 {approx = true} : vector<8x1xf32> -> vector<8x1xf32>
    %143 = vector.broadcast %142 : vector<8x1xf32> to vector<8x4xf32>
    %144 = arith.mulf %139, %143 : vector<8x4xf32>
    %145 = arith.truncf %144 : vector<8x4xf32> to vector<8x4xbf16>
    %146 = vector.extract_strided_slice %11 {offsets = [0, 24], sizes = [4, 4], strides = [1, 1]} : vector<4x32xbf16> to vector<4x4xbf16>
    %cst_43 = arith.constant dense<0.000000e+00> : vector<8x4xf32>
    %147 = tpu.matmul %145, %146, %cst_43 {dimension_numbers = #tpu.dot_dimension_numbers<[1], [0], [0], [1], [0, 0, 1, 1], [], []>} : vector<8x4xbf16>, vector<4x4xbf16>, vector<8x4xf32> -> vector<8x4xf32>
    %148 = arith.truncf %147 : vector<8x4xf32> to vector<8x4xbf16>
    %149 = vector.extract_strided_slice %12 {offsets = [24, 0], sizes = [4, 32], strides = [1, 1]} : vector<32x32xbf16> to vector<4x32xbf16>
    %cst_44 = arith.constant dense<0.000000e+00> : vector<8x32xf32>
    %150 = tpu.matmul %148, %149, %cst_44 {dimension_numbers = #tpu.dot_dimension_numbers<[1], [0], [0], [1], [0, 0, 1, 1], [], []>} : vector<8x4xbf16>, vector<4x32xbf16>, vector<8x32xf32> -> vector<8x32xf32>
    %151 = arith.addf %131, %150 : vector<8x32xf32>
    %152 = vector.extract_strided_slice %8 {offsets = [0, 28], sizes = [8, 4], strides = [1, 1]} : vector<8x32xbf16> to vector<8x4xbf16>
    %153 = vector.extract_strided_slice %10 {offsets = [0, 28], sizes = [4, 4], strides = [1, 1]} : vector<4x32xbf16> to vector<4x4xbf16>
    %cst_45 = arith.constant dense<0.000000e+00> : vector<8x4xf32>
    %154 = tpu.matmul %152, %153, %cst_45 {dimension_numbers = #tpu.dot_dimension_numbers<[1], [1], [0], [0], [0, 0, 1, 0], [], []>} : vector<8x4xbf16>, vector<4x4xbf16>, vector<8x4xf32> -> vector<8x4xf32>
    %cst_46 = arith.constant dense<0xFF800000> : vector<8xf32>
    %155 = vector.multi_reduction <maximumf>, %154, %cst_46 [1] : vector<8x4xf32> to vector<8xf32>
    %156 = vector.shape_cast %155 : vector<8xf32> to vector<8x1xf32>
    %157 = vector.broadcast %156 : vector<8x1xf32> to vector<8x4xf32>
    %158 = arith.subf %154, %157 : vector<8x4xf32>
    %159 = math.exp %158 : vector<8x4xf32>
    %cst_47 = arith.constant dense<0.000000e+00> : vector<8xf32>
    %160 = vector.multi_reduction <add>, %159, %cst_47 [1] : vector<8x4xf32> to vector<8xf32>
    %161 = vector.shape_cast %160 : vector<8xf32> to vector<8x1xf32>
    %162 = tpu.reciprocal %161 {approx = true} : vector<8x1xf32> -> vector<8x1xf32>
    %163 = vector.broadcast %162 : vector<8x1xf32> to vector<8x4xf32>
    %164 = arith.mulf %159, %163 : vector<8x4xf32>
    %165 = arith.truncf %164 : vector<8x4xf32> to vector<8x4xbf16>
    %166 = vector.extract_strided_slice %11 {offsets = [0, 28], sizes = [4, 4], strides = [1, 1]} : vector<4x32xbf16> to vector<4x4xbf16>
    %cst_48 = arith.constant dense<0.000000e+00> : vector<8x4xf32>
    %167 = tpu.matmul %165, %166, %cst_48 {dimension_numbers = #tpu.dot_dimension_numbers<[1], [0], [0], [1], [0, 0, 1, 1], [], []>} : vector<8x4xbf16>, vector<4x4xbf16>, vector<8x4xf32> -> vector<8x4xf32>
    %168 = arith.truncf %167 : vector<8x4xf32> to vector<8x4xbf16>
    %169 = vector.extract_strided_slice %12 {offsets = [28, 0], sizes = [4, 32], strides = [1, 1]} : vector<32x32xbf16> to vector<4x32xbf16>
    %cst_49 = arith.constant dense<0.000000e+00> : vector<8x32xf32>
    %170 = tpu.matmul %168, %169, %cst_49 {dimension_numbers = #tpu.dot_dimension_numbers<[1], [0], [0], [1], [0, 0, 1, 1], [], []>} : vector<8x4xbf16>, vector<4x32xbf16>, vector<8x32xf32> -> vector<8x32xf32>
    %171 = arith.addf %151, %170 : vector<8x32xf32>
    %172 = arith.addf %1, %171 : vector<8x32xf32>
    %c0_50 = arith.constant 0 : index
    %c0_51 = arith.constant 0 : index
    %173 = vector.load %arg7[%c0_50, %c0_51] : memref<1x32xf32, #tpu.memory_space<vmem>>, vector<1x32xf32>
    %174 = vector.broadcast %173 : vector<1x32xf32> to vector<8x32xf32>
    %175 = arith.addf %172, %174 : vector<8x32xf32>
    %c0_52 = arith.constant 0 : index
    %c0_53 = arith.constant 0 : index
    %176 = vector.load %arg8[%c0_52, %c0_53] : memref<1x32xf32, #tpu.memory_space<vmem>>, vector<1x32xf32>
    %c0_54 = arith.constant 0 : index
    %c0_55 = arith.constant 0 : index
    %177 = vector.load %arg9[%c0_54, %c0_55] : memref<1x32xf32, #tpu.memory_space<vmem>>, vector<1x32xf32>
    %cst_56 = arith.constant dense<0.000000e+00> : vector<8xf32>
    %178 = vector.multi_reduction <add>, %175, %cst_56 [1] : vector<8x32xf32> to vector<8xf32>
    %179 = vector.shape_cast %178 : vector<8xf32> to vector<8x1xf32>
    %cst_57 = arith.constant 3.200000e+01 : f32
    %180 = vector.broadcast %cst_57 : f32 to vector<8x1xf32>
    %181 = arith.divf %179, %180 : vector<8x1xf32>
    %182 = vector.broadcast %181 : vector<8x1xf32> to vector<8x32xf32>
    %183 = arith.subf %175, %182 : vector<8x32xf32>
    %184 = arith.mulf %183, %183 : vector<8x32xf32>
    %cst_58 = arith.constant dense<0.000000e+00> : vector<8xf32>
    %185 = vector.multi_reduction <add>, %184, %cst_58 [1] : vector<8x32xf32> to vector<8xf32>
    %186 = vector.shape_cast %185 : vector<8xf32> to vector<8x1xf32>
    %cst_59 = arith.constant 3.200000e+01 : f32
    %187 = vector.broadcast %cst_59 : f32 to vector<8x1xf32>
    %188 = arith.divf %186, %187 : vector<8x1xf32>
    %189 = vector.broadcast %181 : vector<8x1xf32> to vector<8x32xf32>
    %190 = arith.subf %175, %189 : vector<8x32xf32>
    %cst_60 = arith.constant 9.99999974E-6 : f32
    %191 = vector.broadcast %cst_60 : f32 to vector<8x1xf32>
    %192 = arith.addf %188, %191 : vector<8x1xf32>
    %193 = math.rsqrt %192 : vector<8x1xf32>
    %194 = vector.broadcast %193 : vector<8x1xf32> to vector<8x32xf32>
    %195 = arith.mulf %190, %194 : vector<8x32xf32>
    %196 = vector.broadcast %176 : vector<1x32xf32> to vector<8x32xf32>
    %197 = arith.mulf %195, %196 : vector<8x32xf32>
    %198 = vector.broadcast %177 : vector<1x32xf32> to vector<8x32xf32>
    %199 = arith.addf %197, %198 : vector<8x32xf32>
    %c0_61 = arith.constant 0 : index
    %c0_62 = arith.constant 0 : index
    %c0_63 = arith.constant 0 : index
    %200 = vector.load %arg10[%c0_61, %c0_62, %c0_63] : memref<1x8x32xf32, #tpu.memory_space<vmem>>, vector<1x8x32xf32>
    %201 = vector.shape_cast %200 : vector<1x8x32xf32> to vector<8x32xf32>
    %202 = vector.shape_cast %199 : vector<8x32xf32> to vector<1x8x32xf32>
    tpu.vector_store %arg10[%c0_61, %c0_62, %c0_63], %202 {strides = array<i32>} : memref<1x8x32xf32, #tpu.memory_space<vmem>>, vector<1x8x32xf32>,
    return
  }
  func.func @transform_0(%arg0: i32, %arg1: i32) -> (i32, i32, i32) {
    %c0_i32 = arith.constant 0 : i32
    %c0_i32_0 = arith.constant 0 : i32
    return %arg0, %arg1, %c0_i32 : i32, i32, i32
  }
  func.func @transform_1(%arg0: i32, %arg1: i32) -> (i32, i32) {
    %c0_i32 = arith.constant 0 : i32
    %c0_i32_0 = arith.constant 0 : i32
    %c0_i32_1 = arith.constant 0 : i32
    return %c0_i32, %c0_i32_0 : i32, i32
  }
  func.func @transform_2(%arg0: i32, %arg1: i32) -> (i32, i32) {
    %c0_i32 = arith.constant 0 : i32
    %c0_i32_0 = arith.constant 0 : i32
    %c0_i32_1 = arith.constant 0 : i32
    return %c0_i32, %c0_i32_0 : i32, i32
  }
  func.func @transform_3(%arg0: i32, %arg1: i32) -> (i32, i32) {
    %c0_i32 = arith.constant 0 : i32
    %c0_i32_0 = arith.constant 0 : i32
    %c0_i32_1 = arith.constant 0 : i32
    return %c0_i32, %c0_i32_0 : i32, i32
  }
  func.func @transform_4(%arg0: i32, %arg1: i32) -> (i32, i32) {
    %c0_i32 = arith.constant 0 : i32
    %c0_i32_0 = arith.constant 0 : i32
    %c0_i32_1 = arith.constant 0 : i32
    return %c0_i32, %c0_i32_0 : i32, i32
  }
  func.func @transform_5(%arg0: i32, %arg1: i32) -> (i32, i32) {
    %c0_i32 = arith.constant 0 : i32
    %c0_i32_0 = arith.constant 0 : i32
    %c0_i32_1 = arith.constant 0 : i32
    return %c0_i32, %c0_i32_0 : i32, i32
  }
  func.func @transform_6(%arg0: i32, %arg1: i32) -> (i32, i32) {
    %c0_i32 = arith.constant 0 : i32
    %c0_i32_0 = arith.constant 0 : i32
    %c0_i32_1 = arith.constant 0 : i32
    return %c0_i32, %c0_i32_0 : i32, i32
  }
  func.func @transform_7(%arg0: i32, %arg1: i32) -> (i32, i32) {
    %c0_i32 = arith.constant 0 : i32
    %c0_i32_0 = arith.constant 0 : i32
    %c0_i32_1 = arith.constant 0 : i32
    return %c0_i32, %c0_i32_0 : i32, i32
  }
  func.func @transform_8(%arg0: i32, %arg1: i32) -> (i32, i32, i32) {
    %c0_i32 = arith.constant 0 : i32
    %c0_i32_0 = arith.constant 0 : i32
    return %arg0, %arg1, %c0_i32 : i32, i32, i32
  }
}

module attributes {stable_mosaic.version = 11 : i64} {
  func.func @kernel(%arg0: i32, %arg1: memref<2x8x32xf32, #tpu.memory_space<vmem>>, %arg2: memref<2x32xf32, #tpu.memory_space<vmem>>, %arg3: memref<32x6xbf16, #tpu.memory_space<vmem>>, %arg4: memref<1x6xf32, #tpu.memory_space<vmem>>, %arg5: memref<32x5xbf16, #tpu.memory_space<vmem>>, %arg6: memref<1x5xf32, #tpu.memory_space<vmem>>, %arg7: memref<2x6xf32, #tpu.memory_space<vmem>>, %arg8: memref<2x5xf32, #tpu.memory_space<vmem>>) attributes {dimension_semantics = [#tpu.dimension_semantics<parallel>], iteration_bounds = array<i64: 1>, scalar_prefetch = 0 : i64, scratch_operands = 0 : i64, tpu.core_type = #tpu.core_type<tc>, window_params = [{pipeline_mode = #tpu.pipeline_mode<synchronous>, transform_indices = @transform_0, window_bounds = array<i64: 2, 8, 32>}, {pipeline_mode = #tpu.pipeline_mode<synchronous>, transform_indices = @transform_1, window_bounds = array<i64: 2, 32>}, {pipeline_mode = #tpu.pipeline_mode<synchronous>, transform_indices = @transform_2, window_bounds = array<i64: 32, 6>}, {pipeline_mode = #tpu.pipeline_mode<synchronous>, transform_indices = @transform_3, window_bounds = array<i64: 1, 6>}, {pipeline_mode = #tpu.pipeline_mode<synchronous>, transform_indices = @transform_4, window_bounds = array<i64: 32, 5>}, {pipeline_mode = #tpu.pipeline_mode<synchronous>, transform_indices = @transform_5, window_bounds = array<i64: 1, 5>}, {pipeline_mode = #tpu.pipeline_mode<synchronous>, transform_indices = @transform_6, window_bounds = array<i64: 2, 6>}, {pipeline_mode = #tpu.pipeline_mode<synchronous>, transform_indices = @transform_7, window_bounds = array<i64: 2, 5>}]} {
    %c0 = arith.constant 0 : index
    %c0_0 = arith.constant 0 : index
    %c0_1 = arith.constant 0 : index
    %0 = vector.load %arg1[%c0, %c0_0, %c0_1] : memref<2x8x32xf32, #tpu.memory_space<vmem>>, vector<2x8x32xf32>
    %cst = arith.constant dense<0.000000e+00> : vector<2x32xf32>
    %1 = vector.multi_reduction <add>, %0, %cst [1] : vector<2x8x32xf32> to vector<2x32xf32>
    %2 = vector.extract_strided_slice %0 {offsets = [0, 0, 0], sizes = [2, 1, 32], strides = [1, 1, 1]} : vector<2x8x32xf32> to vector<2x1x32xf32>
    %cst_2 = arith.constant dense<0.000000e+00> : vector<2x32xf32>
    %3 = vector.multi_reduction <add>, %2, %cst_2 [1] : vector<2x1x32xf32> to vector<2x32xf32>
    %4 = arith.subf %1, %3 : vector<2x32xf32>
    %cst_3 = arith.constant 0.142857149 : f32
    %5 = vector.broadcast %cst_3 : f32 to vector<2x32xf32>
    %6 = arith.mulf %4, %5 : vector<2x32xf32>
    %7 = arith.truncf %6 : vector<2x32xf32> to vector<2x32xbf16>
    %c0_4 = arith.constant 0 : index
    %c0_5 = arith.constant 0 : index
    %8 = vector.load %arg3[%c0_4, %c0_5] : memref<32x6xbf16, #tpu.memory_space<vmem>>, vector<32x6xbf16>
    %cst_6 = arith.constant dense<0.000000e+00> : vector<2x6xf32>
    %9 = tpu.matmul %7, %8, %cst_6 {dimension_numbers = #tpu.dot_dimension_numbers<[1], [0], [0], [1], [0, 0, 1, 1], [], []>} : vector<2x32xbf16>, vector<32x6xbf16>, vector<2x6xf32> -> vector<2x6xf32>
    %c0_7 = arith.constant 0 : index
    %c0_8 = arith.constant 0 : index
    %10 = vector.load %arg4[%c0_7, %c0_8] : memref<1x6xf32, #tpu.memory_space<vmem>>, vector<1x6xf32>
    %11 = vector.broadcast %10 : vector<1x6xf32> to vector<2x6xf32>
    %12 = arith.addf %9, %11 : vector<2x6xf32>
    %c0_9 = arith.constant 0 : index
    %c0_10 = arith.constant 0 : index
    %13 = vector.load %arg7[%c0_9, %c0_10] : memref<2x6xf32, #tpu.memory_space<vmem>>, vector<2x6xf32>
    tpu.vector_store %arg7[%c0_9, %c0_10], %12 {strides = array<i32>} : memref<2x6xf32, #tpu.memory_space<vmem>>, vector<2x6xf32>,
    %c0_11 = arith.constant 0 : index
    %c0_12 = arith.constant 0 : index
    %14 = vector.load %arg2[%c0_11, %c0_12] : memref<2x32xf32, #tpu.memory_space<vmem>>, vector<2x32xf32>
    %15 = arith.truncf %14 : vector<2x32xf32> to vector<2x32xbf16>
    %c0_13 = arith.constant 0 : index
    %c0_14 = arith.constant 0 : index
    %16 = vector.load %arg5[%c0_13, %c0_14] : memref<32x5xbf16, #tpu.memory_space<vmem>>, vector<32x5xbf16>
    %cst_15 = arith.constant dense<0.000000e+00> : vector<2x5xf32>
    %17 = tpu.matmul %15, %16, %cst_15 {dimension_numbers = #tpu.dot_dimension_numbers<[1], [0], [0], [1], [0, 0, 1, 1], [], []>} : vector<2x32xbf16>, vector<32x5xbf16>, vector<2x5xf32> -> vector<2x5xf32>
    %c0_16 = arith.constant 0 : index
    %c0_17 = arith.constant 0 : index
    %18 = vector.load %arg6[%c0_16, %c0_17] : memref<1x5xf32, #tpu.memory_space<vmem>>, vector<1x5xf32>
    %19 = vector.broadcast %18 : vector<1x5xf32> to vector<2x5xf32>
    %20 = arith.addf %17, %19 : vector<2x5xf32>
    %c0_18 = arith.constant 0 : index
    %c0_19 = arith.constant 0 : index
    %21 = vector.load %arg8[%c0_18, %c0_19] : memref<2x5xf32, #tpu.memory_space<vmem>>, vector<2x5xf32>
    tpu.vector_store %arg8[%c0_18, %c0_19], %20 {strides = array<i32>} : memref<2x5xf32, #tpu.memory_space<vmem>>, vector<2x5xf32>,
    return
  }
  func.func @transform_0(%arg0: i32) -> (i32, i32, i32) {
    %c0_i32 = arith.constant 0 : i32
    %c0_i32_0 = arith.constant 0 : i32
    %c0_i32_1 = arith.constant 0 : i32
    %c0_i32_2 = arith.constant 0 : i32
    return %c0_i32, %c0_i32_0, %c0_i32_1 : i32, i32, i32
  }
  func.func @transform_1(%arg0: i32) -> (i32, i32) {
    %c0_i32 = arith.constant 0 : i32
    %c0_i32_0 = arith.constant 0 : i32
    %c0_i32_1 = arith.constant 0 : i32
    return %c0_i32, %c0_i32_0 : i32, i32
  }
  func.func @transform_2(%arg0: i32) -> (i32, i32) {
    %c0_i32 = arith.constant 0 : i32
    %c0_i32_0 = arith.constant 0 : i32
    %c0_i32_1 = arith.constant 0 : i32
    return %c0_i32, %c0_i32_0 : i32, i32
  }
  func.func @transform_3(%arg0: i32) -> (i32, i32) {
    %c0_i32 = arith.constant 0 : i32
    %c0_i32_0 = arith.constant 0 : i32
    %c0_i32_1 = arith.constant 0 : i32
    return %c0_i32, %c0_i32_0 : i32, i32
  }
  func.func @transform_4(%arg0: i32) -> (i32, i32) {
    %c0_i32 = arith.constant 0 : i32
    %c0_i32_0 = arith.constant 0 : i32
    %c0_i32_1 = arith.constant 0 : i32
    return %c0_i32, %c0_i32_0 : i32, i32
  }
  func.func @transform_5(%arg0: i32) -> (i32, i32) {
    %c0_i32 = arith.constant 0 : i32
    %c0_i32_0 = arith.constant 0 : i32
    %c0_i32_1 = arith.constant 0 : i32
    return %c0_i32, %c0_i32_0 : i32, i32
  }
  func.func @transform_6(%arg0: i32) -> (i32, i32) {
    %c0_i32 = arith.constant 0 : i32
    %c0_i32_0 = arith.constant 0 : i32
    %c0_i32_1 = arith.constant 0 : i32
    return %c0_i32, %c0_i32_0 : i32, i32
  }
  func.func @transform_7(%arg0: i32) -> (i32, i32) {
    %c0_i32 = arith.constant 0 : i32
    %c0_i32_0 = arith.constant 0 : i32
    %c0_i32_1 = arith.constant 0 : i32
    return %c0_i32, %c0_i32_0 : i32, i32
  }
}

module attributes {stable_mosaic.version = 11 : i64} {
  func.func @kernel(%arg0: i32, %arg1: memref<16x32xf32, #tpu.memory_space<vmem>>, %arg2: memref<32x32xbf16, #tpu.memory_space<vmem>>, %arg3: memref<1x32xf32, #tpu.memory_space<vmem>>, %arg4: memref<16x32xf32, #tpu.memory_space<vmem>>) attributes {dimension_semantics = [#tpu.dimension_semantics<parallel>], iteration_bounds = array<i64: 1>, scalar_prefetch = 0 : i64, scratch_operands = 0 : i64, tpu.core_type = #tpu.core_type<tc>, window_params = [{transform_indices = @transform_0, window_bounds = array<i64: 16, 32>}, {pipeline_mode = #tpu.pipeline_mode<synchronous>, transform_indices = @transform_1, window_bounds = array<i64: 32, 32>}, {pipeline_mode = #tpu.pipeline_mode<synchronous>, transform_indices = @transform_2, window_bounds = array<i64: 1, 32>}, {transform_indices = @transform_3, window_bounds = array<i64: 16, 32>}]} {
    %c0 = arith.constant 0 : index
    %c0_0 = arith.constant 0 : index
    %0 = vector.load %arg1[%c0, %c0_0] : memref<16x32xf32, #tpu.memory_space<vmem>>, vector<16x32xf32>
    %1 = arith.truncf %0 : vector<16x32xf32> to vector<16x32xbf16>
    %c0_1 = arith.constant 0 : index
    %c0_2 = arith.constant 0 : index
    %2 = vector.load %arg2[%c0_1, %c0_2] : memref<32x32xbf16, #tpu.memory_space<vmem>>, vector<32x32xbf16>
    %cst = arith.constant dense<0.000000e+00> : vector<16x32xf32>
    %3 = tpu.matmul %1, %2, %cst {dimension_numbers = #tpu.dot_dimension_numbers<[1], [0], [0], [1], [0, 0, 1, 1], [], []>} : vector<16x32xbf16>, vector<32x32xbf16>, vector<16x32xf32> -> vector<16x32xf32>
    %c0_3 = arith.constant 0 : index
    %c0_4 = arith.constant 0 : index
    %4 = vector.load %arg3[%c0_3, %c0_4] : memref<1x32xf32, #tpu.memory_space<vmem>>, vector<1x32xf32>
    %5 = vector.broadcast %4 : vector<1x32xf32> to vector<16x32xf32>
    %6 = arith.addf %3, %5 : vector<16x32xf32>
    %c0_5 = arith.constant 0 : index
    %c0_6 = arith.constant 0 : index
    %7 = vector.load %arg4[%c0_5, %c0_6] : memref<16x32xf32, #tpu.memory_space<vmem>>, vector<16x32xf32>
    tpu.vector_store %arg4[%c0_5, %c0_6], %6 {strides = array<i32>} : memref<16x32xf32, #tpu.memory_space<vmem>>, vector<16x32xf32>,
    return
  }
  func.func @transform_0(%arg0: i32) -> (i32, i32) {
    %c0_i32 = arith.constant 0 : i32
    %c0_i32_0 = arith.constant 0 : i32
    return %arg0, %c0_i32 : i32, i32
  }
  func.func @transform_1(%arg0: i32) -> (i32, i32) {
    %c0_i32 = arith.constant 0 : i32
    %c0_i32_0 = arith.constant 0 : i32
    %c0_i32_1 = arith.constant 0 : i32
    return %c0_i32, %c0_i32_0 : i32, i32
  }
  func.func @transform_2(%arg0: i32) -> (i32, i32) {
    %c0_i32 = arith.constant 0 : i32
    %c0_i32_0 = arith.constant 0 : i32
    %c0_i32_1 = arith.constant 0 : i32
    return %c0_i32, %c0_i32_0 : i32, i32
  }
  func.func @transform_3(%arg0: i32) -> (i32, i32) {
    %c0_i32 = arith.constant 0 : i32
    %c0_i32_0 = arith.constant 0 : i32
    return %arg0, %c0_i32 : i32, i32
  }
}

</mosaic_0001>

<llo_original>
// kernel: image2report_forward.13
$region0: #{image2report_forward.13}
  #allocation0 [shape = 'u32[]', space=smem, size = 0x4, offset = 0x4, fixed_abs, tag = 'smem constant byte address 0x4 - core index']
  #allocation1 [shape = 'u32[144,128]{1,0:T(1,128)}', space=vmem, size = 0x12000, scoped, tag = 'internal scratch']
  %s0 = inlined_call_operand.vmem [shape: f32[4,24], index: 0, kind: input, shape index: {}]
  %s1 = inlined_call_operand.vmem [shape: bf16[24,32], index: 1, kind: input, shape index: {}]
  %s2 = inlined_call_operand.vmem [shape: f32[1,32], index: 2, kind: input, shape index: {}]
  %s3 = inlined_call_operand.vmem [shape: bf16[32,192], index: 3, kind: input, shape index: {}]
  %s4 = inlined_call_operand.vmem [shape: f32[1,192], index: 4, kind: input, shape index: {}]
  %s5 = inlined_call_operand.vmem [shape: bf16[4,192], index: 5, kind: output, shape index: {}]
  %s6 = sld [smem:[#allocation0]]
  $region30: #{image2report_forward.13} parent=0
    _
  %s8 = ssub.s32 1, %s6
  %s9 = scalar_select 0, %s8, %s6
  // Predicated region
  $region2: #{image2report_forward.13} parent=0 // pred_check
    _
  $region3: #{image2report_forward.13} parent=0 // pred_check_branch
    %11 = sbr.rel (0) target = $region5
  $region4: #{image2report_forward.13} parent=0 // pred_region
    _
  $region5: #{image2report_forward.13} parent=0 // pred_fallthru
    _
  // Predicated region
  $region6: #{image2report_forward.13} parent=0 // pred_check
    _
  $region7: #{image2report_forward.13} parent=0 // pred_check_branch
    %13 = sbr.rel (0) target = $region9
  $region8: #{image2report_forward.13} parent=0 // pred_region
    _
  $region9: #{image2report_forward.13} parent=0 // pred_fallthru
    _
  // Predicated region
  $region10: #{image2report_forward.13} parent=0 // pred_check
    _
  $region11: #{image2report_forward.13} parent=0 // pred_check_branch
    %15 = sbr.rel (0) target = $region13
  $region12: #{image2report_forward.13} parent=0 // pred_region
    _
  $region13: #{image2report_forward.13} parent=0 // pred_fallthru
    _
  // Predicated region
  $region14: #{image2report_forward.13} parent=0 // pred_check
    _
  $region15: #{image2report_forward.13} parent=0 // pred_check_branch
    %17 = sbr.rel (0) target = $region17
  $region16: #{image2report_forward.13} parent=0 // pred_region
    _
  $region17: #{image2report_forward.13} parent=0 // pred_fallthru
    _
  // Predicated region
  $region18: #{image2report_forward.13} parent=0 // pred_check
    _
  $region19: #{image2report_forward.13} parent=0 // pred_check_branch
    %19 = sbr.rel (0) target = $region21
  $region20: #{image2report_forward.13} parent=0 // pred_region
    _
  $region21: #{image2report_forward.13} parent=0 // pred_fallthru
    _
  %v21 = vld [vmem:[%s0] sm:$0xf]
  %v22 = vpack.c.bf16 %v21, %v21
  %v23 = vld [vmem:[%s1] sm:$0xf]
  %v24 = vld [vmem:[%s1 + $0x4] sm:$0xf]
  %v25 = vld [vmem:[%s1 + $0x8] sm:$0xf]
  %v26 = vld [vmem:[%s2] sm:$0x1]
  %v28 = vlaneseq
  %v29 = vshrl.u32 %v28, 7
  %v30 = vsub.s32 0, %v29
  %v31 = vrot.slane %v26, %v30
  %v36 = vunpack.c.l.b16 %v23
  %v37 = vunpack.c.l.b16 %v24
  %v38 = vunpack.c.l.b16 %v25
  %v39 = vpack.c.b16 %v37, %v36
  %v40 = vpack.c.b16 %v38, %v38
  %vm42 = vcmask 195584
  %v44 = vsel %vm42, %v22, 0
  %vm46 = vcmask 1043456
  %v48 = vsel %vm46, %v40, 0
  %50 = vmatprep.subr.bf16.mxu0 0
  %51 = vmatpush1.bf16.msra.mxu0 %v39
  %52 = vmatprep.subr.bf16.mxu0 0
  %53 = vmatpush1.bf16.msra.mxu0 %v48
  %54 = vmatprep.subr.bf16.mxu0 0
  %55 = vmatpush1.bf16.msra.mxu0 0
  %56 = vmatprep.subr.bf16.mxu0 0
  %57 = vmatpush1.bf16.msra.mxu0 0
  %58 = vmatprep.subr.bf16.mxu0 0
  %59 = vmatpush1.bf16.msra.mxu0 0
  %60 = vmatprep.subr.bf16.mxu0 0
  %61 = vmatpush1.bf16.msra.mxu0 0
  %62 = vmatprep.subr.bf16.mxu0 0
  %63 = vmatpush1.bf16.msra.mxu0 0
  %64 = vmatprep.subr.bf16.mxu0 0
  %65 = vmatpush1.bf16.msra.mxu0 0
  %66 = vmatprep.subr.bf16.mxu0 0
  %67 = vmatpush1.bf16.msra.mxu0 0
  %68 = vmatprep.subr.bf16.mxu0 0
  %69 = vmatpush1.bf16.msra.mxu0 0
  %70 = vmatprep.subr.bf16.mxu0 0
  %71 = vmatpush1.bf16.msra.mxu0 0
  %72 = vmatprep.subr.bf16.mxu0 0
  %73 = vmatpush1.bf16.msra.mxu0 0
  %74 = vmatprep.subr.bf16.mxu0 0
  %75 = vmatpush1.bf16.msra.mxu0 0
  %76 = vmatprep.subr.bf16.mxu0 0
  %77 = vmatpush1.bf16.msra.mxu0 0
  %78 = vmatprep.subr.bf16.mxu0 0
  %79 = vmatpush1.bf16.msra.mxu0 0
  %80 = vmatprep.subr.bf16.mxu0 0
  %81 = vmatpush1.bf16.msra.mxu0 0
  %82 = vmatprep.mubr.bf16.mxu0 0
  %83 = vmatmul.mubr.bf16.gmra.mrb[0].mxu0 %v44
  %v84 = vpop.f32.mrb[0].mxu0
  %v85 = vadd.f32 %v31, %v84
  %v86 = vpop.f32.mrb[0].mxu0
  %v87 = vpop.f32.mrb[0].mxu0
  %v88 = vpop.f32.mrb[0].mxu0
  %89 = vdwg.mxu0
  %v90 = vpack.c.bf16 %v85, %v85
  %v91 = vld [vmem:[%s3] sm:$0xff]
  %v92 = vld [vmem:[%s3 + $0x8] sm:$0xff]
  %v93 = vld [vmem:[%s3 + $0x10] sm:$0xff]
  %v94 = vld [vmem:[%s3 + $0x18] sm:$0xff]
  %v95 = vld [vmem:[%s4] sm:$0x3]
  %v97 = vlaneseq
  %v98 = vshrl.u32 %v97, 7
  %v99 = vsub.s32 0, %v98
  %v100 = vrot.slane %v95, %v99
  %v101 = vlaneseq
  %v102 = vshrl.u32 %v101, 7
  %v103 = vsub.s32 1, %v102
  %v104 = vrot.slane %v95, %v103
  %v111 = vunpack.c.l.b16 %v91
  %v112 = vunpack.c.h.b16 %v91
  %v113 = vunpack.c.l.b16 %v92
  %v114 = vunpack.c.h.b16 %v92
  %v115 = vunpack.c.l.b16 %v93
  %v116 = vunpack.c.h.b16 %v93
  %v117 = vunpack.c.l.b16 %v94
  %v118 = vunpack.c.h.b16 %v94
  %v119 = vpack.c.b16 %v113, %v111
  %v120 = vpack.c.b16 %v114, %v112
  %v121 = vpack.c.b16 %v117, %v115
  %v122 = vpack.c.b16 %v118, %v116
  %vm127 = vcmask 261120
  %v129 = vsel %vm127, %v90, 0
  %131 = vmatprep.subr.bf16.mxu0 %v120
  %132 = vmatpush1.bf16.msra.mxu0 %v119
  %133 = vmatprep.subr.bf16.mxu0 %v122
  %134 = vmatpush1.bf16.msra.mxu0 %v121
  %135 = vmatprep.subr.bf16.mxu0 0
  %136 = vmatpush1.bf16.msra.mxu0 0
  %137 = vmatprep.subr.bf16.mxu0 0
  %138 = vmatpush1.bf16.msra.mxu0 0
  %139 = vmatprep.subr.bf16.mxu0 0
  %140 = vmatpush1.bf16.msra.mxu0 0
  %141 = vmatprep.subr.bf16.mxu0 0
  %142 = vmatpush1.bf16.msra.mxu0 0
  %143 = vmatprep.subr.bf16.mxu0 0
  %144 = vmatpush1.bf16.msra.mxu0 0
  %145 = vmatprep.subr.bf16.mxu0 0
  %146 = vmatpush1.bf16.msra.mxu0 0
  %147 = vmatprep.subr.bf16.mxu0 0
  %148 = vmatpush1.bf16.msra.mxu0 0
  %149 = vmatprep.subr.bf16.mxu0 0
  %150 = vmatpush1.bf16.msra.mxu0 0
  %151 = vmatprep.subr.bf16.mxu0 0
  %152 = vmatpush1.bf16.msra.mxu0 0
  %153 = vmatprep.subr.bf16.mxu0 0
  %154 = vmatpush1.bf16.msra.mxu0 0
  %155 = vmatprep.subr.bf16.mxu0 0
  %156 = vmatpush1.bf16.msra.mxu0 0
  %157 = vmatprep.subr.bf16.mxu0 0
  %158 = vmatpush1.bf16.msra.mxu0 0
  %159 = vmatprep.subr.bf16.mxu0 0
  %160 = vmatpush1.bf16.msra.mxu0 0
  %161 = vmatprep.subr.bf16.mxu0 0
  %162 = vmatpush1.bf16.msra.mxu0 0
  %163 = vmatprep.mubr.bf16.mxu0 0
  %164 = vmatmul.mubr.bf16.gmra.mrb[0].mxu0 %v129
  %v165 = vpop.f32.mrb[0].mxu0
  %v166 = vadd.f32 %v100, %v165
  %v167 = vpop.f32.mrb[0].mxu0
  %v168 = vadd.f32 %v104, %v167
  %v169 = vpop.f32.mrb[0].mxu0
  %v170 = vpop.f32.mrb[0].mxu0
  %171 = vdwg.mxu0
  %v172 = vpack.c.bf16 %v166, %v166
  %v173 = vpack.c.bf16 %v168, %v168
  %v176 = vcombine.low %v172, %v173
  %v178 = vunpack.c.l.s4 1983009808
  %v179 = vunpack.c.0.s8 %v178
  %v180 = vlaneseq
  %v181 = vshrl.u32 %v180, 7
  %v182 = vsub.s32 %v179, %v181
  %v183 = vrot.slane %v176, %v182
  %vm185 = vcmask 1041408
  %vm186 = vcmask 519170
  %vm187 = vmor %vm186, %vm185
  %188 = vst.msk [vmem:[%s5] sm:$0xf] %vm187, %v183
  // Predicated region
  $region22: #{image2report_forward.13} parent=0 // pred_check
    _
  $region23: #{image2report_forward.13} parent=0 // pred_check_branch
    %190 = sbr.rel (0) target = $region25
  $region24: #{image2report_forward.13} parent=0 // pred_region
    _
  $region25: #{image2report_forward.13} parent=0 // pred_fallthru
    _
  // Predicated region
  $region26: #{image2report_forward.13} parent=0 // pred_check
    _
  $region27: #{image2report_forward.13} parent=0 // pred_check_branch
    %192 = sbr.rel (0) target = $region29
  $region28: #{image2report_forward.13} parent=0 // pred_region
    _
  $region29: #{image2report_forward.13} parent=0 // pred_fallthru
    _

// kernel: image2report_forward.12
$region0: #{image2report_forward.12}
  #allocation0 [shape = 'u32[]', space=smem, size = 0x4, offset = 0x4, fixed_abs, tag = 'smem constant byte address 0x4 - core index']
  #allocation1 [shape = 'u32[144,128]{1,0:T(1,128)}', space=vmem, size = 0x12000, scoped, tag = 'internal scratch']
  %s0 = inlined_call_operand.vmem [shape: f32[16,32], index: 0, kind: input, shape index: {}]
  %s1 = inlined_call_operand.vmem [shape: bf16[32,64], index: 1, kind: input, shape index: {}]
  %s2 = inlined_call_operand.vmem [shape: f32[1,64], index: 2, kind: input, shape index: {}]
  %s3 = inlined_call_operand.vmem [shape: bf16[64,32], index: 3, kind: input, shape index: {}]
  %s4 = inlined_call_operand.vmem [shape: f32[1,32], index: 4, kind: input, shape index: {}]
  %s5 = inlined_call_operand.vmem [shape: f32[1,32], index: 5, kind: input, shape index: {}]
  %s6 = inlined_call_operand.vmem [shape: f32[1,32], index: 6, kind: input, shape index: {}]
  %s7 = inlined_call_operand.vmem [shape: f32[16,32], index: 7, kind: output, shape index: {}]
  %s8 = sld [smem:[#allocation0]]
  $region38: #{image2report_forward.12} parent=0
    _
  %s10 = ssub.s32 1, %s8
  %s11 = scalar_select 0, %s10, %s8
  // Predicated region
  $region2: #{image2report_forward.12} parent=0 // pred_check
    _
  $region3: #{image2report_forward.12} parent=0 // pred_check_branch
    %13 = sbr.rel (0) target = $region5
  $region4: #{image2report_forward.12} parent=0 // pred_region
    _
  $region5: #{image2report_forward.12} parent=0 // pred_fallthru
    _
  // Predicated region
  $region6: #{image2report_forward.12} parent=0 // pred_check
    _
  $region7: #{image2report_forward.12} parent=0 // pred_check_branch
    %15 = sbr.rel (0) target = $region9
  $region8: #{image2report_forward.12} parent=0 // pred_region
    _
  $region9: #{image2report_forward.12} parent=0 // pred_fallthru
    _
  // Predicated region
  $region10: #{image2report_forward.12} parent=0 // pred_check
    _
  $region11: #{image2report_forward.12} parent=0 // pred_check_branch
    %17 = sbr.rel (0) target = $region13
  $region12: #{image2report_forward.12} parent=0 // pred_region
    _
  $region13: #{image2report_forward.12} parent=0 // pred_fallthru
    _
  // Predicated region
  $region14: #{image2report_forward.12} parent=0 // pred_check
    _
  $region15: #{image2report_forward.12} parent=0 // pred_check_branch
    %19 = sbr.rel (0) target = $region17
  $region16: #{image2report_forward.12} parent=0 // pred_region
    _
  $region17: #{image2report_forward.12} parent=0 // pred_fallthru
    _
  // Predicated region
  $region18: #{image2report_forward.12} parent=0 // pred_check
    _
  $region19: #{image2report_forward.12} parent=0 // pred_check_branch
    %21 = sbr.rel (0) target = $region21
  $region20: #{image2report_forward.12} parent=0 // pred_region
    _
  $region21: #{image2report_forward.12} parent=0 // pred_fallthru
    _
  // Predicated region
  $region22: #{image2report_forward.12} parent=0 // pred_check
    _
  $region23: #{image2report_forward.12} parent=0 // pred_check_branch
    %23 = sbr.rel (0) target = $region25
  $region24: #{image2report_forward.12} parent=0 // pred_region
    _
  $region25: #{image2report_forward.12} parent=0 // pred_fallthru
    _
  // Predicated region
  $region26: #{image2report_forward.12} parent=0 // pred_check
    _
  $region27: #{image2report_forward.12} parent=0 // pred_check_branch
    %25 = sbr.rel (0) target = $region29
  $region28: #{image2report_forward.12} parent=0 // pred_region
    _
  $region29: #{image2report_forward.12} parent=0 // pred_fallthru
    _
  %v27 = vld [vmem:[%s0] sm:$0xff]
  %v28 = vld [vmem:[%s0 + $0x8] sm:$0xff]
  %v29 = vpack.c.bf16 %v28, %v27
  %v30 = vld [vmem:[%s1] sm:$0xf]
  %v31 = vld [vmem:[%s1 + $0x4] sm:$0xf]
  %v32 = vld [vmem:[%s1 + $0x8] sm:$0xf]
  %v33 = vld [vmem:[%s1 + $0xc] sm:$0xf]
  %v34 = vld [vmem:[%s2] sm:$0x1]
  %v36 = vlaneseq
  %v37 = vshrl.u32 %v36, 7
  %v38 = vsub.s32 0, %v37
  %v39 = vrot.slane %v34, %v38
  %v45 = vunpack.c.l.b16 %v30
  %v46 = vunpack.c.l.b16 %v31
  %v47 = vunpack.c.l.b16 %v32
  %v48 = vunpack.c.l.b16 %v33
  %v49 = vpack.c.b16 %v46, %v45
  %v50 = vpack.c.b16 %v48, %v47
  %vm53 = vcmask 261120
  %v55 = vsel %vm53, %v29, 0
  %57 = vmatprep.subr.bf16.mxu0 0
  %58 = vmatpush1.bf16.msra.mxu0 %v49
  %59 = vmatprep.subr.bf16.mxu0 0
  %60 = vmatpush1.bf16.msra.mxu0 %v50
  %61 = vmatprep.subr.bf16.mxu0 0
  %62 = vmatpush1.bf16.msra.mxu0 0
  %63 = vmatprep.subr.bf16.mxu0 0
  %64 = vmatpush1.bf16.msra.mxu0 0
  %65 = vmatprep.subr.bf16.mxu0 0
  %66 = vmatpush1.bf16.msra.mxu0 0
  %67 = vmatprep.subr.bf16.mxu0 0
  %68 = vmatpush1.bf16.msra.mxu0 0
  %69 = vmatprep.subr.bf16.mxu0 0
  %70 = vmatpush1.bf16.msra.mxu0 0
  %71 = vmatprep.subr.bf16.mxu0 0
  %72 = vmatpush1.bf16.msra.mxu0 0
  %73 = vmatprep.subr.bf16.mxu0 0
  %74 = vmatpush1.bf16.msra.mxu0 0
  %75 = vmatprep.subr.bf16.mxu0 0
  %76 = vmatpush1.bf16.msra.mxu0 0
  %77 = vmatprep.subr.bf16.mxu0 0
  %78 = vmatpush1.bf16.msra.mxu0 0
  %79 = vmatprep.subr.bf16.mxu0 0
  %80 = vmatpush1.bf16.msra.mxu0 0
  %81 = vmatprep.subr.bf16.mxu0 0
  %82 = vmatpush1.bf16.msra.mxu0 0
  %83 = vmatprep.subr.bf16.mxu0 0
  %84 = vmatpush1.bf16.msra.mxu0 0
  %85 = vmatprep.subr.bf16.mxu0 0
  %86 = vmatpush1.bf16.msra.mxu0 0
  %87 = vmatprep.subr.bf16.mxu0 0
  %88 = vmatpush1.bf16.msra.mxu0 0
  %89 = vmatprep.mubr.bf16.mxu0 0
  %90 = vmatmul.mubr.bf16.gmra.mrb[0].mxu0 %v55
  %v91 = vpop.f32.mrb[0].mxu0
  %v92 = vadd.f32 %v39, %v91
  %v93 = vpop.f32.mrb[0].mxu0
  %v94 = vpop.f32.mrb[0].mxu0
  %v95 = vadd.f32 %v39, %v94
  %v96 = vpop.f32.mrb[0].mxu0
  %97 = vdwg.mxu0
  %v98 = vmax.f32 %v92, 0.0
  %v99 = vmax.f32 %v95, 0.0
  %v100 = vpack.c.bf16 %v99, %v98
  %v101 = vld [vmem:[%s3] sm:$0xf]
  %v102 = vld [vmem:[%s3 + $0x4] sm:$0xf]
  %v103 = vld [vmem:[%s3 + $0x8] sm:$0xf]
  %v104 = vld [vmem:[%s3 + $0xc] sm:$0xf]
  %v105 = vld [vmem:[%s3 + $0x10] sm:$0xf]
  %v106 = vld [vmem:[%s3 + $0x14] sm:$0xf]
  %v107 = vld [vmem:[%s3 + $0x18] sm:$0xf]
  %v108 = vld [vmem:[%s3 + $0x1c] sm:$0xf]
  %v109 = vld [vmem:[%s4] sm:$0x1]
  %v111 = vlaneseq
  %v112 = vshrl.u32 %v111, 7
  %v113 = vsub.s32 0, %v112
  %v114 = vrot.slane %v109, %v113
  %v124 = vunpack.c.l.b16 %v101
  %v125 = vunpack.c.l.b16 %v102
  %v126 = vunpack.c.l.b16 %v103
  %v127 = vunpack.c.l.b16 %v104
  %v128 = vunpack.c.l.b16 %v105
  %v129 = vunpack.c.l.b16 %v106
  %v130 = vunpack.c.l.b16 %v107
  %v131 = vunpack.c.l.b16 %v108
  %v132 = vpack.c.b16 %v125, %v124
  %v133 = vpack.c.b16 %v127, %v126
  %v134 = vpack.c.b16 %v129, %v128
  %v135 = vpack.c.b16 %v131, %v130
  %vm140 = vcmask 523264
  %v142 = vsel %vm140, %v100, 0
  %144 = vmatprep.subr.bf16.mxu0 0
  %145 = vmatpush1.bf16.msra.mxu0 %v132
  %146 = vmatprep.subr.bf16.mxu0 0
  %147 = vmatpush1.bf16.msra.mxu0 %v133
  %148 = vmatprep.subr.bf16.mxu0 0
  %149 = vmatpush1.bf16.msra.mxu0 %v134
  %150 = vmatprep.subr.bf16.mxu0 0
  %151 = vmatpush1.bf16.msra.mxu0 %v135
  %152 = vmatprep.subr.bf16.mxu0 0
  %153 = vmatpush1.bf16.msra.mxu0 0
  %154 = vmatprep.subr.bf16.mxu0 0
  %155 = vmatpush1.bf16.msra.mxu0 0
  %156 = vmatprep.subr.bf16.mxu0 0
  %157 = vmatpush1.bf16.msra.mxu0 0
  %158 = vmatprep.subr.bf16.mxu0 0
  %159 = vmatpush1.bf16.msra.mxu0 0
  %160 = vmatprep.subr.bf16.mxu0 0
  %161 = vmatpush1.bf16.msra.mxu0 0
  %162 = vmatprep.subr.bf16.mxu0 0
  %163 = vmatpush1.bf16.msra.mxu0 0
  %164 = vmatprep.subr.bf16.mxu0 0
  %165 = vmatpush1.bf16.msra.mxu0 0
  %166 = vmatprep.subr.bf16.mxu0 0
  %167 = vmatpush1.bf16.msra.mxu0 0
  %168 = vmatprep.subr.bf16.mxu0 0
  %169 = vmatpush1.bf16.msra.mxu0 0
  %170 = vmatprep.subr.bf16.mxu0 0
  %171 = vmatpush1.bf16.msra.mxu0 0
  %172 = vmatprep.subr.bf16.mxu0 0
  %173 = vmatpush1.bf16.msra.mxu0 0
  %174 = vmatprep.subr.bf16.mxu0 0
  %175 = vmatpush1.bf16.msra.mxu0 0
  %176 = vmatprep.mubr.bf16.mxu0 0
  %177 = vmatmul.mubr.bf16.gmra.mrb[0].mxu0 %v142
  %v178 = vpop.f32.mrb[0].mxu0
  %v179 = vadd.f32 %v114, %v178
  %v180 = vpop.f32.mrb[0].mxu0
  %v181 = vpop.f32.mrb[0].mxu0
  %v182 = vadd.f32 %v114, %v181
  %v183 = vpop.f32.mrb[0].mxu0
  %184 = vdwg.mxu0
  %v185 = vadd.f32 %v27, %v179
  %v186 = vadd.f32 %v28, %v182
  %v187 = vld [vmem:[%s5] sm:$0x1]
  %v188 = vld [vmem:[%s6] sm:$0x1]
  %v189 = vsel %vm53, %v185, 0.0
  %190 = vadd.xlane.f32.xlu0 %v189
  %v191 = vpop.xlane.xlu0 %190
  %v192 = vsel %vm53, %v186, 0.0
  %193 = vadd.xlane.f32.xlu0 %v192
  %v194 = vpop.xlane.xlu0 %193
  %v195 = vrcp.pop 32.0
  %v196 = vmul.f32 %v191, %v195
  %v197 = vmul.f32 %v194, %v195
  %v198 = vsub.f32 %v185, %v196
  %v199 = vsub.f32 %v186, %v197
  %v200 = vmul.f32 %v198, %v198
  %v201 = vmul.f32 %v199, %v199
  %v202 = vsel %vm53, %v200, 0.0
  %203 = vadd.xlane.f32.xlu0 %v202
  %v204 = vpop.xlane.xlu0 %203
  %v205 = vsel %vm53, %v201, 0.0
  %206 = vadd.xlane.f32.xlu0 %v205
  %v207 = vpop.xlane.xlu0 %206
  %v208 = vmul.f32 %v204, %v195
  %v209 = vmul.f32 %v207, %v195
  %v210 = vadd.f32 %v208, 1e-05
  %v211 = vadd.f32 %v209, 1e-05
  %v212 = vrsqrt.pop %v210
  %v213 = vrsqrt.pop %v211
  %v214 = vmul.f32 %v198, %v212
  %v215 = vmul.f32 %v199, %v213
  %v217 = vlaneseq
  %v218 = vshrl.u32 %v217, 7
  %v219 = vsub.s32 0, %v218
  %v220 = vrot.slane %v187, %v219
  %v222 = vmul.f32 %v214, %v220
  %v223 = vmul.f32 %v215, %v220
  %v225 = vlaneseq
  %v226 = vshrl.u32 %v225, 7
  %v227 = vsub.s32 0, %v226
  %v228 = vrot.slane %v188, %v227
  %v230 = vadd.f32 %v222, %v228
  %v231 = vadd.f32 %v223, %v228
  %232 = vst.msk [vmem:[%s7] sm:$0xff] %vm53, %v230
  %233 = vst.msk [vmem:[%s7 + $0x8] sm:$0xff] %vm53, %v231
  // Predicated region
  $region30: #{image2report_forward.12} parent=0 // pred_check
    _
  $region31: #{image2report_forward.12} parent=0 // pred_check_branch
    %235 = sbr.rel (0) target = $region33
  $region32: #{image2report_forward.12} parent=0 // pred_region
    _
  $region33: #{image2report_forward.12} parent=0 // pred_fallthru
    _
  // Predicated region
  $region34: #{image2report_forward.12} parent=0 // pred_check
    _
  $region35: #{image2report_forward.12} parent=0 // pred_check_branch
    %237 = sbr.rel (0) target = $region37
  $region36: #{image2report_forward.12} parent=0 // pred_region
    _
  $region37: #{image2report_forward.12} parent=0 // pred_fallthru
    _

// kernel: image2report_forward.11
$region0: #{image2report_forward.11}
  #allocation0 [shape = 'u32[]', space=smem, size = 0x4, offset = 0x4, fixed_abs, tag = 'smem constant byte address 0x4 - core index']
  #allocation1 [shape = 'u32[144,128]{1,0:T(1,128)}', space=vmem, size = 0x12000, scoped, tag = 'internal scratch']
  %s0 = inlined_call_operand.vmem [shape: f32[2,8,32], index: 0, kind: input, shape index: {}, may-alias: {0,1}]
  %s1 = inlined_call_operand.vmem [shape: f32[2,8,32], index: 1, kind: input, shape index: {}, may-alias: {0,1}]
  %s2 = inlined_call_operand.vmem [shape: bf16[32,32], index: 2, kind: input, shape index: {}]
  %s3 = inlined_call_operand.vmem [shape: f32[1,32], index: 3, kind: input, shape index: {}]
  %s4 = inlined_call_operand.vmem [shape: bf16[32,64], index: 4, kind: input, shape index: {}]
  %s5 = inlined_call_operand.vmem [shape: f32[1,64], index: 5, kind: input, shape index: {}]
  %s6 = inlined_call_operand.vmem [shape: bf16[32,32], index: 6, kind: input, shape index: {}]
  %s7 = inlined_call_operand.vmem [shape: f32[1,32], index: 7, kind: input, shape index: {}]
  %s8 = inlined_call_operand.vmem [shape: f32[1,32], index: 8, kind: input, shape index: {}]
  %s9 = inlined_call_operand.vmem [shape: f32[1,32], index: 9, kind: input, shape index: {}]
  %s10 = inlined_call_operand.vmem [shape: f32[2,8,32], index: 10, kind: output, shape index: {}]
  %s11 = sld [smem:[#allocation0]]
  $region73: #{image2report_forward.11} parent=0
    _
  %s13 = ssub.s32 1, %s11
  %s14 = scalar_select 0, %s13, %s11
  loop: start=0, step=1, limit=4
  $region2: #{image2report_forward.11} parent=0 // loop_pre_header
    _
  $region3: #{image2report_forward.11} parent=0 // loop_header
    %s16 = sphi 0, %s20
    %p17 = scmp.ge.s32.totalorder %s16, 4
    %s23 = sphi 0, %s35
    %s24 = sphi 0, %s31
    %s25 = sphi 0, %s23
    %s26 = sphi 0, %s24
    %s27 = sphi 0, %s25
    %s28 = sphi 0, %s26
    %s40 = sphi 0, %s42
    %s43 = sphi 0, %s40
    %s44 = sphi 0, %s43
    %s60 = sphi 0, %s44
    %s66 = sphi 0, %s68
    %s69 = sphi 0, %s66
    %s70 = sphi 0, %s69
    %s86 = sphi 0, %s70
    %s90 = sphi 0, %s90
    %s92 = sphi 0, %s90
    %s93 = sphi 0, %s92
    %s107 = sphi 0, %s93
    %s111 = sphi 0, %s111
    %s113 = sphi 0, %s111
    %s114 = sphi 0, %s113
    %s128 = sphi 0, %s114
    %s132 = sphi 0, %s132
    %s134 = sphi 0, %s132
    %s135 = sphi 0, %s134
    %s149 = sphi 0, %s135
    %s153 = sphi 0, %s153
    %s155 = sphi 0, %s153
    %s156 = sphi 0, %s155
    %s170 = sphi 0, %s156
    %s174 = sphi 0, %s174
    %s176 = sphi 0, %s174
    %s177 = sphi 0, %s176
    %s191 = sphi 0, %s177
    %s195 = sphi 0, %s195
    %s197 = sphi 0, %s195
    %s198 = sphi 0, %s197
    %s212 = sphi 0, %s198
    %s216 = sphi 0, %s216
    %s218 = sphi 0, %s216
    %s219 = sphi 0, %s218
    %s233 = sphi 0, %s219
    %s237 = sphi 0, %s237
    %s239 = sphi 0, %s237
    %s240 = sphi 0, %s239
    %s254 = sphi 0, %s240
    %s262 = sphi 0, %s264
    %s265 = sphi 0, %s262
    %s266 = sphi 0, %s265
    %s282 = sphi 0, %s266
  $region4: #{image2report_forward.11} parent=0 // loop_header_branch
    %19 = sbr.rel (%p17) target = $region8
  $region5: #{image2report_forward.11} parent=0 // loop_body
    %s21 = ssub.s32 %s16, 1
    %s22 = ssub.s32 %s16, 2
    %s29 = sadd.s32 1, %s24
    %p30 = scmp.ge.s32.totalorder %s29, 1
    %s31 = scalar_select %p30, 0, %s29
    %s32 = sadd.s32 1, %s23
    %s33 = scalar_select %p30, %s32, %s23
    %p34 = scmp.ge.s32.totalorder %s33, 2
    %s35 = scalar_select %p34, 0, %s33
    %s36 = ssub.s32 %s23, %s35
    %s37 = ssub.s32 %s24, %s31
    %s38 = sor.u32 %s36, %s37
    %p39 = scmp.eq.s32.totalorder %s38, 0
    %s41 = sadd.s32 %s40, 1
    %s42 = scalar_select %p39, %s40, %s41
    %p45 = pneg %p39
    %p46 = scmp.eq.s32.totalorder %s16, 1
    %p47 = por %p45, %p46
    %p48 = scmp.ne.s32.totalorder %s40, %s43
    %p49 = scmp.eq.s32.totalorder %s16, 0
    %p50 = por %p48, %p49
    %p51 = scmp.ne.s32.totalorder %s40, %s43
    %p52 = scmp.eq.s32.totalorder %s21, 1
    %p53 = por %p51, %p52
    %p54 = scmp.ne.s32.totalorder %s43, %s44
    %p55 = scmp.eq.s32.totalorder %s21, 0
    %p56 = por %p54, %p55
    %p57 = scmp.ne.s32.totalorder %s43, %s44
    %p58 = scmp.eq.s32.totalorder %s22, 1
    %p59 = por %p57, %p58
    %p61 = scmp.ne.s32.totalorder %s44, %s60
    %p62 = scmp.eq.s32.totalorder %s22, 0
    %p63 = por %p61, %p62
    %s64 = ssub.s32 %s23, %s35
    %p65 = scmp.eq.s32.totalorder %s64, 0
    %s67 = sadd.s32 %s66, 1
    %s68 = scalar_select %p65, %s66, %s67
    %p71 = pneg %p65
    %p72 = scmp.eq.s32.totalorder %s16, 1
    %p73 = por %p71, %p72
    %p74 = scmp.ne.s32.totalorder %s66, %s69
    %p75 = scmp.eq.s32.totalorder %s16, 0
    %p76 = por %p74, %p75
    %p77 = scmp.ne.s32.totalorder %s66, %s69
    %p78 = scmp.eq.s32.totalorder %s21, 1
    %p79 = por %p77, %p78
    %p80 = scmp.ne.s32.totalorder %s69, %s70
    %p81 = scmp.eq.s32.totalorder %s21, 0
    %p82 = por %p80, %p81
    %p83 = scmp.ne.s32.totalorder %s69, %s70
    %p84 = scmp.eq.s32.totalorder %s22, 1
    %p85 = por %p83, %p84
    %p87 = scmp.ne.s32.totalorder %s70, %s86
    %p88 = scmp.eq.s32.totalorder %s22, 0
    %p89 = por %p87, %p88
    %s91 = sadd.s32 %s90, 1
    %p94 = scmp.eq.s32.totalorder %s16, 1
    %p95 = scmp.ne.s32.totalorder %s90, %s92
    %p96 = scmp.eq.s32.totalorder %s16, 0
    %p97 = por %p95, %p96
    %p98 = scmp.ne.s32.totalorder %s90, %s92
    %p99 = scmp.eq.s32.totalorder %s21, 1
    %p100 = por %p98, %p99
    %p101 = scmp.ne.s32.totalorder %s92, %s93
    %p102 = scmp.eq.s32.totalorder %s21, 0
    %p103 = por %p101, %p102
    %p104 = scmp.ne.s32.totalorder %s92, %s93
    %p105 = scmp.eq.s32.totalorder %s22, 1
    %p106 = por %p104, %p105
    %p108 = scmp.ne.s32.totalorder %s93, %s107
    %p109 = scmp.eq.s32.totalorder %s22, 0
    %p110 = por %p108, %p109
    %s112 = sadd.s32 %s111, 1
    %p115 = scmp.eq.s32.totalorder %s16, 1
    %p116 = scmp.ne.s32.totalorder %s111, %s113
    %p117 = scmp.eq.s32.totalorder %s16, 0
    %p118 = por %p116, %p117
    %p119 = scmp.ne.s32.totalorder %s111, %s113
    %p120 = scmp.eq.s32.totalorder %s21, 1
    %p121 = por %p119, %p120
    %p122 = scmp.ne.s32.totalorder %s113, %s114
    %p123 = scmp.eq.s32.totalorder %s21, 0
    %p124 = por %p122, %p123
    %p125 = scmp.ne.s32.totalorder %s113, %s114
    %p126 = scmp.eq.s32.totalorder %s22, 1
    %p127 = por %p125, %p126
    %p129 = scmp.ne.s32.totalorder %s114, %s128
    %p130 = scmp.eq.s32.totalorder %s22, 0
    %p131 = por %p129, %p130
    %s133 = sadd.s32 %s132, 1
    %p136 = scmp.eq.s32.totalorder %s16, 1
    %p137 = scmp.ne.s32.totalorder %s132, %s134
    %p138 = scmp.eq.s32.totalorder %s16, 0
    %p139 = por %p137, %p138
    %p140 = scmp.ne.s32.totalorder %s132, %s134
    %p141 = scmp.eq.s32.totalorder %s21, 1
    %p142 = por %p140, %p141
    %p143 = scmp.ne.s32.totalorder %s134, %s135
    %p144 = scmp.eq.s32.totalorder %s21, 0
    %p145 = por %p143, %p144
    %p146 = scmp.ne.s32.totalorder %s134, %s135
    %p147 = scmp.eq.s32.totalorder %s22, 1
    %p148 = por %p146, %p147
    %p150 = scmp.ne.s32.totalorder %s135, %s149
    %p151 = scmp.eq.s32.totalorder %s22, 0
    %p152 = por %p150, %p151
    %s154 = sadd.s32 %s153, 1
    %p157 = scmp.eq.s32.totalorder %s16, 1
    %p158 = scmp.ne.s32.totalorder %s153, %s155
    %p159 = scmp.eq.s32.totalorder %s16, 0
    %p160 = por %p158, %p159
    %p161 = scmp.ne.s32.totalorder %s153, %s155
    %p162 = scmp.eq.s32.totalorder %s21, 1
    %p163 = por %p161, %p162
    %p164 = scmp.ne.s32.totalorder %s155, %s156
    %p165 = scmp.eq.s32.totalorder %s21, 0
    %p166 = por %p164, %p165
    %p167 = scmp.ne.s32.totalorder %s155, %s156
    %p168 = scmp.eq.s32.totalorder %s22, 1
    %p169 = por %p167, %p168
    %p171 = scmp.ne.s32.totalorder %s156, %s170
    %p172 = scmp.eq.s32.totalorder %s22, 0
    %p173 = por %p171, %p172
    %s175 = sadd.s32 %s174, 1
    %p178 = scmp.eq.s32.totalorder %s16, 1
    %p179 = scmp.ne.s32.totalorder %s174, %s176
    %p180 = scmp.eq.s32.totalorder %s16, 0
    %p181 = por %p179, %p180
    %p182 = scmp.ne.s32.totalorder %s174, %s176
    %p183 = scmp.eq.s32.totalorder %s21, 1
    %p184 = por %p182, %p183
    %p185 = scmp.ne.s32.totalorder %s176, %s177
    %p186 = scmp.eq.s32.totalorder %s21, 0
    %p187 = por %p185, %p186
    %p188 = scmp.ne.s32.totalorder %s176, %s177
    %p189 = scmp.eq.s32.totalorder %s22, 1
    %p190 = por %p188, %p189
    %p192 = scmp.ne.s32.totalorder %s177, %s191
    %p193 = scmp.eq.s32.totalorder %s22, 0
    %p194 = por %p192, %p193
    %s196 = sadd.s32 %s195, 1
    %p199 = scmp.eq.s32.totalorder %s16, 1
    %p200 = scmp.ne.s32.totalorder %s195, %s197
    %p201 = scmp.eq.s32.totalorder %s16, 0
    %p202 = por %p200, %p201
    %p203 = scmp.ne.s32.totalorder %s195, %s197
    %p204 = scmp.eq.s32.totalorder %s21, 1
    %p205 = por %p203, %p204
    %p206 = scmp.ne.s32.totalorder %s197, %s198
    %p207 = scmp.eq.s32.totalorder %s21, 0
    %p208 = por %p206, %p207
    %p209 = scmp.ne.s32.totalorder %s197, %s198
    %p210 = scmp.eq.s32.totalorder %s22, 1
    %p211 = por %p209, %p210
    %p213 = scmp.ne.s32.totalorder %s198, %s212
    %p214 = scmp.eq.s32.totalorder %s22, 0
    %p215 = por %p213, %p214
    %s217 = sadd.s32 %s216, 1
    %p220 = scmp.eq.s32.totalorder %s16, 1
    %p221 = scmp.ne.s32.totalorder %s216, %s218
    %p222 = scmp.eq.s32.totalorder %s16, 0
    %p223 = por %p221, %p222
    %p224 = scmp.ne.s32.totalorder %s216, %s218
    %p225 = scmp.eq.s32.totalorder %s21, 1
    %p226 = por %p224, %p225
    %p227 = scmp.ne.s32.totalorder %s218, %s219
    %p228 = scmp.eq.s32.totalorder %s21, 0
    %p229 = por %p227, %p228
    %p230 = scmp.ne.s32.totalorder %s218, %s219
    %p231 = scmp.eq.s32.totalorder %s22, 1
    %p232 = por %p230, %p231
    %p234 = scmp.ne.s32.totalorder %s219, %s233
    %p235 = scmp.eq.s32.totalorder %s22, 0
    %p236 = por %p234, %p235
    %s238 = sadd.s32 %s237, 1
    %p241 = scmp.eq.s32.totalorder %s16, 1
    %p242 = scmp.ne.s32.totalorder %s237, %s239
    %p243 = scmp.eq.s32.totalorder %s16, 0
    %p244 = por %p242, %p243
    %p245 = scmp.ne.s32.totalorder %s237, %s239
    %p246 = scmp.eq.s32.totalorder %s21, 1
    %p247 = por %p245, %p246
    %p248 = scmp.ne.s32.totalorder %s239, %s240
    %p249 = scmp.eq.s32.totalorder %s21, 0
    %p250 = por %p248, %p249
    %p251 = scmp.ne.s32.totalorder %s239, %s240
    %p252 = scmp.eq.s32.totalorder %s22, 1
    %p253 = por %p251, %p252
    %p255 = scmp.ne.s32.totalorder %s240, %s254
    %p256 = scmp.eq.s32.totalorder %s22, 0
    %p257 = por %p255, %p256
    %s258 = ssub.s32 %s23, %s35
    %s259 = ssub.s32 %s24, %s31
    %s260 = sor.u32 %s258, %s259
    %p261 = scmp.eq.s32.totalorder %s260, 0
    %s263 = sadd.s32 %s262, 1
    %s264 = scalar_select %p261, %s262, %s263
    %p267 = pneg %p261
    %p268 = scmp.eq.s32.totalorder %s16, 1
    %p269 = por %p267, %p268
    %p270 = scmp.ne.s32.totalorder %s262, %s265
    %p271 = scmp.eq.s32.totalorder %s16, 0
    %p272 = por %p270, %p271
    %p273 = scmp.ne.s32.totalorder %s262, %s265
    %p274 = scmp.eq.s32.totalorder %s21, 1
    %p275 = por %p273, %p274
    %p276 = scmp.ne.s32.totalorder %s265, %s266
    %p277 = scmp.eq.s32.totalorder %s21, 0
    %p278 = por %p276, %p277
    %p279 = scmp.ne.s32.totalorder %s265, %s266
    %p280 = scmp.eq.s32.totalorder %s22, 1
    %p281 = por %p279, %p280
    %p283 = scmp.ne.s32.totalorder %s266, %s282
    %p284 = scmp.eq.s32.totalorder %s22, 0
    %p285 = por %p283, %p284
    %p286 = scmp.le.s32.totalorder 1, %s16
    %p287 = scmp.lt.s32.totalorder %s16, 3
    %p288 = pnand %p286, %p287
    %p289 = pneg %p288
    // Predicated region
    $region9: #{image2report_forward.11} parent=5 // pred_check
      _
    $region10: #{image2report_forward.11} parent=5 // pred_check_branch
      %291 = sbr.rel (%p288) target = $region12
    $region11: #{image2report_forward.11} parent=5 // pred_region
      %s292 = ssub.s32 %s16, 1
      // Predicated region
      $region13: #{image2report_forward.11} parent=11 // pred_check
        %p293 = pneg %p103
      $region14: #{image2report_forward.11} parent=11 // pred_check_branch
        %295 = sbr.rel (%p293) target = $region16
      $region15: #{image2report_forward.11} parent=11 // pred_region
        _
      $region16: #{image2report_forward.11} parent=11 // pred_fallthru
        _
      // Predicated region
      $region17: #{image2report_forward.11} parent=11 // pred_check
        %p296 = pneg %p124
      $region18: #{image2report_forward.11} parent=11 // pred_check_branch
        %298 = sbr.rel (%p296) target = $region20
      $region19: #{image2report_forward.11} parent=11 // pred_region
        _
      $region20: #{image2report_forward.11} parent=11 // pred_fallthru
        _
      // Predicated region
      $region21: #{image2report_forward.11} parent=11 // pred_check
        %p299 = pneg %p145
      $region22: #{image2report_forward.11} parent=11 // pred_check_branch
        %301 = sbr.rel (%p299) target = $region24
      $region23: #{image2report_forward.11} parent=11 // pred_region
        _
      $region24: #{image2report_forward.11} parent=11 // pred_fallthru
        _
      // Predicated region
      $region25: #{image2report_forward.11} parent=11 // pred_check
        %p302 = pneg %p166
      $region26: #{image2report_forward.11} parent=11 // pred_check_branch
        %304 = sbr.rel (%p302) target = $region28
      $region27: #{image2report_forward.11} parent=11 // pred_region
        _
      $region28: #{image2report_forward.11} parent=11 // pred_fallthru
        _
      // Predicated region
      $region29: #{image2report_forward.11} parent=11 // pred_check
        %p305 = pneg %p187
      $region30: #{image2report_forward.11} parent=11 // pred_check_branch
        %307 = sbr.rel (%p305) target = $region32
      $region31: #{image2report_forward.11} parent=11 // pred_region
        _
      $region32: #{image2report_forward.11} parent=11 // pred_fallthru
        _
      // Predicated region
      $region33: #{image2report_forward.11} parent=11 // pred_check
        %p308 = pneg %p208
      $region34: #{image2report_forward.11} parent=11 // pred_check_branch
        %310 = sbr.rel (%p308) target = $region36
      $region35: #{image2report_forward.11} parent=11 // pred_region
        _
      $region36: #{image2report_forward.11} parent=11 // pred_fallthru
        _
      // Predicated region
      $region37: #{image2report_forward.11} parent=11 // pred_check
        %p311 = pneg %p229
      $region38: #{image2report_forward.11} parent=11 // pred_check_branch
        %313 = sbr.rel (%p311) target = $region40
      $region39: #{image2report_forward.11} parent=11 // pred_region
        _
      $region40: #{image2report_forward.11} parent=11 // pred_fallthru
        _
      // Predicated region
      $region41: #{image2report_forward.11} parent=11 // pred_check
        %p314 = pneg %p250
      $region42: #{image2report_forward.11} parent=11 // pred_check_branch
        %316 = sbr.rel (%p314) target = $region44
      $region43: #{image2report_forward.11} parent=11 // pred_region
        _
      $region44: #{image2report_forward.11} parent=11 // pred_fallthru
        _
    $region12: #{image2report_forward.11} parent=5 // pred_fallthru
      _
    %p317 = scmp.lt.s32.totalorder %s16, 2
    // Predicated region
    $region45: #{image2report_forward.11} parent=5 // pred_check
      %p318 = pneg %p317
    $region46: #{image2report_forward.11} parent=5 // pred_check_branch
      %320 = sbr.rel (%p318) target = $region48
    $region47: #{image2report_forward.11} parent=5 // pred_region
      // Predicated region
      $region49: #{image2report_forward.11} parent=47 // pred_check
        %p321 = pneg %p50
      $region50: #{image2report_forward.11} parent=47 // pred_check_branch
        %323 = sbr.rel (%p321) target = $region52
      $region51: #{image2report_forward.11} parent=47 // pred_region
        %p324 = scmp.lt.s32.totalorder %s23, 1
        %s325 = scalar_select %p324, %s23, 1
        %p326 = scmp.lt.s32.totalorder %s24, 0
        %s327 = scalar_select %p326, %s24, 0
        %s328 = sadd.s32 %s327, %s325
        %s329 = smul.addr %s328, 8
        %s330 = scalar_lea.vmem %s0, %s329
      $region52: #{image2report_forward.11} parent=47 // pred_fallthru
        _
      // Predicated region
      $region53: #{image2report_forward.11} parent=47 // pred_check
        %p331 = pneg %p76
      $region54: #{image2report_forward.11} parent=47 // pred_check_branch
        %333 = sbr.rel (%p331) target = $region56
      $region55: #{image2report_forward.11} parent=47 // pred_region
        %p334 = scmp.lt.s32.totalorder %s23, 1
        %s335 = scalar_select %p334, %s23, 1
        %s336 = smul.addr %s335, 8
        %s337 = scalar_lea.vmem %s1, %s336
      $region56: #{image2report_forward.11} parent=47 // pred_fallthru
        _
    $region48: #{image2report_forward.11} parent=5 // pred_fallthru
      _
    %p338 = scmp.le.s32.totalorder 1, %s16
    %p339 = scmp.lt.s32.totalorder %s16, 3
    %p340 = pnand %p338, %p339
    %p341 = pneg %p340
    // Predicated region
    $region57: #{image2report_forward.11} parent=5 // pred_check
      _
    $region58: #{image2report_forward.11} parent=5 // pred_check_branch
      %343 = sbr.rel (%p340) target = $region60
    $region59: #{image2report_forward.11} parent=5 // pred_region
      %s344 = ssub.s32 %s16, 1
      %p345 = scmp.lt.s32.totalorder %s25, 1
      %s346 = scalar_select %p345, %s25, 1
      %p347 = scmp.lt.s32.totalorder %s26, 0
      %s348 = scalar_select %p347, %s26, 0
      %s349 = sadd.s32 %s348, %s346
      %s350 = smul.addr %s349, 8
      %s351 = scalar_lea.vmem %s0, %s350
      %p352 = pneg %p56
      %p353 = pneg %p53
      %p354 = scmp.lt.s32.totalorder %s25, 1
      %s355 = scalar_select %p354, %s25, 1
      %s356 = smul.addr %s355, 8
      %s357 = scalar_lea.vmem %s1, %s356
      %p358 = pneg %p82
      %p359 = pneg %p79
      %p360 = pneg %p103
      %p361 = pneg %p100
      %p362 = pneg %p124
      %p363 = pneg %p121
      %p364 = pneg %p145
      %p365 = pneg %p142
      %p366 = pneg %p166
      %p367 = pneg %p163
      %p368 = pneg %p187
      %p369 = pneg %p184
      %p370 = pneg %p208
      %p371 = pneg %p205
      %p372 = pneg %p229
      %p373 = pneg %p226
      %p374 = pneg %p250
      %p375 = pneg %p247
      %p376 = pneg %p278
      %p377 = pneg %p275
      %p378 = scmp.lt.s32.totalorder %s25, 1
      %s379 = scalar_select %p378, %s25, 1
      %p380 = scmp.lt.s32.totalorder %s26, 0
      %s381 = scalar_select %p380, %s26, 0
      %s382 = sadd.s32 %s381, %s379
      %s383 = smul.addr %s382, 8
      %s384 = scalar_lea.vmem %s10, %s383
      %p385 = scmp.lt.s32.totalorder %s25, 1
      %s386 = scalar_select %p385, %s25, 1
      %p387 = scmp.lt.s32.totalorder %s26, 0
      %s388 = scalar_select %p387, %s26, 0
      %s389 = sadd.s32 %s388, %s386
      %s390 = smul.addr %s389, 8
      %s391 = scalar_lea.vmem %s0, %s390
      %p392 = scmp.lt.s32.totalorder %s25, 1
      %s393 = scalar_select %p392, %s25, 1
      %s394 = smul.addr %s393, 8
      %s395 = scalar_lea.vmem %s1, %s394
      %p396 = scmp.lt.s32.totalorder %s25, 1
      %s397 = scalar_select %p396, %s25, 1
      %p398 = scmp.lt.s32.totalorder %s26, 0
      %s399 = scalar_select %p398, %s26, 0
      %s400 = sadd.s32 %s399, %s397
      %s401 = smul.addr %s400, 8
      %s402 = scalar_lea.vmem %s10, %s401
      %v404 = vld [vmem:[%s391] sm:$0xff]
      %v405 = vpack.c.bf16 %v404, %v404
      %v406 = vld [vmem:[%s2] sm:$0xf]
      %v407 = vld [vmem:[%s2 + $0x4] sm:$0xf]
      %v408 = vld [vmem:[%s2 + $0x8] sm:$0xf]
      %v409 = vld [vmem:[%s2 + $0xc] sm:$0xf]
      %v410 = vld [vmem:[%s3] sm:$0x1]
      %v412 = vlaneseq
      %v413 = vshrl.u32 %v412, 7
      %v414 = vsub.s32 0, %v413
      %v415 = vrot.slane %v410, %v414
      %v421 = vunpack.c.l.b16 %v406
      %v422 = vunpack.c.l.b16 %v407
      %v423 = vunpack.c.l.b16 %v408
      %v424 = vunpack.c.l.b16 %v409
      %v425 = vpack.c.b16 %v422, %v421
      %v426 = vpack.c.b16 %v424, %v423
      %vm429 = vcmask 261120
      %v431 = vsel %vm429, %v405, 0
      %433 = vmatprep.subr.bf16.mxu0 0
      %434 = vmatpush1.bf16.msra.mxu0 %v425
      %435 = vmatprep.subr.bf16.mxu0 0
      %436 = vmatpush1.bf16.msra.mxu0 %v426
      %437 = vmatprep.subr.bf16.mxu0 0
      %438 = vmatpush1.bf16.msra.mxu0 0
      %439 = vmatprep.subr.bf16.mxu0 0
      %440 = vmatpush1.bf16.msra.mxu0 0
      %441 = vmatprep.subr.bf16.mxu0 0
      %442 = vmatpush1.bf16.msra.mxu0 0
      %443 = vmatprep.subr.bf16.mxu0 0
      %444 = vmatpush1.bf16.msra.mxu0 0
      %445 = vmatprep.subr.bf16.mxu0 0
      %446 = vmatpush1.bf16.msra.mxu0 0
      %447 = vmatprep.subr.bf16.mxu0 0
      %448 = vmatpush1.bf16.msra.mxu0 0
      %449 = vmatprep.subr.bf16.mxu0 0
      %450 = vmatpush1.bf16.msra.mxu0 0
      %451 = vmatprep.subr.bf16.mxu0 0
      %452 = vmatpush1.bf16.msra.mxu0 0
      %453 = vmatprep.subr.bf16.mxu0 0
      %454 = vmatpush1.bf16.msra.mxu0 0
      %455 = vmatprep.subr.bf16.mxu0 0
      %456 = vmatpush1.bf16.msra.mxu0 0
      %457 = vmatprep.subr.bf16.mxu0 0
      %458 = vmatpush1.bf16.msra.mxu0 0
      %459 = vmatprep.subr.bf16.mxu0 0
      %460 = vmatpush1.bf16.msra.mxu0 0
      %461 = vmatprep.subr.bf16.mxu0 0
      %462 = vmatpush1.bf16.msra.mxu0 0
      %463 = vmatprep.subr.bf16.mxu0 0
      %464 = vmatpush1.bf16.msra.mxu0 0
      %465 = vmatprep.mubr.bf16.mxu0 0
      %466 = vmatmul.mubr.bf16.gmra.mrb[0].mxu0 %v431
      %v467 = vpop.f32.mrb[0].mxu0
      %v468 = vadd.f32 %v415, %v467
      %v469 = vpop.f32.mrb[0].mxu0
      %v470 = vpop.f32.mrb[0].mxu0
      %v471 = vpop.f32.mrb[0].mxu0
      %472 = vdwg.mxu0
      %v473 = vpack.c.bf16 %v468, %v468
      %v474 = vld [vmem:[%s395] sm:$0xff]
      %v475 = vpack.c.bf16 %v474, %v474
      %v476 = vld [vmem:[%s4] sm:$0xf]
      %v477 = vld [vmem:[%s4 + $0x4] sm:$0xf]
      %v478 = vld [vmem:[%s4 + $0x8] sm:$0xf]
      %v479 = vld [vmem:[%s4 + $0xc] sm:$0xf]
      %v480 = vld [vmem:[%s5] sm:$0x1]
      %v482 = vlaneseq
      %v483 = vshrl.u32 %v482, 7
      %v484 = vsub.s32 0, %v483
      %v485 = vrot.slane %v480, %v484
      %v491 = vunpack.c.l.b16 %v476
      %v492 = vunpack.c.l.b16 %v477
      %v493 = vunpack.c.l.b16 %v478
      %v494 = vunpack.c.l.b16 %v479
      %v495 = vpack.c.b16 %v492, %v491
      %v496 = vpack.c.b16 %v494, %v493
      %v500 = vsel %vm429, %v475, 0
      %502 = vmatprep.subr.bf16.mxu0 0
      %503 = vmatpush1.bf16.msra.mxu0 %v495
      %504 = vmatprep.subr.bf16.mxu0 0
      %505 = vmatpush1.bf16.msra.mxu0 %v496
      %506 = vmatprep.subr.bf16.mxu0 0
      %507 = vmatpush1.bf16.msra.mxu0 0
      %508 = vmatprep.subr.bf16.mxu0 0
      %509 = vmatpush1.bf16.msra.mxu0 0
      %510 = vmatprep.subr.bf16.mxu0 0
      %511 = vmatpush1.bf16.msra.mxu0 0
      %512 = vmatprep.subr.bf16.mxu0 0
      %513 = vmatpush1.bf16.msra.mxu0 0
      %514 = vmatprep.subr.bf16.mxu0 0
      %515 = vmatpush1.bf16.msra.mxu0 0
      %516 = vmatprep.subr.bf16.mxu0 0
      %517 = vmatpush1.bf16.msra.mxu0 0
      %518 = vmatprep.subr.bf16.mxu0 0
      %519 = vmatpush1.bf16.msra.mxu0 0
      %520 = vmatprep.subr.bf16.mxu0 0
      %521 = vmatpush1.bf16.msra.mxu0 0
      %522 = vmatprep.subr.bf16.mxu0 0
      %523 = vmatpush1.bf16.msra.mxu0 0
      %524 = vmatprep.subr.bf16.mxu0 0
      %525 = vmatpush1.bf16.msra.mxu0 0
      %526 = vmatprep.subr.bf16.mxu0 0
      %527 = vmatpush1.bf16.msra.mxu0 0
      %528 = vmatprep.subr.bf16.mxu0 0
      %529 = vmatpush1.bf16.msra.mxu0 0
      %530 = vmatprep.subr.bf16.mxu0 0
      %531 = vmatpush1.bf16.msra.mxu0 0
      %532 = vmatprep.subr.bf16.mxu0 0
      %533 = vmatpush1.bf16.msra.mxu0 0
      %534 = vmatprep.mubr.bf16.mxu0 0
      %535 = vmatmul.mubr.bf16.gmra.mrb[0].mxu0 %v500
      %v536 = vpop.f32.mrb[0].mxu0
      %v537 = vadd.f32 %v485, %v536
      %v538 = vpop.f32.mrb[0].mxu0
      %v539 = vpop.f32.mrb[0].mxu0
      %v540 = vpop.f32.mrb[0].mxu0
      %541 = vdwg.mxu0
      %v542 = vpack.c.bf16 %v537, %v537
      %v543 = vld [vmem:[%s6] sm:$0xf]
      %v544 = vld [vmem:[%s6 + $0x4] sm:$0xf]
      %v545 = vld [vmem:[%s6 + $0x8] sm:$0xf]
      %v546 = vld [vmem:[%s6 + $0xc] sm:$0xf]
      %vm547 = vcmask 31744
      %v549 = vsel %vm547, %v473, 0
      %v552 = vsel %vm547, %v542, 0
      %554 = vmatprep.subr.bf16.mxu0 0
      %555 = vmatpush1.bf16.xpose.msra.mxu0 %v552
      %556 = vmatprep.subr.bf16.mxu0 0
      %557 = vmatpush1.bf16.xpose.msra.mxu0 0
      %558 = vmatprep.subr.bf16.mxu0 0
      %559 = vmatpush1.bf16.xpose.msra.mxu0 0
      %560 = vmatprep.subr.bf16.mxu0 0
      %561 = vmatpush1.bf16.xpose.msra.mxu0 0
      %562 = vmatprep.subr.bf16.mxu0 0
      %563 = vmatpush1.bf16.xpose.msra.mxu0 0
      %564 = vmatprep.subr.bf16.mxu0 0
      %565 = vmatpush1.bf16.xpose.msra.mxu0 0
      %566 = vmatprep.subr.bf16.mxu0 0
      %567 = vmatpush1.bf16.xpose.msra.mxu0 0
      %568 = vmatprep.subr.bf16.mxu0 0
      %569 = vmatpush1.bf16.xpose.msra.mxu0 0
      %570 = vmatprep.subr.bf16.mxu0 0
      %571 = vmatpush1.bf16.xpose.msra.mxu0 0
      %572 = vmatprep.subr.bf16.mxu0 0
      %573 = vmatpush1.bf16.xpose.msra.mxu0 0
      %574 = vmatprep.subr.bf16.mxu0 0
      %575 = vmatpush1.bf16.xpose.msra.mxu0 0
      %576 = vmatprep.subr.bf16.mxu0 0
      %577 = vmatpush1.bf16.xpose.msra.mxu0 0
      %578 = vmatprep.subr.bf16.mxu0 0
      %579 = vmatpush1.bf16.xpose.msra.mxu0 0
      %580 = vmatprep.subr.bf16.mxu0 0
      %581 = vmatpush1.bf16.xpose.msra.mxu0 0
      %582 = vmatprep.subr.bf16.mxu0 0
      %583 = vmatpush1.bf16.xpose.msra.mxu0 0
      %584 = vmatprep.subr.bf16.mxu0 0
      %585 = vmatpush1.bf16.xpose.msra.mxu0 0
      %586 = vmatprep.mubr.bf16.mxu0 0
      %587 = vmatmul.mubr.bf16.gmra.mrb[0].mxu0 %v549
      %v588 = vpop.f32.mrb[0].mxu0
      %v589 = vadd.f32 0.0, %v588
      %v590 = vpop.f32.mrb[0].mxu0
      %v591 = vpop.f32.mrb[0].mxu0
      %v592 = vpop.f32.mrb[0].mxu0
      %593 = vdwg.mxu0
      %vm594 = vcmask 64512
      %v595 = vsel %vm594, %v589, -inf
      %596 = vmax.xlane.f32.xlu0 %v595
      %v597 = vpop.xlane.xlu0 %596
      %v598 = vsub.f32 %v589, %v597
      %v599 = vmul.f32 %v598, 1.442695
      %v600 = vpow.pop %v599
      %v601 = vsel %vm594, %v600, 0.0
      %602 = vadd.xlane.f32.xlu0 %v601
      %v603 = vpop.xlane.xlu0 %602
      %v604 = vrcp.pop %v603
      %v605 = vmul.f32 %v600, %v604
      %v606 = vpack.c.bf16 %v605, %v605
      %608 = vrot.lane.b32.xlu0 %v542, 96
      %v609 = vpop.permute.xlu0 %608
      %v611 = vsel %vm594, %v606, 0
      %vm613 = vcmask 1043456
      %v615 = vsel %vm613, %v609, 0
      %617 = vmatprep.subr.bf16.mxu0 0
      %618 = vmatpush1.bf16.msra.mxu0 %v615
      %619 = vmatprep.subr.bf16.mxu0 0
      %620 = vmatpush1.bf16.msra.mxu0 0
      %621 = vmatprep.subr.bf16.mxu0 0
      %622 = vmatpush1.bf16.msra.mxu0 0
      %623 = vmatprep.subr.bf16.mxu0 0
      %624 = vmatpush1.bf16.msra.mxu0 0
      %625 = vmatprep.subr.bf16.mxu0 0
      %626 = vmatpush1.bf16.msra.mxu0 0
      %627 = vmatprep.subr.bf16.mxu0 0
      %628 = vmatpush1.bf16.msra.mxu0 0
      %629 = vmatprep.subr.bf16.mxu0 0
      %630 = vmatpush1.bf16.msra.mxu0 0
      %631 = vmatprep.subr.bf16.mxu0 0
      %632 = vmatpush1.bf16.msra.mxu0 0
      %633 = vmatprep.subr.bf16.mxu0 0
      %634 = vmatpush1.bf16.msra.mxu0 0
      %635 = vmatprep.subr.bf16.mxu0 0
      %636 = vmatpush1.bf16.msra.mxu0 0
      %637 = vmatprep.subr.bf16.mxu0 0
      %638 = vmatpush1.bf16.msra.mxu0 0
      %639 = vmatprep.subr.bf16.mxu0 0
      %640 = vmatpush1.bf16.msra.mxu0 0
      %641 = vmatprep.subr.bf16.mxu0 0
      %642 = vmatpush1.bf16.msra.mxu0 0
      %643 = vmatprep.subr.bf16.mxu0 0
      %644 = vmatpush1.bf16.msra.mxu0 0
      %645 = vmatprep.subr.bf16.mxu0 0
      %646 = vmatpush1.bf16.msra.mxu0 0
      %647 = vmatprep.subr.bf16.mxu0 0
      %648 = vmatpush1.bf16.msra.mxu0 0
      %649 = vmatprep.mubr.bf16.mxu0 0
      %650 = vmatmul.mubr.bf16.gmra.mrb[0].mxu0 %v611
      %v651 = vpop.f32.mrb[0].mxu0
      %v652 = vadd.f32 0.0, %v651
      %v653 = vpop.f32.mrb[0].mxu0
      %v654 = vpop.f32.mrb[0].mxu0
      %v655 = vpop.f32.mrb[0].mxu0
      %656 = vdwg.mxu0
      %v657 = vpack.c.bf16 %v652, %v652
      %659 = vrot.lane.b32.xlu0 %v473, 124
      %v660 = vpop.permute.xlu0 %659
      %661 = vrot.lane.b32.xlu0 %v542, 124
      %v662 = vpop.permute.xlu0 %661
      %v664 = vsel %vm547, %v660, 0
      %v667 = vsel %vm547, %v662, 0
      %669 = vmatprep.subr.bf16.mxu0 0
      %670 = vmatpush1.bf16.xpose.msra.mxu0 %v667
      %671 = vmatprep.subr.bf16.mxu0 0
      %672 = vmatpush1.bf16.xpose.msra.mxu0 0
      %673 = vmatprep.subr.bf16.mxu0 0
      %674 = vmatpush1.bf16.xpose.msra.mxu0 0
      %675 = vmatprep.subr.bf16.mxu0 0
      %676 = vmatpush1.bf16.xpose.msra.mxu0 0
      %677 = vmatprep.subr.bf16.mxu0 0
      %678 = vmatpush1.bf16.xpose.msra.mxu0 0
      %679 = vmatprep.subr.bf16.mxu0 0
      %680 = vmatpush1.bf16.xpose.msra.mxu0 0
      %681 = vmatprep.subr.bf16.mxu0 0
      %682 = vmatpush1.bf16.xpose.msra.mxu0 0
      %683 = vmatprep.subr.bf16.mxu0 0
      %684 = vmatpush1.bf16.xpose.msra.mxu0 0
      %685 = vmatprep.subr.bf16.mxu0 0
      %686 = vmatpush1.bf16.xpose.msra.mxu0 0
      %687 = vmatprep.subr.bf16.mxu0 0
      %688 = vmatpush1.bf16.xpose.msra.mxu0 0
      %689 = vmatprep.subr.bf16.mxu0 0
      %690 = vmatpush1.bf16.xpose.msra.mxu0 0
      %691 = vmatprep.subr.bf16.mxu0 0
      %692 = vmatpush1.bf16.xpose.msra.mxu0 0
      %693 = vmatprep.subr.bf16.mxu0 0
      %694 = vmatpush1.bf16.xpose.msra.mxu0 0
      %695 = vmatprep.subr.bf16.mxu0 0
      %696 = vmatpush1.bf16.xpose.msra.mxu0 0
      %697 = vmatprep.subr.bf16.mxu0 0
      %698 = vmatpush1.bf16.xpose.msra.mxu0 0
      %699 = vmatprep.subr.bf16.mxu0 0
      %700 = vmatpush1.bf16.xpose.msra.mxu0 0
      %701 = vmatprep.mubr.bf16.mxu0 0
      %702 = vmatmul.mubr.bf16.gmra.mrb[0].mxu0 %v664
      %v703 = vpop.f32.mrb[0].mxu0
      %v704 = vadd.f32 0.0, %v703
      %v705 = vpop.f32.mrb[0].mxu0
      %v706 = vpop.f32.mrb[0].mxu0
      %v707 = vpop.f32.mrb[0].mxu0
      %708 = vdwg.mxu0
      %v709 = vsel %vm594, %v704, -inf
      %710 = vmax.xlane.f32.xlu0 %v709
      %v711 = vpop.xlane.xlu0 %710
      %v712 = vsub.f32 %v704, %v711
      %v713 = vmul.f32 %v712, 1.442695
      %v714 = vpow.pop %v713
      %v715 = vsel %vm594, %v714, 0.0
      %716 = vadd.xlane.f32.xlu0 %v715
      %v717 = vpop.xlane.xlu0 %716
      %v718 = vrcp.pop %v717
      %v719 = vmul.f32 %v714, %v718
      %v720 = vpack.c.bf16 %v719, %v719
      %721 = vrot.lane.b32.xlu0 %v542, 92
      %v722 = vpop.permute.xlu0 %721
      %v724 = vsel %vm594, %v720, 0
      %v727 = vsel %vm613, %v722, 0
      %729 = vmatprep.subr.bf16.mxu0 0
      %730 = vmatpush1.bf16.msra.mxu0 %v727
      %731 = vmatprep.subr.bf16.mxu0 0
      %732 = vmatpush1.bf16.msra.mxu0 0
      %733 = vmatprep.subr.bf16.mxu0 0
      %734 = vmatpush1.bf16.msra.mxu0 0
      %735 = vmatprep.subr.bf16.mxu0 0
      %736 = vmatpush1.bf16.msra.mxu0 0
      %737 = vmatprep.subr.bf16.mxu0 0
      %738 = vmatpush1.bf16.msra.mxu0 0
      %739 = vmatprep.subr.bf16.mxu0 0
      %740 = vmatpush1.bf16.msra.mxu0 0
      %741 = vmatprep.subr.bf16.mxu0 0
      %742 = vmatpush1.bf16.msra.mxu0 0
      %743 = vmatprep.subr.bf16.mxu0 0
      %744 = vmatpush1.bf16.msra.mxu0 0
      %745 = vmatprep.subr.bf16.mxu0 0
      %746 = vmatpush1.bf16.msra.mxu0 0
      %747 = vmatprep.subr.bf16.mxu0 0
      %748 = vmatpush1.bf16.msra.mxu0 0
      %749 = vmatprep.subr.bf16.mxu0 0
      %750 = vmatpush1.bf16.msra.mxu0 0
      %751 = vmatprep.subr.bf16.mxu0 0
      %752 = vmatpush1.bf16.msra.mxu0 0
      %753 = vmatprep.subr.bf16.mxu0 0
      %754 = vmatpush1.bf16.msra.mxu0 0
      %755 = vmatprep.subr.bf16.mxu0 0
      %756 = vmatpush1.bf16.msra.mxu0 0
      %757 = vmatprep.subr.bf16.mxu0 0
      %758 = vmatpush1.bf16.msra.mxu0 0
      %759 = vmatprep.subr.bf16.mxu0 0
      %760 = vmatpush1.bf16.msra.mxu0 0
      %761 = vmatprep.mubr.bf16.mxu0 0
      %762 = vmatmul.mubr.bf16.gmra.mrb[0].mxu0 %v724
      %v763 = vpop.f32.mrb[0].mxu0
      %v764 = vadd.f32 0.0, %v763
      %v765 = vpop.f32.mrb[0].mxu0
      %v766 = vpop.f32.mrb[0].mxu0
      %v767 = vpop.f32.mrb[0].mxu0
      %768 = vdwg.mxu0
      %v769 = vpack.c.bf16 %v764, %v764
      %v771 = vunpack.c.l.b16 %v543
      %v772 = vpack.c.b16 %v771, %v771
      %v773 = vrot.slane %v772, 2
      %v775 = vsel %vm547, %v769, 0
      %vm777 = vcmask 1041408
      %v779 = vsel %vm777, %v773, 0
      %781 = vmatprep.subr.bf16.mxu0 0
      %782 = vmatpush1.bf16.msra.mxu0 %v779
      %783 = vmatprep.subr.bf16.mxu0 0
      %784 = vmatpush1.bf16.msra.mxu0 0
      %785 = vmatprep.subr.bf16.mxu0 0
      %786 = vmatpush1.bf16.msra.mxu0 0
      %787 = vmatprep.subr.bf16.mxu0 0
      %788 = vmatpush1.bf16.msra.mxu0 0
      %789 = vmatprep.subr.bf16.mxu0 0
      %790 = vmatpush1.bf16.msra.mxu0 0
      %791 = vmatprep.subr.bf16.mxu0 0
      %792 = vmatpush1.bf16.msra.mxu0 0
      %793 = vmatprep.subr.bf16.mxu0 0
      %794 = vmatpush1.bf16.msra.mxu0 0
      %795 = vmatprep.subr.bf16.mxu0 0
      %796 = vmatpush1.bf16.msra.mxu0 0
      %797 = vmatprep.subr.bf16.mxu0 0
      %798 = vmatpush1.bf16.msra.mxu0 0
      %799 = vmatprep.subr.bf16.mxu0 0
      %800 = vmatpush1.bf16.msra.mxu0 0
      %801 = vmatprep.subr.bf16.mxu0 0
      %802 = vmatpush1.bf16.msra.mxu0 0
      %803 = vmatprep.subr.bf16.mxu0 0
      %804 = vmatpush1.bf16.msra.mxu0 0
      %805 = vmatprep.subr.bf16.mxu0 0
      %806 = vmatpush1.bf16.msra.mxu0 0
      %807 = vmatprep.subr.bf16.mxu0 0
      %808 = vmatpush1.bf16.msra.mxu0 0
      %809 = vmatprep.subr.bf16.mxu0 0
      %810 = vmatpush1.bf16.msra.mxu0 0
      %811 = vmatprep.subr.bf16.mxu0 0
      %812 = vmatpush1.bf16.msra.mxu0 0
      %813 = vmatprep.mubr.bf16.mxu0 0
      %814 = vmatmul.mubr.bf16.gmra.mrb[0].mxu0 %v775
      %v815 = vpop.f32.mrb[0].mxu0
      %v816 = vadd.f32 0.0, %v815
      %v817 = vpop.f32.mrb[0].mxu0
      %v818 = vpop.f32.mrb[0].mxu0
      %v819 = vpop.f32.mrb[0].mxu0
      %820 = vdwg.mxu0
      %v822 = vsel %vm547, %v657, 0
      %v825 = vsel %vm777, %v543, 0
      %827 = vmatprep.subr.bf16.mxu0 0
      %828 = vmatpush1.bf16.msra.mxu0 %v825
      %829 = vmatprep.subr.bf16.mxu0 0
      %830 = vmatpush1.bf16.msra.mxu0 0
      %831 = vmatprep.subr.bf16.mxu0 0
      %832 = vmatpush1.bf16.msra.mxu0 0
      %833 = vmatprep.subr.bf16.mxu0 0
      %834 = vmatpush1.bf16.msra.mxu0 0
      %835 = vmatprep.subr.bf16.mxu0 0
      %836 = vmatpush1.bf16.msra.mxu0 0
      %837 = vmatprep.subr.bf16.mxu0 0
      %838 = vmatpush1.bf16.msra.mxu0 0
      %839 = vmatprep.subr.bf16.mxu0 0
      %840 = vmatpush1.bf16.msra.mxu0 0
      %841 = vmatprep.subr.bf16.mxu0 0
      %842 = vmatpush1.bf16.msra.mxu0 0
      %843 = vmatprep.subr.bf16.mxu0 0
      %844 = vmatpush1.bf16.msra.mxu0 0
      %845 = vmatprep.subr.bf16.mxu0 0
      %846 = vmatpush1.bf16.msra.mxu0 0
      %847 = vmatprep.subr.bf16.mxu0 0
      %848 = vmatpush1.bf16.msra.mxu0 0
      %849 = vmatprep.subr.bf16.mxu0 0
      %850 = vmatpush1.bf16.msra.mxu0 0
      %851 = vmatprep.subr.bf16.mxu0 0
      %852 = vmatpush1.bf16.msra.mxu0 0
      %853 = vmatprep.subr.bf16.mxu0 0
      %854 = vmatpush1.bf16.msra.mxu0 0
      %855 = vmatprep.subr.bf16.mxu0 0
      %856 = vmatpush1.bf16.msra.mxu0 0
      %857 = vmatprep.subr.bf16.mxu0 0
      %858 = vmatpush1.bf16.msra.mxu0 0
      %859 = vmatprep.mubr.bf16.mxu0 0
      %860 = vmatmul.mubr.bf16.gmra.mrb[0].mxu0 %v822
      %v861 = vpop.f32.mrb[0].mxu0
      %v862 = vadd.f32 %v816, %v861
      %v863 = vpop.f32.mrb[0].mxu0
      %v864 = vpop.f32.mrb[0].mxu0
      %v865 = vpop.f32.mrb[0].mxu0
      %866 = vdwg.mxu0
      %867 = vrot.lane.b32.xlu0 %v473, 120
      %v868 = vpop.permute.xlu0 %867
      %869 = vrot.lane.b32.xlu0 %v542, 120
      %v870 = vpop.permute.xlu0 %869
      %v872 = vsel %vm547, %v868, 0
      %v875 = vsel %vm547, %v870, 0
      %877 = vmatprep.subr.bf16.mxu0 0
      %878 = vmatpush1.bf16.xpose.msra.mxu0 %v875
      %879 = vmatprep.subr.bf16.mxu0 0
      %880 = vmatpush1.bf16.xpose.msra.mxu0 0
      %881 = vmatprep.subr.bf16.mxu0 0
      %882 = vmatpush1.bf16.xpose.msra.mxu0 0
      %883 = vmatprep.subr.bf16.mxu0 0
      %884 = vmatpush1.bf16.xpose.msra.mxu0 0
      %885 = vmatprep.subr.bf16.mxu0 0
      %886 = vmatpush1.bf16.xpose.msra.mxu0 0
      %887 = vmatprep.subr.bf16.mxu0 0
      %888 = vmatpush1.bf16.xpose.msra.mxu0 0
      %889 = vmatprep.subr.bf16.mxu0 0
      %890 = vmatpush1.bf16.xpose.msra.mxu0 0
      %891 = vmatprep.subr.bf16.mxu0 0
      %892 = vmatpush1.bf16.xpose.msra.mxu0 0
      %893 = vmatprep.subr.bf16.mxu0 0
      %894 = vmatpush1.bf16.xpose.msra.mxu0 0
      %895 = vmatprep.subr.bf16.mxu0 0
      %896 = vmatpush1.bf16.xpose.msra.mxu0 0
      %897 = vmatprep.subr.bf16.mxu0 0
      %898 = vmatpush1.bf16.xpose.msra.mxu0 0
      %899 = vmatprep.subr.bf16.mxu0 0
      %900 = vmatpush1.bf16.xpose.msra.mxu0 0
      %901 = vmatprep.subr.bf16.mxu0 0
      %902 = vmatpush1.bf16.xpose.msra.mxu0 0
      %903 = vmatprep.subr.bf16.mxu0 0
      %904 = vmatpush1.bf16.xpose.msra.mxu0 0
      %905 = vmatprep.subr.bf16.mxu0 0
      %906 = vmatpush1.bf16.xpose.msra.mxu0 0
      %907 = vmatprep.subr.bf16.mxu0 0
      %908 = vmatpush1.bf16.xpose.msra.mxu0 0
      %909 = vmatprep.mubr.bf16.mxu0 0
      %910 = vmatmul.mubr.bf16.gmra.mrb[0].mxu0 %v872
      %v911 = vpop.f32.mrb[0].mxu0
      %v912 = vadd.f32 0.0, %v911
      %v913 = vpop.f32.mrb[0].mxu0
      %v914 = vpop.f32.mrb[0].mxu0
      %v915 = vpop.f32.mrb[0].mxu0
      %916 = vdwg.mxu0
      %v917 = vsel %vm594, %v912, -inf
      %918 = vmax.xlane.f32.xlu0 %v917
      %v919 = vpop.xlane.xlu0 %918
      %v920 = vsub.f32 %v912, %v919
      %v921 = vmul.f32 %v920, 1.442695
      %v922 = vpow.pop %v921
      %v923 = vsel %vm594, %v922, 0.0
      %924 = vadd.xlane.f32.xlu0 %v923
      %v925 = vpop.xlane.xlu0 %924
      %v926 = vrcp.pop %v925
      %v927 = vmul.f32 %v922, %v926
      %v928 = vpack.c.bf16 %v927, %v927
      %929 = vrot.lane.b32.xlu0 %v542, 88
      %v930 = vpop.permute.xlu0 %929
      %v932 = vsel %vm594, %v928, 0
      %v935 = vsel %vm613, %v930, 0
      %937 = vmatprep.subr.bf16.mxu0 0
      %938 = vmatpush1.bf16.msra.mxu0 %v935
      %939 = vmatprep.subr.bf16.mxu0 0
      %940 = vmatpush1.bf16.msra.mxu0 0
      %941 = vmatprep.subr.bf16.mxu0 0
      %942 = vmatpush1.bf16.msra.mxu0 0
      %943 = vmatprep.subr.bf16.mxu0 0
      %944 = vmatpush1.bf16.msra.mxu0 0
      %945 = vmatprep.subr.bf16.mxu0 0
      %946 = vmatpush1.bf16.msra.mxu0 0
      %947 = vmatprep.subr.bf16.mxu0 0
      %948 = vmatpush1.bf16.msra.mxu0 0
      %949 = vmatprep.subr.bf16.mxu0 0
      %950 = vmatpush1.bf16.msra.mxu0 0
      %951 = vmatprep.subr.bf16.mxu0 0
      %952 = vmatpush1.bf16.msra.mxu0 0
      %953 = vmatprep.subr.bf16.mxu0 0
      %954 = vmatpush1.bf16.msra.mxu0 0
      %955 = vmatprep.subr.bf16.mxu0 0
      %956 = vmatpush1.bf16.msra.mxu0 0
      %957 = vmatprep.subr.bf16.mxu0 0
      %958 = vmatpush1.bf16.msra.mxu0 0
      %959 = vmatprep.subr.bf16.mxu0 0
      %960 = vmatpush1.bf16.msra.mxu0 0
      %961 = vmatprep.subr.bf16.mxu0 0
      %962 = vmatpush1.bf16.msra.mxu0 0
      %963 = vmatprep.subr.bf16.mxu0 0
      %964 = vmatpush1.bf16.msra.mxu0 0
      %965 = vmatprep.subr.bf16.mxu0 0
      %966 = vmatpush1.bf16.msra.mxu0 0
      %967 = vmatprep.subr.bf16.mxu0 0
      %968 = vmatpush1.bf16.msra.mxu0 0
      %969 = vmatprep.mubr.bf16.mxu0 0
      %970 = vmatmul.mubr.bf16.gmra.mrb[0].mxu0 %v932
      %v971 = vpop.f32.mrb[0].mxu0
      %v972 = vadd.f32 0.0, %v971
      %v973 = vpop.f32.mrb[0].mxu0
      %v974 = vpop.f32.mrb[0].mxu0
      %v975 = vpop.f32.mrb[0].mxu0
      %976 = vdwg.mxu0
      %v977 = vpack.c.bf16 %v972, %v972
      %v979 = vsel %vm547, %v977, 0
      %v982 = vsel %vm777, %v544, 0
      %984 = vmatprep.subr.bf16.mxu0 0
      %985 = vmatpush1.bf16.msra.mxu0 %v982
      %986 = vmatprep.subr.bf16.mxu0 0
      %987 = vmatpush1.bf16.msra.mxu0 0
      %988 = vmatprep.subr.bf16.mxu0 0
      %989 = vmatpush1.bf16.msra.mxu0 0
      %990 = vmatprep.subr.bf16.mxu0 0
      %991 = vmatpush1.bf16.msra.mxu0 0
      %992 = vmatprep.subr.bf16.mxu0 0
      %993 = vmatpush1.bf16.msra.mxu0 0
      %994 = vmatprep.subr.bf16.mxu0 0
      %995 = vmatpush1.bf16.msra.mxu0 0
      %996 = vmatprep.subr.bf16.mxu0 0
      %997 = vmatpush1.bf16.msra.mxu0 0
      %998 = vmatprep.subr.bf16.mxu0 0
      %999 = vmatpush1.bf16.msra.mxu0 0
      %1000 = vmatprep.subr.bf16.mxu0 0
      %1001 = vmatpush1.bf16.msra.mxu0 0
      %1002 = vmatprep.subr.bf16.mxu0 0
      %1003 = vmatpush1.bf16.msra.mxu0 0
      %1004 = vmatprep.subr.bf16.mxu0 0
      %1005 = vmatpush1.bf16.msra.mxu0 0
      %1006 = vmatprep.subr.bf16.mxu0 0
      %1007 = vmatpush1.bf16.msra.mxu0 0
      %1008 = vmatprep.subr.bf16.mxu0 0
      %1009 = vmatpush1.bf16.msra.mxu0 0
      %1010 = vmatprep.subr.bf16.mxu0 0
      %1011 = vmatpush1.bf16.msra.mxu0 0
      %1012 = vmatprep.subr.bf16.mxu0 0
      %1013 = vmatpush1.bf16.msra.mxu0 0
      %1014 = vmatprep.subr.bf16.mxu0 0
      %1015 = vmatpush1.bf16.msra.mxu0 0
      %1016 = vmatprep.mubr.bf16.mxu0 0
      %1017 = vmatmul.mubr.bf16.gmra.mrb[0].mxu0 %v979
      %v1018 = vpop.f32.mrb[0].mxu0
      %v1019 = vadd.f32 0.0, %v1018
      %v1020 = vpop.f32.mrb[0].mxu0
      %v1021 = vpop.f32.mrb[0].mxu0
      %v1022 = vpop.f32.mrb[0].mxu0
      %1023 = vdwg.mxu0
      %v1024 = vadd.f32 %v862, %v1019
      %1025 = vrot.lane.b32.xlu0 %v473, 116
      %v1026 = vpop.permute.xlu0 %1025
      %1027 = vrot.lane.b32.xlu0 %v542, 116
      %v1028 = vpop.permute.xlu0 %1027
      %v1030 = vsel %vm547, %v1026, 0
      %v1033 = vsel %vm547, %v1028, 0
      %1035 = vmatprep.subr.bf16.mxu0 0
      %1036 = vmatpush1.bf16.xpose.msra.mxu0 %v1033
      %1037 = vmatprep.subr.bf16.mxu0 0
      %1038 = vmatpush1.bf16.xpose.msra.mxu0 0
      %1039 = vmatprep.subr.bf16.mxu0 0
      %1040 = vmatpush1.bf16.xpose.msra.mxu0 0
      %1041 = vmatprep.subr.bf16.mxu0 0
      %1042 = vmatpush1.bf16.xpose.msra.mxu0 0
      %1043 = vmatprep.subr.bf16.mxu0 0
      %1044 = vmatpush1.bf16.xpose.msra.mxu0 0
      %1045 = vmatprep.subr.bf16.mxu0 0
      %1046 = vmatpush1.bf16.xpose.msra.mxu0 0
      %1047 = vmatprep.subr.bf16.mxu0 0
      %1048 = vmatpush1.bf16.xpose.msra.mxu0 0
      %1049 = vmatprep.subr.bf16.mxu0 0
      %1050 = vmatpush1.bf16.xpose.msra.mxu0 0
      %1051 = vmatprep.subr.bf16.mxu0 0
      %1052 = vmatpush1.bf16.xpose.msra.mxu0 0
      %1053 = vmatprep.subr.bf16.mxu0 0
      %1054 = vmatpush1.bf16.xpose.msra.mxu0 0
      %1055 = vmatprep.subr.bf16.mxu0 0
      %1056 = vmatpush1.bf16.xpose.msra.mxu0 0
      %1057 = vmatprep.subr.bf16.mxu0 0
      %1058 = vmatpush1.bf16.xpose.msra.mxu0 0
      %1059 = vmatprep.subr.bf16.mxu0 0
      %1060 = vmatpush1.bf16.xpose.msra.mxu0 0
      %1061 = vmatprep.subr.bf16.mxu0 0
      %1062 = vmatpush1.bf16.xpose.msra.mxu0 0
      %1063 = vmatprep.subr.bf16.mxu0 0
      %1064 = vmatpush1.bf16.xpose.msra.mxu0 0
      %1065 = vmatprep.subr.bf16.mxu0 0
      %1066 = vmatpush1.bf16.xpose.msra.mxu0 0
      %1067 = vmatprep.mubr.bf16.mxu0 0
      %1068 = vmatmul.mubr.bf16.gmra.mrb[0].mxu0 %v1030
      %v1069 = vpop.f32.mrb[0].mxu0
      %v1070 = vadd.f32 0.0, %v1069
      %v1071 = vpop.f32.mrb[0].mxu0
      %v1072 = vpop.f32.mrb[0].mxu0
      %v1073 = vpop.f32.mrb[0].mxu0
      %1074 = vdwg.mxu0
      %v1075 = vsel %vm594, %v1070, -inf
      %1076 = vmax.xlane.f32.xlu0 %v1075
      %v1077 = vpop.xlane.xlu0 %1076
      %v1078 = vsub.f32 %v1070, %v1077
      %v1079 = vmul.f32 %v1078, 1.442695
      %v1080 = vpow.pop %v1079
      %v1081 = vsel %vm594, %v1080, 0.0
      %1082 = vadd.xlane.f32.xlu0 %v1081
      %v1083 = vpop.xlane.xlu0 %1082
      %v1084 = vrcp.pop %v1083
      %v1085 = vmul.f32 %v1080, %v1084
      %v1086 = vpack.c.bf16 %v1085, %v1085
      %1087 = vrot.lane.b32.xlu0 %v542, 84
      %v1088 = vpop.permute.xlu0 %1087
      %v1090 = vsel %vm594, %v1086, 0
      %v1093 = vsel %vm613, %v1088, 0
      %1095 = vmatprep.subr.bf16.mxu0 0
      %1096 = vmatpush1.bf16.msra.mxu0 %v1093
      %1097 = vmatprep.subr.bf16.mxu0 0
      %1098 = vmatpush1.bf16.msra.mxu0 0
      %1099 = vmatprep.subr.bf16.mxu0 0
      %1100 = vmatpush1.bf16.msra.mxu0 0
      %1101 = vmatprep.subr.bf16.mxu0 0
      %1102 = vmatpush1.bf16.msra.mxu0 0
      %1103 = vmatprep.subr.bf16.mxu0 0
      %1104 = vmatpush1.bf16.msra.mxu0 0
      %1105 = vmatprep.subr.bf16.mxu0 0
      %1106 = vmatpush1.bf16.msra.mxu0 0
      %1107 = vmatprep.subr.bf16.mxu0 0
      %1108 = vmatpush1.bf16.msra.mxu0 0
      %1109 = vmatprep.subr.bf16.mxu0 0
      %1110 = vmatpush1.bf16.msra.mxu0 0
      %1111 = vmatprep.subr.bf16.mxu0 0
      %1112 = vmatpush1.bf16.msra.mxu0 0
      %1113 = vmatprep.subr.bf16.mxu0 0
      %1114 = vmatpush1.bf16.msra.mxu0 0
      %1115 = vmatprep.subr.bf16.mxu0 0
      %1116 = vmatpush1.bf16.msra.mxu0 0
      %1117 = vmatprep.subr.bf16.mxu0 0
      %1118 = vmatpush1.bf16.msra.mxu0 0
      %1119 = vmatprep.subr.bf16.mxu0 0
      %1120 = vmatpush1.bf16.msra.mxu0 0
      %1121 = vmatprep.subr.bf16.mxu0 0
      %1122 = vmatpush1.bf16.msra.mxu0 0
      %1123 = vmatprep.subr.bf16.mxu0 0
      %1124 = vmatpush1.bf16.msra.mxu0 0
      %1125 = vmatprep.subr.bf16.mxu0 0
      %1126 = vmatpush1.bf16.msra.mxu0 0
      %1127 = vmatprep.mubr.bf16.mxu0 0
      %1128 = vmatmul.mubr.bf16.gmra.mrb[0].mxu0 %v1090
      %v1129 = vpop.f32.mrb[0].mxu0
      %v1130 = vadd.f32 0.0, %v1129
      %v1131 = vpop.f32.mrb[0].mxu0
      %v1132 = vpop.f32.mrb[0].mxu0
      %v1133 = vpop.f32.mrb[0].mxu0
      %1134 = vdwg.mxu0
      %v1135 = vpack.c.bf16 %v1130, %v1130
      %v1137 = vunpack.c.l.b16 %v544
      %v1138 = vpack.c.b16 %v1137, %v1137
      %v1139 = vrot.slane %v1138, 2
      %v1141 = vsel %vm547, %v1135, 0
      %v1144 = vsel %vm777, %v1139, 0
      %1146 = vmatprep.subr.bf16.mxu0 0
      %1147 = vmatpush1.bf16.msra.mxu0 %v1144
      %1148 = vmatprep.subr.bf16.mxu0 0
      %1149 = vmatpush1.bf16.msra.mxu0 0
      %1150 = vmatprep.subr.bf16.mxu0 0
      %1151 = vmatpush1.bf16.msra.mxu0 0
      %1152 = vmatprep.subr.bf16.mxu0 0
      %1153 = vmatpush1.bf16.msra.mxu0 0
      %1154 = vmatprep.subr.bf16.mxu0 0
      %1155 = vmatpush1.bf16.msra.mxu0 0
      %1156 = vmatprep.subr.bf16.mxu0 0
      %1157 = vmatpush1.bf16.msra.mxu0 0
      %1158 = vmatprep.subr.bf16.mxu0 0
      %1159 = vmatpush1.bf16.msra.mxu0 0
      %1160 = vmatprep.subr.bf16.mxu0 0
      %1161 = vmatpush1.bf16.msra.mxu0 0
      %1162 = vmatprep.subr.bf16.mxu0 0
      %1163 = vmatpush1.bf16.msra.mxu0 0
      %1164 = vmatprep.subr.bf16.mxu0 0
      %1165 = vmatpush1.bf16.msra.mxu0 0
      %1166 = vmatprep.subr.bf16.mxu0 0
      %1167 = vmatpush1.bf16.msra.mxu0 0
      %1168 = vmatprep.subr.bf16.mxu0 0
      %1169 = vmatpush1.bf16.msra.mxu0 0
      %1170 = vmatprep.subr.bf16.mxu0 0
      %1171 = vmatpush1.bf16.msra.mxu0 0
      %1172 = vmatprep.subr.bf16.mxu0 0
      %1173 = vmatpush1.bf16.msra.mxu0 0
      %1174 = vmatprep.subr.bf16.mxu0 0
      %1175 = vmatpush1.bf16.msra.mxu0 0
      %1176 = vmatprep.subr.bf16.mxu0 0
      %1177 = vmatpush1.bf16.msra.mxu0 0
      %1178 = vmatprep.mubr.bf16.mxu0 0
      %1179 = vmatmul.mubr.bf16.gmra.mrb[0].mxu0 %v1141
      %v1180 = vpop.f32.mrb[0].mxu0
      %v1181 = vadd.f32 0.0, %v1180
      %v1182 = vpop.f32.mrb[0].mxu0
      %v1183 = vpop.f32.mrb[0].mxu0
      %v1184 = vpop.f32.mrb[0].mxu0
      %1185 = vdwg.mxu0
      %v1186 = vadd.f32 %v1024, %v1181
      %1187 = vrot.lane.b32.xlu0 %v473, 112
      %v1188 = vpop.permute.xlu0 %1187
      %1189 = vrot.lane.b32.xlu0 %v542, 112
      %v1190 = vpop.permute.xlu0 %1189
      %v1192 = vsel %vm547, %v1188, 0
      %v1195 = vsel %vm547, %v1190, 0
      %1197 = vmatprep.subr.bf16.mxu0 0
      %1198 = vmatpush1.bf16.xpose.msra.mxu0 %v1195
      %1199 = vmatprep.subr.bf16.mxu0 0
      %1200 = vmatpush1.bf16.xpose.msra.mxu0 0
      %1201 = vmatprep.subr.bf16.mxu0 0
      %1202 = vmatpush1.bf16.xpose.msra.mxu0 0
      %1203 = vmatprep.subr.bf16.mxu0 0
      %1204 = vmatpush1.bf16.xpose.msra.mxu0 0
      %1205 = vmatprep.subr.bf16.mxu0 0
      %1206 = vmatpush1.bf16.xpose.msra.mxu0 0
      %1207 = vmatprep.subr.bf16.mxu0 0
      %1208 = vmatpush1.bf16.xpose.msra.mxu0 0
      %1209 = vmatprep.subr.bf16.mxu0 0
      %1210 = vmatpush1.bf16.xpose.msra.mxu0 0
      %1211 = vmatprep.subr.bf16.mxu0 0
      %1212 = vmatpush1.bf16.xpose.msra.mxu0 0
      %1213 = vmatprep.subr.bf16.mxu0 0
      %1214 = vmatpush1.bf16.xpose.msra.mxu0 0
      %1215 = vmatprep.subr.bf16.mxu0 0
      %1216 = vmatpush1.bf16.xpose.msra.mxu0 0
      %1217 = vmatprep.subr.bf16.mxu0 0
      %1218 = vmatpush1.bf16.xpose.msra.mxu0 0
      %1219 = vmatprep.subr.bf16.mxu0 0
      %1220 = vmatpush1.bf16.xpose.msra.mxu0 0
      %1221 = vmatprep.subr.bf16.mxu0 0
      %1222 = vmatpush1.bf16.xpose.msra.mxu0 0
      %1223 = vmatprep.subr.bf16.mxu0 0
      %1224 = vmatpush1.bf16.xpose.msra.mxu0 0
      %1225 = vmatprep.subr.bf16.mxu0 0
      %1226 = vmatpush1.bf16.xpose.msra.mxu0 0
      %1227 = vmatprep.subr.bf16.mxu0 0
      %1228 = vmatpush1.bf16.xpose.msra.mxu0 0
      %1229 = vmatprep.mubr.bf16.mxu0 0
      %1230 = vmatmul.mubr.bf16.gmra.mrb[0].mxu0 %v1192
      %v1231 = vpop.f32.mrb[0].mxu0
      %v1232 = vadd.f32 0.0, %v1231
      %v1233 = vpop.f32.mrb[0].mxu0
      %v1234 = vpop.f32.mrb[0].mxu0
      %v1235 = vpop.f32.mrb[0].mxu0
      %1236 = vdwg.mxu0
      %v1237 = vsel %vm594, %v1232, -inf
      %1238 = vmax.xlane.f32.xlu0 %v1237
      %v1239 = vpop.xlane.xlu0 %1238
      %v1240 = vsub.f32 %v1232, %v1239
      %v1241 = vmul.f32 %v1240, 1.442695
      %v1242 = vpow.pop %v1241
      %v1243 = vsel %vm594, %v1242, 0.0
      %1244 = vadd.xlane.f32.xlu0 %v1243
      %v1245 = vpop.xlane.xlu0 %1244
      %v1246 = vrcp.pop %v1245
      %v1247 = vmul.f32 %v1242, %v1246
      %v1248 = vpack.c.bf16 %v1247, %v1247
      %1249 = vrot.lane.b32.xlu0 %v542, 80
      %v1250 = vpop.permute.xlu0 %1249
      %v1252 = vsel %vm594, %v1248, 0
      %v1255 = vsel %vm613, %v1250, 0
      %1257 = vmatprep.subr.bf16.mxu0 0
      %1258 = vmatpush1.bf16.msra.mxu0 %v1255
      %1259 = vmatprep.subr.bf16.mxu0 0
      %1260 = vmatpush1.bf16.msra.mxu0 0
      %1261 = vmatprep.subr.bf16.mxu0 0
      %1262 = vmatpush1.bf16.msra.mxu0 0
      %1263 = vmatprep.subr.bf16.mxu0 0
      %1264 = vmatpush1.bf16.msra.mxu0 0
      %1265 = vmatprep.subr.bf16.mxu0 0
      %1266 = vmatpush1.bf16.msra.mxu0 0
      %1267 = vmatprep.subr.bf16.mxu0 0
      %1268 = vmatpush1.bf16.msra.mxu0 0
      %1269 = vmatprep.subr.bf16.mxu0 0
      %1270 = vmatpush1.bf16.msra.mxu0 0
      %1271 = vmatprep.subr.bf16.mxu0 0
      %1272 = vmatpush1.bf16.msra.mxu0 0
      %1273 = vmatprep.subr.bf16.mxu0 0
      %1274 = vmatpush1.bf16.msra.mxu0 0
      %1275 = vmatprep.subr.bf16.mxu0 0
      %1276 = vmatpush1.bf16.msra.mxu0 0
      %1277 = vmatprep.subr.bf16.mxu0 0
      %1278 = vmatpush1.bf16.msra.mxu0 0
      %1279 = vmatprep.subr.bf16.mxu0 0
      %1280 = vmatpush1.bf16.msra.mxu0 0
      %1281 = vmatprep.subr.bf16.mxu0 0
      %1282 = vmatpush1.bf16.msra.mxu0 0
      %1283 = vmatprep.subr.bf16.mxu0 0
      %1284 = vmatpush1.bf16.msra.mxu0 0
      %1285 = vmatprep.subr.bf16.mxu0 0
      %1286 = vmatpush1.bf16.msra.mxu0 0
      %1287 = vmatprep.subr.bf16.mxu0 0
      %1288 = vmatpush1.bf16.msra.mxu0 0
      %1289 = vmatprep.mubr.bf16.mxu0 0
      %1290 = vmatmul.mubr.bf16.gmra.mrb[0].mxu0 %v1252
      %v1291 = vpop.f32.mrb[0].mxu0
      %v1292 = vadd.f32 0.0, %v1291
      %v1293 = vpop.f32.mrb[0].mxu0
      %v1294 = vpop.f32.mrb[0].mxu0
      %v1295 = vpop.f32.mrb[0].mxu0
      %1296 = vdwg.mxu0
      %v1297 = vpack.c.bf16 %v1292, %v1292
      %v1299 = vsel %vm547, %v1297, 0
      %v1302 = vsel %vm777, %v545, 0
      %1304 = vmatprep.subr.bf16.mxu0 0
      %1305 = vmatpush1.bf16.msra.mxu0 %v1302
      %1306 = vmatprep.subr.bf16.mxu0 0
      %1307 = vmatpush1.bf16.msra.mxu0 0
      %1308 = vmatprep.subr.bf16.mxu0 0
      %1309 = vmatpush1.bf16.msra.mxu0 0
      %1310 = vmatprep.subr.bf16.mxu0 0
      %1311 = vmatpush1.bf16.msra.mxu0 0
      %1312 = vmatprep.subr.bf16.mxu0 0
      %1313 = vmatpush1.bf16.msra.mxu0 0
      %1314 = vmatprep.subr.bf16.mxu0 0
      %1315 = vmatpush1.bf16.msra.mxu0 0
      %1316 = vmatprep.subr.bf16.mxu0 0
      %1317 = vmatpush1.bf16.msra.mxu0 0
      %1318 = vmatprep.subr.bf16.mxu0 0
      %1319 = vmatpush1.bf16.msra.mxu0 0
      %1320 = vmatprep.subr.bf16.mxu0 0
      %1321 = vmatpush1.bf16.msra.mxu0 0
      %1322 = vmatprep.subr.bf16.mxu0 0
      %1323 = vmatpush1.bf16.msra.mxu0 0
      %1324 = vmatprep.subr.bf16.mxu0 0
      %1325 = vmatpush1.bf16.msra.mxu0 0
      %1326 = vmatprep.subr.bf16.mxu0 0
      %1327 = vmatpush1.bf16.msra.mxu0 0
      %1328 = vmatprep.subr.bf16.mxu0 0
      %1329 = vmatpush1.bf16.msra.mxu0 0
      %1330 = vmatprep.subr.bf16.mxu0 0
      %1331 = vmatpush1.bf16.msra.mxu0 0
      %1332 = vmatprep.subr.bf16.mxu0 0
      %1333 = vmatpush1.bf16.msra.mxu0 0
      %1334 = vmatprep.subr.bf16.mxu0 0
      %1335 = vmatpush1.bf16.msra.mxu0 0
      %1336 = vmatprep.mubr.bf16.mxu0 0
      %1337 = vmatmul.mubr.bf16.gmra.mrb[0].mxu0 %v1299
      %v1338 = vpop.f32.mrb[0].mxu0
      %v1339 = vadd.f32 0.0, %v1338
      %v1340 = vpop.f32.mrb[0].mxu0
      %v1341 = vpop.f32.mrb[0].mxu0
      %v1342 = vpop.f32.mrb[0].mxu0
      %1343 = vdwg.mxu0
      %v1344 = vadd.f32 %v1186, %v1339
      %1345 = vrot.lane.b32.xlu0 %v473, 108
      %v1346 = vpop.permute.xlu0 %1345
      %1347 = vrot.lane.b32.xlu0 %v542, 108
      %v1348 = vpop.permute.xlu0 %1347
      %v1350 = vsel %vm547, %v1346, 0
      %v1353 = vsel %vm547, %v1348, 0
      %1355 = vmatprep.subr.bf16.mxu0 0
      %1356 = vmatpush1.bf16.xpose.msra.mxu0 %v1353
      %1357 = vmatprep.subr.bf16.mxu0 0
      %1358 = vmatpush1.bf16.xpose.msra.mxu0 0
      %1359 = vmatprep.subr.bf16.mxu0 0
      %1360 = vmatpush1.bf16.xpose.msra.mxu0 0
      %1361 = vmatprep.subr.bf16.mxu0 0
      %1362 = vmatpush1.bf16.xpose.msra.mxu0 0
      %1363 = vmatprep.subr.bf16.mxu0 0
      %1364 = vmatpush1.bf16.xpose.msra.mxu0 0
      %1365 = vmatprep.subr.bf16.mxu0 0
      %1366 = vmatpush1.bf16.xpose.msra.mxu0 0
      %1367 = vmatprep.subr.bf16.mxu0 0
      %1368 = vmatpush1.bf16.xpose.msra.mxu0 0
      %1369 = vmatprep.subr.bf16.mxu0 0
      %1370 = vmatpush1.bf16.xpose.msra.mxu0 0
      %1371 = vmatprep.subr.bf16.mxu0 0
      %1372 = vmatpush1.bf16.xpose.msra.mxu0 0
      %1373 = vmatprep.subr.bf16.mxu0 0
      %1374 = vmatpush1.bf16.xpose.msra.mxu0 0
      %1375 = vmatprep.subr.bf16.mxu0 0
      %1376 = vmatpush1.bf16.xpose.msra.mxu0 0
      %1377 = vmatprep.subr.bf16.mxu0 0
      %1378 = vmatpush1.bf16.xpose.msra.mxu0 0
      %1379 = vmatprep.subr.bf16.mxu0 0
      %1380 = vmatpush1.bf16.xpose.msra.mxu0 0
      %1381 = vmatprep.subr.bf16.mxu0 0
      %1382 = vmatpush1.bf16.xpose.msra.mxu0 0
      %1383 = vmatprep.subr.bf16.mxu0 0
      %1384 = vmatpush1.bf16.xpose.msra.mxu0 0
      %1385 = vmatprep.subr.bf16.mxu0 0
      %1386 = vmatpush1.bf16.xpose.msra.mxu0 0
      %1387 = vmatprep.mubr.bf16.mxu0 0
      %1388 = vmatmul.mubr.bf16.gmra.mrb[0].mxu0 %v1350
      %v1389 = vpop.f32.mrb[0].mxu0
      %v1390 = vadd.f32 0.0, %v1389
      %v1391 = vpop.f32.mrb[0].mxu0
      %v1392 = vpop.f32.mrb[0].mxu0
      %v1393 = vpop.f32.mrb[0].mxu0
      %1394 = vdwg.mxu0
      %v1395 = vsel %vm594, %v1390, -inf
      %1396 = vmax.xlane.f32.xlu0 %v1395
      %v1397 = vpop.xlane.xlu0 %1396
      %v1398 = vsub.f32 %v1390, %v1397
      %v1399 = vmul.f32 %v1398, 1.442695
      %v1400 = vpow.pop %v1399
      %v1401 = vsel %vm594, %v1400, 0.0
      %1402 = vadd.xlane.f32.xlu0 %v1401
      %v1403 = vpop.xlane.xlu0 %1402
      %v1404 = vrcp.pop %v1403
      %v1405 = vmul.f32 %v1400, %v1404
      %v1406 = vpack.c.bf16 %v1405, %v1405
      %1407 = vrot.lane.b32.xlu0 %v542, 76
      %v1408 = vpop.permute.xlu0 %1407
      %v1410 = vsel %vm594, %v1406, 0
      %v1413 = vsel %vm613, %v1408, 0
      %1415 = vmatprep.subr.bf16.mxu0 0
      %1416 = vmatpush1.bf16.msra.mxu0 %v1413
      %1417 = vmatprep.subr.bf16.mxu0 0
      %1418 = vmatpush1.bf16.msra.mxu0 0
      %1419 = vmatprep.subr.bf16.mxu0 0
      %1420 = vmatpush1.bf16.msra.mxu0 0
      %1421 = vmatprep.subr.bf16.mxu0 0
      %1422 = vmatpush1.bf16.msra.mxu0 0
      %1423 = vmatprep.subr.bf16.mxu0 0
      %1424 = vmatpush1.bf16.msra.mxu0 0
      %1425 = vmatprep.subr.bf16.mxu0 0
      %1426 = vmatpush1.bf16.msra.mxu0 0
      %1427 = vmatprep.subr.bf16.mxu0 0
      %1428 = vmatpush1.bf16.msra.mxu0 0
      %1429 = vmatprep.subr.bf16.mxu0 0
      %1430 = vmatpush1.bf16.msra.mxu0 0
      %1431 = vmatprep.subr.bf16.mxu0 0
      %1432 = vmatpush1.bf16.msra.mxu0 0
      %1433 = vmatprep.subr.bf16.mxu0 0
      %1434 = vmatpush1.bf16.msra.mxu0 0
      %1435 = vmatprep.subr.bf16.mxu0 0
      %1436 = vmatpush1.bf16.msra.mxu0 0
      %1437 = vmatprep.subr.bf16.mxu0 0
      %1438 = vmatpush1.bf16.msra.mxu0 0
      %1439 = vmatprep.subr.bf16.mxu0 0
      %1440 = vmatpush1.bf16.msra.mxu0 0
      %1441 = vmatprep.subr.bf16.mxu0 0
      %1442 = vmatpush1.bf16.msra.mxu0 0
      %1443 = vmatprep.subr.bf16.mxu0 0
      %1444 = vmatpush1.bf16.msra.mxu0 0
      %1445 = vmatprep.subr.bf16.mxu0 0
      %1446 = vmatpush1.bf16.msra.mxu0 0
      %1447 = vmatprep.mubr.bf16.mxu0 0
      %1448 = vmatmul.mubr.bf16.gmra.mrb[0].mxu0 %v1410
      %v1449 = vpop.f32.mrb[0].mxu0
      %v1450 = vadd.f32 0.0, %v1449
      %v1451 = vpop.f32.mrb[0].mxu0
      %v1452 = vpop.f32.mrb[0].mxu0
      %v1453 = vpop.f32.mrb[0].mxu0
      %1454 = vdwg.mxu0
      %v1455 = vpack.c.bf16 %v1450, %v1450
      %v1457 = vunpack.c.l.b16 %v545
      %v1458 = vpack.c.b16 %v1457, %v1457
      %v1459 = vrot.slane %v1458, 2
      %v1461 = vsel %vm547, %v1455, 0
      %v1464 = vsel %vm777, %v1459, 0
      %1466 = vmatprep.subr.bf16.mxu0 0
      %1467 = vmatpush1.bf16.msra.mxu0 %v1464
      %1468 = vmatprep.subr.bf16.mxu0 0
      %1469 = vmatpush1.bf16.msra.mxu0 0
      %1470 = vmatprep.subr.bf16.mxu0 0
      %1471 = vmatpush1.bf16.msra.mxu0 0
      %1472 = vmatprep.subr.bf16.mxu0 0
      %1473 = vmatpush1.bf16.msra.mxu0 0
      %1474 = vmatprep.subr.bf16.mxu0 0
      %1475 = vmatpush1.bf16.msra.mxu0 0
      %1476 = vmatprep.subr.bf16.mxu0 0
      %1477 = vmatpush1.bf16.msra.mxu0 0
      %1478 = vmatprep.subr.bf16.mxu0 0
      %1479 = vmatpush1.bf16.msra.mxu0 0
      %1480 = vmatprep.subr.bf16.mxu0 0
      %1481 = vmatpush1.bf16.msra.mxu0 0
      %1482 = vmatprep.subr.bf16.mxu0 0
      %1483 = vmatpush1.bf16.msra.mxu0 0
      %1484 = vmatprep.subr.bf16.mxu0 0
      %1485 = vmatpush1.bf16.msra.mxu0 0
      %1486 = vmatprep.subr.bf16.mxu0 0
      %1487 = vmatpush1.bf16.msra.mxu0 0
      %1488 = vmatprep.subr.bf16.mxu0 0
      %1489 = vmatpush1.bf16.msra.mxu0 0
      %1490 = vmatprep.subr.bf16.mxu0 0
      %1491 = vmatpush1.bf16.msra.mxu0 0
      %1492 = vmatprep.subr.bf16.mxu0 0
      %1493 = vmatpush1.bf16.msra.mxu0 0
      %1494 = vmatprep.subr.bf16.mxu0 0
      %1495 = vmatpush1.bf16.msra.mxu0 0
      %1496 = vmatprep.subr.bf16.mxu0 0
      %1497 = vmatpush1.bf16.msra.mxu0 0
      %1498 = vmatprep.mubr.bf16.mxu0 0
      %1499 = vmatmul.mubr.bf16.gmra.mrb[0].mxu0 %v1461
      %v1500 = vpop.f32.mrb[0].mxu0
      %v1501 = vadd.f32 0.0, %v1500
      %v1502 = vpop.f32.mrb[0].mxu0
      %v1503 = vpop.f32.mrb[0].mxu0
      %v1504 = vpop.f32.mrb[0].mxu0
      %1505 = vdwg.mxu0
      %v1506 = vadd.f32 %v1344, %v1501
      %1507 = vrot.lane.b32.xlu0 %v473, 104
      %v1508 = vpop.permute.xlu0 %1507
      %1509 = vrot.lane.b32.xlu0 %v542, 104
      %v1510 = vpop.permute.xlu0 %1509
      %v1512 = vsel %vm547, %v1508, 0
      %v1515 = vsel %vm547, %v1510, 0
      %1517 = vmatprep.subr.bf16.mxu0 0
      %1518 = vmatpush1.bf16.xpose.msra.mxu0 %v1515
      %1519 = vmatprep.subr.bf16.mxu0 0
      %1520 = vmatpush1.bf16.xpose.msra.mxu0 0
      %1521 = vmatprep.subr.bf16.mxu0 0
      %1522 = vmatpush1.bf16.xpose.msra.mxu0 0
      %1523 = vmatprep.subr.bf16.mxu0 0
      %1524 = vmatpush1.bf16.xpose.msra.mxu0 0
      %1525 = vmatprep.subr.bf16.mxu0 0
      %1526 = vmatpush1.bf16.xpose.msra.mxu0 0
      %1527 = vmatprep.subr.bf16.mxu0 0
      %1528 = vmatpush1.bf16.xpose.msra.mxu0 0
      %1529 = vmatprep.subr.bf16.mxu0 0
      %1530 = vmatpush1.bf16.xpose.msra.mxu0 0
      %1531 = vmatprep.subr.bf16.mxu0 0
      %1532 = vmatpush1.bf16.xpose.msra.mxu0 0
      %1533 = vmatprep.subr.bf16.mxu0 0
      %1534 = vmatpush1.bf16.xpose.msra.mxu0 0
      %1535 = vmatprep.subr.bf16.mxu0 0
      %1536 = vmatpush1.bf16.xpose.msra.mxu0 0
      %1537 = vmatprep.subr.bf16.mxu0 0
      %1538 = vmatpush1.bf16.xpose.msra.mxu0 0
      %1539 = vmatprep.subr.bf16.mxu0 0
      %1540 = vmatpush1.bf16.xpose.msra.mxu0 0
      %1541 = vmatprep.subr.bf16.mxu0 0
      %1542 = vmatpush1.bf16.xpose.msra.mxu0 0
      %1543 = vmatprep.subr.bf16.mxu0 0
      %1544 = vmatpush1.bf16.xpose.msra.mxu0 0
      %1545 = vmatprep.subr.bf16.mxu0 0
      %1546 = vmatpush1.bf16.xpose.msra.mxu0 0
      %1547 = vmatprep.subr.bf16.mxu0 0
      %1548 = vmatpush1.bf16.xpose.msra.mxu0 0
      %1549 = vmatprep.mubr.bf16.mxu0 0
      %1550 = vmatmul.mubr.bf16.gmra.mrb[0].mxu0 %v1512
      %v1551 = vpop.f32.mrb[0].mxu0
      %v1552 = vadd.f32 0.0, %v1551
      %v1553 = vpop.f32.mrb[0].mxu0
      %v1554 = vpop.f32.mrb[0].mxu0
      %v1555 = vpop.f32.mrb[0].mxu0
      %1556 = vdwg.mxu0
      %v1557 = vsel %vm594, %v1552, -inf
      %1558 = vmax.xlane.f32.xlu0 %v1557
      %v1559 = vpop.xlane.xlu0 %1558
      %v1560 = vsub.f32 %v1552, %v1559
      %v1561 = vmul.f32 %v1560, 1.442695
      %v1562 = vpow.pop %v1561
      %v1563 = vsel %vm594, %v1562, 0.0
      %1564 = vadd.xlane.f32.xlu0 %v1563
      %v1565 = vpop.xlane.xlu0 %1564
      %v1566 = vrcp.pop %v1565
      %v1567 = vmul.f32 %v1562, %v1566
      %v1568 = vpack.c.bf16 %v1567, %v1567
      %1569 = vrot.lane.b32.xlu0 %v542, 72
      %v1570 = vpop.permute.xlu0 %1569
      %v1572 = vsel %vm594, %v1568, 0
      %v1575 = vsel %vm613, %v1570, 0
      %1577 = vmatprep.subr.bf16.mxu0 0
      %1578 = vmatpush1.bf16.msra.mxu0 %v1575
      %1579 = vmatprep.subr.bf16.mxu0 0
      %1580 = vmatpush1.bf16.msra.mxu0 0
      %1581 = vmatprep.subr.bf16.mxu0 0
      %1582 = vmatpush1.bf16.msra.mxu0 0
      %1583 = vmatprep.subr.bf16.mxu0 0
      %1584 = vmatpush1.bf16.msra.mxu0 0
      %1585 = vmatprep.subr.bf16.mxu0 0
      %1586 = vmatpush1.bf16.msra.mxu0 0
      %1587 = vmatprep.subr.bf16.mxu0 0
      %1588 = vmatpush1.bf16.msra.mxu0 0
      %1589 = vmatprep.subr.bf16.mxu0 0
      %1590 = vmatpush1.bf16.msra.mxu0 0
      %1591 = vmatprep.subr.bf16.mxu0 0
      %1592 = vmatpush1.bf16.msra.mxu0 0
      %1593 = vmatprep.subr.bf16.mxu0 0
      %1594 = vmatpush1.bf16.msra.mxu0 0
      %1595 = vmatprep.subr.bf16.mxu0 0
      %1596 = vmatpush1.bf16.msra.mxu0 0
      %1597 = vmatprep.subr.bf16.mxu0 0
      %1598 = vmatpush1.bf16.msra.mxu0 0
      %1599 = vmatprep.subr.bf16.mxu0 0
      %1600 = vmatpush1.bf16.msra.mxu0 0
      %1601 = vmatprep.subr.bf16.mxu0 0
      %1602 = vmatpush1.bf16.msra.mxu0 0
      %1603 = vmatprep.subr.bf16.mxu0 0
      %1604 = vmatpush1.bf16.msra.mxu0 0
      %1605 = vmatprep.subr.bf16.mxu0 0
      %1606 = vmatpush1.bf16.msra.mxu0 0
      %1607 = vmatprep.subr.bf16.mxu0 0
      %1608 = vmatpush1.bf16.msra.mxu0 0
      %1609 = vmatprep.mubr.bf16.mxu0 0
      %1610 = vmatmul.mubr.bf16.gmra.mrb[0].mxu0 %v1572
      %v1611 = vpop.f32.mrb[0].mxu0
      %v1612 = vadd.f32 0.0, %v1611
      %v1613 = vpop.f32.mrb[0].mxu0
      %v1614 = vpop.f32.mrb[0].mxu0
      %v1615 = vpop.f32.mrb[0].mxu0
      %1616 = vdwg.mxu0
      %v1617 = vpack.c.bf16 %v1612, %v1612
      %v1619 = vsel %vm547, %v1617, 0
      %v1622 = vsel %vm777, %v546, 0
      %1624 = vmatprep.subr.bf16.mxu0 0
      %1625 = vmatpush1.bf16.msra.mxu0 %v1622
      %1626 = vmatprep.subr.bf16.mxu0 0
      %1627 = vmatpush1.bf16.msra.mxu0 0
      %1628 = vmatprep.subr.bf16.mxu0 0
      %1629 = vmatpush1.bf16.msra.mxu0 0
      %1630 = vmatprep.subr.bf16.mxu0 0
      %1631 = vmatpush1.bf16.msra.mxu0 0
      %1632 = vmatprep.subr.bf16.mxu0 0
      %1633 = vmatpush1.bf16.msra.mxu0 0
      %1634 = vmatprep.subr.bf16.mxu0 0
      %1635 = vmatpush1.bf16.msra.mxu0 0
      %1636 = vmatprep.subr.bf16.mxu0 0
      %1637 = vmatpush1.bf16.msra.mxu0 0
      %1638 = vmatprep.subr.bf16.mxu0 0
      %1639 = vmatpush1.bf16.msra.mxu0 0
      %1640 = vmatprep.subr.bf16.mxu0 0
      %1641 = vmatpush1.bf16.msra.mxu0 0
      %1642 = vmatprep.subr.bf16.mxu0 0
      %1643 = vmatpush1.bf16.msra.mxu0 0
      %1644 = vmatprep.subr.bf16.mxu0 0
      %1645 = vmatpush1.bf16.msra.mxu0 0
      %1646 = vmatprep.subr.bf16.mxu0 0
      %1647 = vmatpush1.bf16.msra.mxu0 0
      %1648 = vmatprep.subr.bf16.mxu0 0
      %1649 = vmatpush1.bf16.msra.mxu0 0
      %1650 = vmatprep.subr.bf16.mxu0 0
      %1651 = vmatpush1.bf16.msra.mxu0 0
      %1652 = vmatprep.subr.bf16.mxu0 0
      %1653 = vmatpush1.bf16.msra.mxu0 0
      %1654 = vmatprep.subr.bf16.mxu0 0
      %1655 = vmatpush1.bf16.msra.mxu0 0
      %1656 = vmatprep.mubr.bf16.mxu0 0
      %1657 = vmatmul.mubr.bf16.gmra.mrb[0].mxu0 %v1619
      %v1658 = vpop.f32.mrb[0].mxu0
      %v1659 = vadd.f32 0.0, %v1658
      %v1660 = vpop.f32.mrb[0].mxu0
      %v1661 = vpop.f32.mrb[0].mxu0
      %v1662 = vpop.f32.mrb[0].mxu0
      %1663 = vdwg.mxu0
      %v1664 = vadd.f32 %v1506, %v1659
      %1665 = vrot.lane.b32.xlu0 %v473, 100
      %v1666 = vpop.permute.xlu0 %1665
      %1667 = vrot.lane.b32.xlu0 %v542, 100
      %v1668 = vpop.permute.xlu0 %1667
      %v1670 = vsel %vm547, %v1666, 0
      %v1673 = vsel %vm547, %v1668, 0
      %1675 = vmatprep.subr.bf16.mxu0 0
      %1676 = vmatpush1.bf16.xpose.msra.mxu0 %v1673
      %1677 = vmatprep.subr.bf16.mxu0 0
      %1678 = vmatpush1.bf16.xpose.msra.mxu0 0
      %1679 = vmatprep.subr.bf16.mxu0 0
      %1680 = vmatpush1.bf16.xpose.msra.mxu0 0
      %1681 = vmatprep.subr.bf16.mxu0 0
      %1682 = vmatpush1.bf16.xpose.msra.mxu0 0
      %1683 = vmatprep.subr.bf16.mxu0 0
      %1684 = vmatpush1.bf16.xpose.msra.mxu0 0
      %1685 = vmatprep.subr.bf16.mxu0 0
      %1686 = vmatpush1.bf16.xpose.msra.mxu0 0
      %1687 = vmatprep.subr.bf16.mxu0 0
      %1688 = vmatpush1.bf16.xpose.msra.mxu0 0
      %1689 = vmatprep.subr.bf16.mxu0 0
      %1690 = vmatpush1.bf16.xpose.msra.mxu0 0
      %1691 = vmatprep.subr.bf16.mxu0 0
      %1692 = vmatpush1.bf16.xpose.msra.mxu0 0
      %1693 = vmatprep.subr.bf16.mxu0 0
      %1694 = vmatpush1.bf16.xpose.msra.mxu0 0
      %1695 = vmatprep.subr.bf16.mxu0 0
      %1696 = vmatpush1.bf16.xpose.msra.mxu0 0
      %1697 = vmatprep.subr.bf16.mxu0 0
      %1698 = vmatpush1.bf16.xpose.msra.mxu0 0
      %1699 = vmatprep.subr.bf16.mxu0 0
      %1700 = vmatpush1.bf16.xpose.msra.mxu0 0
      %1701 = vmatprep.subr.bf16.mxu0 0
      %1702 = vmatpush1.bf16.xpose.msra.mxu0 0
      %1703 = vmatprep.subr.bf16.mxu0 0
      %1704 = vmatpush1.bf16.xpose.msra.mxu0 0
      %1705 = vmatprep.subr.bf16.mxu0 0
      %1706 = vmatpush1.bf16.xpose.msra.mxu0 0
      %1707 = vmatprep.mubr.bf16.mxu0 0
      %1708 = vmatmul.mubr.bf16.gmra.mrb[0].mxu0 %v1670
      %v1709 = vpop.f32.mrb[0].mxu0
      %v1710 = vadd.f32 0.0, %v1709
      %v1711 = vpop.f32.mrb[0].mxu0
      %v1712 = vpop.f32.mrb[0].mxu0
      %v1713 = vpop.f32.mrb[0].mxu0
      %1714 = vdwg.mxu0
      %v1715 = vsel %vm594, %v1710, -inf
      %1716 = vmax.xlane.f32.xlu0 %v1715
      %v1717 = vpop.xlane.xlu0 %1716
      %v1718 = vsub.f32 %v1710, %v1717
      %v1719 = vmul.f32 %v1718, 1.442695
      %v1720 = vpow.pop %v1719
      %v1721 = vsel %vm594, %v1720, 0.0
      %1722 = vadd.xlane.f32.xlu0 %v1721
      %v1723 = vpop.xlane.xlu0 %1722
      %v1724 = vrcp.pop %v1723
      %v1725 = vmul.f32 %v1720, %v1724
      %v1726 = vpack.c.bf16 %v1725, %v1725
      %1727 = vrot.lane.b32.xlu0 %v542, 68
      %v1728 = vpop.permute.xlu0 %1727
      %v1730 = vsel %vm594, %v1726, 0
      %v1733 = vsel %vm613, %v1728, 0
      %1735 = vmatprep.subr.bf16.mxu0 0
      %1736 = vmatpush1.bf16.msra.mxu0 %v1733
      %1737 = vmatprep.subr.bf16.mxu0 0
      %1738 = vmatpush1.bf16.msra.mxu0 0
      %1739 = vmatprep.subr.bf16.mxu0 0
      %1740 = vmatpush1.bf16.msra.mxu0 0
      %1741 = vmatprep.subr.bf16.mxu0 0
      %1742 = vmatpush1.bf16.msra.mxu0 0
      %1743 = vmatprep.subr.bf16.mxu0 0
      %1744 = vmatpush1.bf16.msra.mxu0 0
      %1745 = vmatprep.subr.bf16.mxu0 0
      %1746 = vmatpush1.bf16.msra.mxu0 0
      %1747 = vmatprep.subr.bf16.mxu0 0
      %1748 = vmatpush1.bf16.msra.mxu0 0
      %1749 = vmatprep.subr.bf16.mxu0 0
      %1750 = vmatpush1.bf16.msra.mxu0 0
      %1751 = vmatprep.subr.bf16.mxu0 0
      %1752 = vmatpush1.bf16.msra.mxu0 0
      %1753 = vmatprep.subr.bf16.mxu0 0
      %1754 = vmatpush1.bf16.msra.mxu0 0
      %1755 = vmatprep.subr.bf16.mxu0 0
      %1756 = vmatpush1.bf16.msra.mxu0 0
      %1757 = vmatprep.subr.bf16.mxu0 0
      %1758 = vmatpush1.bf16.msra.mxu0 0
      %1759 = vmatprep.subr.bf16.mxu0 0
      %1760 = vmatpush1.bf16.msra.mxu0 0
      %1761 = vmatprep.subr.bf16.mxu0 0
      %1762 = vmatpush1.bf16.msra.mxu0 0
      %1763 = vmatprep.subr.bf16.mxu0 0
      %1764 = vmatpush1.bf16.msra.mxu0 0
      %1765 = vmatprep.subr.bf16.mxu0 0
      %1766 = vmatpush1.bf16.msra.mxu0 0
      %1767 = vmatprep.mubr.bf16.mxu0 0
      %1768 = vmatmul.mubr.bf16.gmra.mrb[0].mxu0 %v1730
      %v1769 = vpop.f32.mrb[0].mxu0
      %v1770 = vadd.f32 0.0, %v1769
      %v1771 = vpop.f32.mrb[0].mxu0
      %v1772 = vpop.f32.mrb[0].mxu0
      %v1773 = vpop.f32.mrb[0].mxu0
      %1774 = vdwg.mxu0
      %v1775 = vpack.c.bf16 %v1770, %v1770
      %v1777 = vunpack.c.l.b16 %v546
      %v1778 = vpack.c.b16 %v1777, %v1777
      %v1779 = vrot.slane %v1778, 2
      %v1781 = vsel %vm547, %v1775, 0
      %v1784 = vsel %vm777, %v1779, 0
      %1786 = vmatprep.subr.bf16.mxu0 0
      %1787 = vmatpush1.bf16.msra.mxu0 %v1784
      %1788 = vmatprep.subr.bf16.mxu0 0
      %1789 = vmatpush1.bf16.msra.mxu0 0
      %1790 = vmatprep.subr.bf16.mxu0 0
      %1791 = vmatpush1.bf16.msra.mxu0 0
      %1792 = vmatprep.subr.bf16.mxu0 0
      %1793 = vmatpush1.bf16.msra.mxu0 0
      %1794 = vmatprep.subr.bf16.mxu0 0
      %1795 = vmatpush1.bf16.msra.mxu0 0
      %1796 = vmatprep.subr.bf16.mxu0 0
      %1797 = vmatpush1.bf16.msra.mxu0 0
      %1798 = vmatprep.subr.bf16.mxu0 0
      %1799 = vmatpush1.bf16.msra.mxu0 0
      %1800 = vmatprep.subr.bf16.mxu0 0
      %1801 = vmatpush1.bf16.msra.mxu0 0
      %1802 = vmatprep.subr.bf16.mxu0 0
      %1803 = vmatpush1.bf16.msra.mxu0 0
      %1804 = vmatprep.subr.bf16.mxu0 0
      %1805 = vmatpush1.bf16.msra.mxu0 0
      %1806 = vmatprep.subr.bf16.mxu0 0
      %1807 = vmatpush1.bf16.msra.mxu0 0
      %1808 = vmatprep.subr.bf16.mxu0 0
      %1809 = vmatpush1.bf16.msra.mxu0 0
      %1810 = vmatprep.subr.bf16.mxu0 0
      %1811 = vmatpush1.bf16.msra.mxu0 0
      %1812 = vmatprep.subr.bf16.mxu0 0
      %1813 = vmatpush1.bf16.msra.mxu0 0
      %1814 = vmatprep.subr.bf16.mxu0 0
      %1815 = vmatpush1.bf16.msra.mxu0 0
      %1816 = vmatprep.subr.bf16.mxu0 0
      %1817 = vmatpush1.bf16.msra.mxu0 0
      %1818 = vmatprep.mubr.bf16.mxu0 0
      %1819 = vmatmul.mubr.bf16.gmra.mrb[0].mxu0 %v1781
      %v1820 = vpop.f32.mrb[0].mxu0
      %v1821 = vadd.f32 0.0, %v1820
      %v1822 = vpop.f32.mrb[0].mxu0
      %v1823 = vpop.f32.mrb[0].mxu0
      %v1824 = vpop.f32.mrb[0].mxu0
      %1825 = vdwg.mxu0
      %v1826 = vadd.f32 %v1664, %v1821
      %v1827 = vadd.f32 %v404, %v1826
      %v1828 = vld [vmem:[%s7] sm:$0x1]
      %v1830 = vlaneseq
      %v1831 = vshrl.u32 %v1830, 7
      %v1832 = vsub.s32 0, %v1831
      %v1833 = vrot.slane %v1828, %v1832
      %v1835 = vadd.f32 %v1827, %v1833
      %v1836 = vld [vmem:[%s8] sm:$0x1]
      %v1837 = vld [vmem:[%s9] sm:$0x1]
      %v1838 = vsel %vm429, %v1835, 0.0
      %1839 = vadd.xlane.f32.xlu0 %v1838
      %v1840 = vpop.xlane.xlu0 %1839
      %v1841 = vrcp.pop 32.0
      %v1842 = vmul.f32 %v1840, %v1841
      %v1843 = vsub.f32 %v1835, %v1842
      %v1844 = vmul.f32 %v1843, %v1843
      %v1845 = vsel %vm429, %v1844, 0.0
      %1846 = vadd.xlane.f32.xlu0 %v1845
      %v1847 = vpop.xlane.xlu0 %1846
      %v1848 = vmul.f32 %v1847, %v1841
      %v1849 = vadd.f32 %v1848, 1e-05
      %v1850 = vrsqrt.pop %v1849
      %v1851 = vmul.f32 %v1843, %v1850
      %v1853 = vlaneseq
      %v1854 = vshrl.u32 %v1853, 7
      %v1855 = vsub.s32 0, %v1854
      %v1856 = vrot.slane %v1836, %v1855
      %v1858 = vmul.f32 %v1851, %v1856
      %v1860 = vlaneseq
      %v1861 = vshrl.u32 %v1860, 7
      %v1862 = vsub.s32 0, %v1861
      %v1863 = vrot.slane %v1837, %v1862
      %v1865 = vadd.f32 %v1858, %v1863
      %1866 = vst.msk [vmem:[%s402] sm:$0xff] %vm429, %v1865
      %p1867 = scmp.lt.s32.totalorder %s25, 1
      %s1868 = scalar_select %p1867, %s25, 1
      %p1869 = scmp.lt.s32.totalorder %s26, 0
      %s1870 = scalar_select %p1869, %s26, 0
      %s1871 = sadd.s32 %s1870, %s1868
      %s1872 = smul.addr %s1871, 8
      %s1873 = scalar_lea.vmem %s10, %s1872
      // Predicated region
      $region61: #{image2report_forward.11} parent=59 // pred_check
        %p1874 = pneg %p275
      $region62: #{image2report_forward.11} parent=59 // pred_check_branch
        %1876 = sbr.rel (%p1874) target = $region64
      $region63: #{image2report_forward.11} parent=59 // pred_region
        _
      $region64: #{image2report_forward.11} parent=59 // pred_fallthru
        _
    $region60: #{image2report_forward.11} parent=5 // pred_fallthru
      _
    %p1877 = scmp.le.s32.totalorder 2, %s16
    // Predicated region
    $region65: #{image2report_forward.11} parent=5 // pred_check
      %p1878 = pneg %p1877
    $region66: #{image2report_forward.11} parent=5 // pred_check_branch
      %1880 = sbr.rel (%p1878) target = $region68
    $region67: #{image2report_forward.11} parent=5 // pred_region
      %s1881 = ssub.s32 %s16, 2
      // Predicated region
      $region69: #{image2report_forward.11} parent=67 // pred_check
        %p1882 = pneg %p281
      $region70: #{image2report_forward.11} parent=67 // pred_check_branch
        %1884 = sbr.rel (%p1882) target = $region72
      $region71: #{image2report_forward.11} parent=67 // pred_region
        %p1885 = scmp.lt.s32.totalorder %s27, 1
        %s1886 = scalar_select %p1885, %s27, 1
        %p1887 = scmp.lt.s32.totalorder %s28, 0
        %s1888 = scalar_select %p1887, %s28, 0
        %s1889 = sadd.s32 %s1888, %s1886
        %s1890 = smul.addr %s1889, 8
        %s1891 = scalar_lea.vmem %s10, %s1890
      $region72: #{image2report_forward.11} parent=67 // pred_fallthru
        _
    $region68: #{image2report_forward.11} parent=5 // pred_fallthru
      _
  $region6: #{image2report_forward.11} parent=0 // loop_footer
    %s20 = sadd.s32 1, %s16
  $region7: #{image2report_forward.11} parent=0 // loop_footer_branch
    %15 = sbr.rel target = $region3
  $region8: #{image2report_forward.11} parent=0 // loop_exit
    _

// kernel: image2report_forward.21
$region0: #{image2report_forward.21}
  #allocation0 [shape = 'u32[]', space=smem, size = 0x4, offset = 0x4, fixed_abs, tag = 'smem constant byte address 0x4 - core index']
  #allocation1 [shape = 'u32[144,128]{1,0:T(1,128)}', space=vmem, size = 0x12000, scoped, tag = 'internal scratch']
  %s0 = inlined_call_operand.vmem [shape: f32[2,8,32], index: 0, kind: input, shape index: {}]
  %s1 = inlined_call_operand.vmem [shape: f32[2,32], index: 1, kind: input, shape index: {}]
  %s2 = inlined_call_operand.vmem [shape: bf16[32,6], index: 2, kind: input, shape index: {}]
  %s3 = inlined_call_operand.vmem [shape: f32[1,6], index: 3, kind: input, shape index: {}]
  %s4 = inlined_call_operand.vmem [shape: bf16[32,5], index: 4, kind: input, shape index: {}]
  %s5 = inlined_call_operand.vmem [shape: f32[1,5], index: 5, kind: input, shape index: {}]
  %s6 = inlined_call_operand.hbm [shape: f32[2,6], index: 6, kind: output, shape index: {0}]
  %s7 = inlined_call_operand.hbm [shape: f32[2,5], index: 7, kind: output, shape index: {1}]
  %8 = xla_tuple %s6, %s7
  %s9 = sld [smem:[#allocation0]]
  $region42: #{image2report_forward.21} parent=0
    _
  %s11 = ssub.s32 1, %s9
  %s12 = scalar_select 0, %s11, %s9
  $region1: #{image2report_forward.21} parent=0
    #allocation2 [shape = 'u8[1024]{0}', space=vmem, size = 0x400, scoped, tag = 'output window, operand 0, single buffered']
    #allocation3 [shape = 's32[1]{0}', space=sflag, size = 0x4, scoped, tag = 'scoped memory for image2report_forward.21']
    #allocation4 [shape = 'u8[1024]{0}', space=vmem, size = 0x400, scoped, tag = 'output window, operand 1, single buffered']
    #allocation5 [shape = 's32[1]{0}', space=sflag, size = 0x4, scoped, tag = 'scoped memory for image2report_forward.21']
    %13 = vsyncpa [#allocation3], 0
    %14 = vsyncpa [#allocation5], 0
    // Predicated region
    $region2: #{image2report_forward.21} parent=1 // pred_check
      _
    $region3: #{image2report_forward.21} parent=1 // pred_check_branch
      %16 = sbr.rel (0) target = $region5
    $region4: #{image2report_forward.21} parent=1 // pred_region
      _
    $region5: #{image2report_forward.21} parent=1 // pred_fallthru
      _
    // Predicated region
    $region6: #{image2report_forward.21} parent=1 // pred_check
      _
    $region7: #{image2report_forward.21} parent=1 // pred_check_branch
      %18 = sbr.rel (0) target = $region9
    $region8: #{image2report_forward.21} parent=1 // pred_region
      _
    $region9: #{image2report_forward.21} parent=1 // pred_fallthru
      _
    // Predicated region
    $region10: #{image2report_forward.21} parent=1 // pred_check
      _
    $region11: #{image2report_forward.21} parent=1 // pred_check_branch
      %20 = sbr.rel (0) target = $region13
    $region12: #{image2report_forward.21} parent=1 // pred_region
      _
    $region13: #{image2report_forward.21} parent=1 // pred_fallthru
      _
    // Predicated region
    $region14: #{image2report_forward.21} parent=1 // pred_check
      _
    $region15: #{image2report_forward.21} parent=1 // pred_check_branch
      %22 = sbr.rel (0) target = $region17
    $region16: #{image2report_forward.21} parent=1 // pred_region
      _
    $region17: #{image2report_forward.21} parent=1 // pred_fallthru
      _
    // Predicated region
    $region18: #{image2report_forward.21} parent=1 // pred_check
      _
    $region19: #{image2report_forward.21} parent=1 // pred_check_branch
      %24 = sbr.rel (0) target = $region21
    $region20: #{image2report_forward.21} parent=1 // pred_region
      _
    $region21: #{image2report_forward.21} parent=1 // pred_fallthru
      _
    // Predicated region
    $region22: #{image2report_forward.21} parent=1 // pred_check
      _
    $region23: #{image2report_forward.21} parent=1 // pred_check_branch
      %26 = sbr.rel (0) target = $region25
    $region24: #{image2report_forward.21} parent=1 // pred_region
      _
    $region25: #{image2report_forward.21} parent=1 // pred_fallthru
      _
    %v28 = vld [vmem:[%s0] sm:$0xff]
    %v29 = vld [vmem:[%s0 + $0x8] sm:$0xff]
    %vm30 = vcmask 261120
    %v31 = vsel %vm30, %v28, 0.0
    %v32 = vrot.slane %v31, 4
    %v33 = vadd.f32 %v31, %v32
    %v34 = vrot.slane %v33, 2
    %v35 = vadd.f32 %v33, %v34
    %v36 = vrot.slane %v35, 1
    %v37 = vadd.f32 %v35, %v36
    %v38 = vsel %vm30, %v29, 0.0
    %v39 = vrot.slane %v38, 4
    %v40 = vadd.f32 %v38, %v39
    %v41 = vrot.slane %v40, 2
    %v42 = vadd.f32 %v40, %v41
    %v43 = vrot.slane %v42, 1
    %v44 = vadd.f32 %v42, %v43
    %v45 = vadd.f32 %v28, 0.0
    %v46 = vadd.f32 %v29, 0.0
    %v47 = vsub.f32 %v37, %v45
    %v48 = vsub.f32 %v44, %v46
    %v49 = vmul.f32 %v47, 0.14285715
    %v50 = vmul.f32 %v48, 0.14285715
    %v51 = vpack.c.bf16 %v49, %v49
    %v52 = vpack.c.bf16 %v50, %v50
    %v53 = vld [vmem:[%s2] sm:$0xf]
    %v54 = vld [vmem:[%s2 + $0x4] sm:$0xf]
    %v55 = vld [vmem:[%s2 + $0x8] sm:$0xf]
    %v56 = vld [vmem:[%s2 + $0xc] sm:$0xf]
    %v57 = vld [vmem:[%s3] sm:$0x1]
    %v59 = vlaneseq
    %v60 = vshrl.u32 %v59, 7
    %v61 = vsub.s32 0, %v60
    %v62 = vrot.slane %v57, %v61
    %v66 = vunpack.c.l.b16 %v51
    %v67 = vunpack.c.l.b16 %v52
    %v68 = vrot.slane %v67, 7
    %vm69 = vcmask 1041409
    %v70 = vsel %vm69, %v68, %v66
    %v71 = vpack.c.b16 %v70, %v70
    %v76 = vunpack.c.l.b16 %v53
    %v77 = vunpack.c.l.b16 %v54
    %v78 = vunpack.c.l.b16 %v55
    %v79 = vunpack.c.l.b16 %v56
    %v80 = vpack.c.b16 %v77, %v76
    %v81 = vpack.c.b16 %v79, %v78
    %v85 = vsel %vm30, %v71, 0
    %87 = vmatprep.subr.bf16.mxu0 0
    %88 = vmatpush1.bf16.msra.mxu0 %v80
    %89 = vmatprep.subr.bf16.mxu0 0
    %90 = vmatpush1.bf16.msra.mxu0 %v81
    %91 = vmatprep.subr.bf16.mxu0 0
    %92 = vmatpush1.bf16.msra.mxu0 0
    %93 = vmatprep.subr.bf16.mxu0 0
    %94 = vmatpush1.bf16.msra.mxu0 0
    %95 = vmatprep.subr.bf16.mxu0 0
    %96 = vmatpush1.bf16.msra.mxu0 0
    %97 = vmatprep.subr.bf16.mxu0 0
    %98 = vmatpush1.bf16.msra.mxu0 0
    %99 = vmatprep.subr.bf16.mxu0 0
    %100 = vmatpush1.bf16.msra.mxu0 0
    %101 = vmatprep.subr.bf16.mxu0 0
    %102 = vmatpush1.bf16.msra.mxu0 0
    %103 = vmatprep.subr.bf16.mxu0 0
    %104 = vmatpush1.bf16.msra.mxu0 0
    %105 = vmatprep.subr.bf16.mxu0 0
    %106 = vmatpush1.bf16.msra.mxu0 0
    %107 = vmatprep.subr.bf16.mxu0 0
    %108 = vmatpush1.bf16.msra.mxu0 0
    %109 = vmatprep.subr.bf16.mxu0 0
    %110 = vmatpush1.bf16.msra.mxu0 0
    %111 = vmatprep.subr.bf16.mxu0 0
    %112 = vmatpush1.bf16.msra.mxu0 0
    %113 = vmatprep.subr.bf16.mxu0 0
    %114 = vmatpush1.bf16.msra.mxu0 0
    %115 = vmatprep.subr.bf16.mxu0 0
    %116 = vmatpush1.bf16.msra.mxu0 0
    %117 = vmatprep.subr.bf16.mxu0 0
    %118 = vmatpush1.bf16.msra.mxu0 0
    %119 = vmatprep.mubr.bf16.mxu0 0
    %120 = vmatmul.mubr.bf16.gmra.mrb[0].mxu0 %v85
    %v121 = vpop.f32.mrb[0].mxu0
    %v122 = vadd.f32 %v62, %v121
    %v123 = vpop.f32.mrb[0].mxu0
    %v124 = vpop.f32.mrb[0].mxu0
    %v125 = vpop.f32.mrb[0].mxu0
    %126 = vdwg.mxu0
    %vm127 = vcmask 41984
    %128 = vst.msk [vmem:[#allocation2] sm:$0x3] %vm127, %v122
    %v129 = vld [vmem:[%s1] sm:$0x3]
    %v130 = vpack.c.bf16 %v129, %v129
    %v131 = vld [vmem:[%s4] sm:$0xf]
    %v132 = vld [vmem:[%s4 + $0x4] sm:$0xf]
    %v133 = vld [vmem:[%s4 + $0x8] sm:$0xf]
    %v134 = vld [vmem:[%s4 + $0xc] sm:$0xf]
    %v135 = vld [vmem:[%s5] sm:$0x1]
    %v137 = vlaneseq
    %v138 = vshrl.u32 %v137, 7
    %v139 = vsub.s32 0, %v138
    %v140 = vrot.slane %v135, %v139
    %v146 = vunpack.c.l.b16 %v131
    %v147 = vunpack.c.l.b16 %v132
    %v148 = vunpack.c.l.b16 %v133
    %v149 = vunpack.c.l.b16 %v134
    %v150 = vpack.c.b16 %v147, %v146
    %v151 = vpack.c.b16 %v149, %v148
    %v155 = vsel %vm30, %v130, 0
    %157 = vmatprep.subr.bf16.mxu0 0
    %158 = vmatpush1.bf16.msra.mxu0 %v150
    %159 = vmatprep.subr.bf16.mxu0 0
    %160 = vmatpush1.bf16.msra.mxu0 %v151
    %161 = vmatprep.subr.bf16.mxu0 0
    %162 = vmatpush1.bf16.msra.mxu0 0
    %163 = vmatprep.subr.bf16.mxu0 0
    %164 = vmatpush1.bf16.msra.mxu0 0
    %165 = vmatprep.subr.bf16.mxu0 0
    %166 = vmatpush1.bf16.msra.mxu0 0
    %167 = vmatprep.subr.bf16.mxu0 0
    %168 = vmatpush1.bf16.msra.mxu0 0
    %169 = vmatprep.subr.bf16.mxu0 0
    %170 = vmatpush1.bf16.msra.mxu0 0
    %171 = vmatprep.subr.bf16.mxu0 0
    %172 = vmatpush1.bf16.msra.mxu0 0
    %173 = vmatprep.subr.bf16.mxu0 0
    %174 = vmatpush1.bf16.msra.mxu0 0
    %175 = vmatprep.subr.bf16.mxu0 0
    %176 = vmatpush1.bf16.msra.mxu0 0
    %177 = vmatprep.subr.bf16.mxu0 0
    %178 = vmatpush1.bf16.msra.mxu0 0
    %179 = vmatprep.subr.bf16.mxu0 0
    %180 = vmatpush1.bf16.msra.mxu0 0
    %181 = vmatprep.subr.bf16.mxu0 0
    %182 = vmatpush1.bf16.msra.mxu0 0
    %183 = vmatprep.subr.bf16.mxu0 0
    %184 = vmatpush1.bf16.msra.mxu0 0
    %185 = vmatprep.subr.bf16.mxu0 0
    %186 = vmatpush1.bf16.msra.mxu0 0
    %187 = vmatprep.subr.bf16.mxu0 0
    %188 = vmatpush1.bf16.msra.mxu0 0
    %189 = vmatprep.mubr.bf16.mxu0 0
    %190 = vmatmul.mubr.bf16.gmra.mrb[0].mxu0 %v155
    %v191 = vpop.f32.mrb[0].mxu0
    %v192 = vadd.f32 %v140, %v191
    %v193 = vpop.f32.mrb[0].mxu0
    %v194 = vpop.f32.mrb[0].mxu0
    %v195 = vpop.f32.mrb[0].mxu0
    %196 = vdwg.mxu0
    %vm197 = vcmask 33792
    %198 = vst.msk [vmem:[#allocation4] sm:$0x3] %vm197, %v192
    // Predicated region
    $region26: #{image2report_forward.21} parent=1 // pred_check
      _
    $region27: #{image2report_forward.21} parent=1 // pred_check_branch
      %200 = sbr.rel (0) target = $region29
    $region28: #{image2report_forward.21} parent=1 // pred_region
      %s202 = ssub.s32 32, 32
      %203 = vsyncadd [#allocation3], %s202
      %s205 = sshll.u32 [#allocation2], 4
      %s206 = int_to_ptr.vmem [resolvable:$true] %s205
      %208 = dma.vmem_to_hbm [thread:$0]  %s206, 32, %s6, [#allocation3]
    $region29: #{image2report_forward.21} parent=1 // pred_fallthru
      _
    // Predicated region
    $region30: #{image2report_forward.21} parent=1 // pred_check
      _
    $region31: #{image2report_forward.21} parent=1 // pred_check_branch
      %210 = sbr.rel (0) target = $region33
    $region32: #{image2report_forward.21} parent=1 // pred_region
      %s212 = ssub.s32 32, 32
      %213 = vsyncadd [#allocation5], %s212
      %s215 = sshll.u32 [#allocation4], 4
      %s216 = int_to_ptr.vmem [resolvable:$true] %s215
      %218 = dma.vmem_to_hbm [thread:$0]  %s216, 32, %s7, [#allocation5]
    $region33: #{image2report_forward.21} parent=1 // pred_fallthru
      _
    // Predicated region
    $region34: #{image2report_forward.21} parent=1 // pred_check
      _
    $region35: #{image2report_forward.21} parent=1 // pred_check_branch
      %220 = sbr.rel (0) target = $region37
    $region36: #{image2report_forward.21} parent=1 // pred_region
      %221 = dma.done [#allocation3], 32
    $region37: #{image2report_forward.21} parent=1 // pred_fallthru
      _
    // Predicated region
    $region38: #{image2report_forward.21} parent=1 // pred_check
      _
    $region39: #{image2report_forward.21} parent=1 // pred_check_branch
      %223 = sbr.rel (0) target = $region41
    $region40: #{image2report_forward.21} parent=1 // pred_region
      %224 = dma.done [#allocation5], 32
    $region41: #{image2report_forward.21} parent=1 // pred_fallthru
      _
    %225 = vsyncpa [#allocation3], 1
    %226 = vsyncpa [#allocation5], 1

// kernel: image2report_forward.20
$region0: #{image2report_forward.20}
  #allocation0 [shape = 'u32[]', space=smem, size = 0x4, offset = 0x4, fixed_abs, tag = 'smem constant byte address 0x4 - core index']
  #allocation1 [shape = 'u32[144,128]{1,0:T(1,128)}', space=vmem, size = 0x12000, scoped, tag = 'internal scratch']
  %s0 = inlined_call_operand.vmem [shape: f32[16,32], index: 0, kind: input, shape index: {}]
  %s1 = inlined_call_operand.vmem [shape: bf16[32,32], index: 1, kind: input, shape index: {}]
  %s2 = inlined_call_operand.vmem [shape: f32[1,32], index: 2, kind: input, shape index: {}]
  %s3 = inlined_call_operand.vmem [shape: f32[16,32], index: 3, kind: output, shape index: {}]
  %s4 = sld [smem:[#allocation0]]
  $region22: #{image2report_forward.20} parent=0
    _
  %s6 = ssub.s32 1, %s4
  %s7 = scalar_select 0, %s6, %s4
  // Predicated region
  $region2: #{image2report_forward.20} parent=0 // pred_check
    _
  $region3: #{image2report_forward.20} parent=0 // pred_check_branch
    %9 = sbr.rel (0) target = $region5
  $region4: #{image2report_forward.20} parent=0 // pred_region
    _
  $region5: #{image2report_forward.20} parent=0 // pred_fallthru
    _
  // Predicated region
  $region6: #{image2report_forward.20} parent=0 // pred_check
    _
  $region7: #{image2report_forward.20} parent=0 // pred_check_branch
    %11 = sbr.rel (0) target = $region9
  $region8: #{image2report_forward.20} parent=0 // pred_region
    _
  $region9: #{image2report_forward.20} parent=0 // pred_fallthru
    _
  // Predicated region
  $region10: #{image2report_forward.20} parent=0 // pred_check
    _
  $region11: #{image2report_forward.20} parent=0 // pred_check_branch
    %13 = sbr.rel (0) target = $region13
  $region12: #{image2report_forward.20} parent=0 // pred_region
    _
  $region13: #{image2report_forward.20} parent=0 // pred_fallthru
    _
  %v15 = vld [vmem:[%s0] sm:$0xff]
  %v16 = vld [vmem:[%s0 + $0x8] sm:$0xff]
  %v17 = vpack.c.bf16 %v16, %v15
  %v18 = vld [vmem:[%s1] sm:$0xf]
  %v19 = vld [vmem:[%s1 + $0x4] sm:$0xf]
  %v20 = vld [vmem:[%s1 + $0x8] sm:$0xf]
  %v21 = vld [vmem:[%s1 + $0xc] sm:$0xf]
  %v22 = vld [vmem:[%s2] sm:$0x1]
  %v24 = vlaneseq
  %v25 = vshrl.u32 %v24, 7
  %v26 = vsub.s32 0, %v25
  %v27 = vrot.slane %v22, %v26
  %v33 = vunpack.c.l.b16 %v18
  %v34 = vunpack.c.l.b16 %v19
  %v35 = vunpack.c.l.b16 %v20
  %v36 = vunpack.c.l.b16 %v21
  %v37 = vpack.c.b16 %v34, %v33
  %v38 = vpack.c.b16 %v36, %v35
  %vm41 = vcmask 261120
  %v43 = vsel %vm41, %v17, 0
  %45 = vmatprep.subr.bf16.mxu0 0
  %46 = vmatpush1.bf16.msra.mxu0 %v37
  %47 = vmatprep.subr.bf16.mxu0 0
  %48 = vmatpush1.bf16.msra.mxu0 %v38
  %49 = vmatprep.subr.bf16.mxu0 0
  %50 = vmatpush1.bf16.msra.mxu0 0
  %51 = vmatprep.subr.bf16.mxu0 0
  %52 = vmatpush1.bf16.msra.mxu0 0
  %53 = vmatprep.subr.bf16.mxu0 0
  %54 = vmatpush1.bf16.msra.mxu0 0
  %55 = vmatprep.subr.bf16.mxu0 0
  %56 = vmatpush1.bf16.msra.mxu0 0
  %57 = vmatprep.subr.bf16.mxu0 0
  %58 = vmatpush1.bf16.msra.mxu0 0
  %59 = vmatprep.subr.bf16.mxu0 0
  %60 = vmatpush1.bf16.msra.mxu0 0
  %61 = vmatprep.subr.bf16.mxu0 0
  %62 = vmatpush1.bf16.msra.mxu0 0
  %63 = vmatprep.subr.bf16.mxu0 0
  %64 = vmatpush1.bf16.msra.mxu0 0
  %65 = vmatprep.subr.bf16.mxu0 0
  %66 = vmatpush1.bf16.msra.mxu0 0
  %67 = vmatprep.subr.bf16.mxu0 0
  %68 = vmatpush1.bf16.msra.mxu0 0
  %69 = vmatprep.subr.bf16.mxu0 0
  %70 = vmatpush1.bf16.msra.mxu0 0
  %71 = vmatprep.subr.bf16.mxu0 0
  %72 = vmatpush1.bf16.msra.mxu0 0
  %73 = vmatprep.subr.bf16.mxu0 0
  %74 = vmatpush1.bf16.msra.mxu0 0
  %75 = vmatprep.subr.bf16.mxu0 0
  %76 = vmatpush1.bf16.msra.mxu0 0
  %77 = vmatprep.mubr.bf16.mxu0 0
  %78 = vmatmul.mubr.bf16.gmra.mrb[0].mxu0 %v43
  %v79 = vpop.f32.mrb[0].mxu0
  %v80 = vadd.f32 %v27, %v79
  %v81 = vpop.f32.mrb[0].mxu0
  %v82 = vpop.f32.mrb[0].mxu0
  %v83 = vadd.f32 %v27, %v82
  %v84 = vpop.f32.mrb[0].mxu0
  %85 = vdwg.mxu0
  %86 = vst.msk [vmem:[%s3] sm:$0xff] %vm41, %v80
  %87 = vst.msk [vmem:[%s3 + $0x8] sm:$0xff] %vm41, %v83
  // Predicated region
  $region14: #{image2report_forward.20} parent=0 // pred_check
    _
  $region15: #{image2report_forward.20} parent=0 // pred_check_branch
    %89 = sbr.rel (0) target = $region17
  $region16: #{image2report_forward.20} parent=0 // pred_region
    _
  $region17: #{image2report_forward.20} parent=0 // pred_fallthru
    _
  // Predicated region
  $region18: #{image2report_forward.20} parent=0 // pred_check
    _
  $region19: #{image2report_forward.20} parent=0 // pred_check_branch
    %91 = sbr.rel (0) target = $region21
  $region20: #{image2report_forward.20} parent=0 // pred_region
    _
  $region21: #{image2report_forward.20} parent=0 // pred_fallthru
    _

// kernel: image2report_forward.14
$region0: #{image2report_forward.14}
  #allocation0 [shape = 'u32[]', space=smem, size = 0x4, offset = 0x4, fixed_abs, tag = 'smem constant byte address 0x4 - core index']
  #allocation1 [shape = 'u32[144,128]{1,0:T(1,128)}', space=vmem, size = 0x12000, scoped, tag = 'internal scratch']
  %s0 = inlined_call_operand.vmem [shape: f32[2,8,32], index: 0, kind: input, shape index: {}]
  %s1 = inlined_call_operand.vmem [shape: bf16[32,32], index: 1, kind: input, shape index: {}]
  %s2 = inlined_call_operand.vmem [shape: f32[1,32], index: 2, kind: input, shape index: {}]
  %s3 = inlined_call_operand.vmem [shape: bf16[4,64], index: 3, kind: input, shape index: {}]
  %s4 = inlined_call_operand.vmem [shape: bf16[32,32], index: 4, kind: input, shape index: {}]
  %s5 = inlined_call_operand.vmem [shape: f32[1,32], index: 5, kind: input, shape index: {}]
  %s6 = inlined_call_operand.vmem [shape: f32[1,32], index: 6, kind: input, shape index: {}]
  %s7 = inlined_call_operand.vmem [shape: f32[1,32], index: 7, kind: input, shape index: {}]
  %s8 = inlined_call_operand.vmem [shape: f32[2,8,32], index: 8, kind: output, shape index: {}]
  %s9 = sld [smem:[#allocation0]]
  $region65: #{image2report_forward.14} parent=0
    _
  %s11 = ssub.s32 1, %s9
  %s12 = scalar_select 0, %s11, %s9
  loop: start=0, step=1, limit=4
  $region2: #{image2report_forward.14} parent=0 // loop_pre_header
    _
  $region3: #{image2report_forward.14} parent=0 // loop_header
    %s14 = sphi 0, %s18
    %p15 = scmp.ge.s32.totalorder %s14, 4
    %s21 = sphi 0, %s33
    %s22 = sphi 0, %s29
    %s23 = sphi 0, %s21
    %s24 = sphi 0, %s22
    %s25 = sphi 0, %s23
    %s26 = sphi 0, %s24
    %s38 = sphi 0, %s40
    %s41 = sphi 0, %s38
    %s42 = sphi 0, %s41
    %s58 = sphi 0, %s42
    %s62 = sphi 0, %s62
    %s64 = sphi 0, %s62
    %s65 = sphi 0, %s64
    %s79 = sphi 0, %s65
    %s83 = sphi 0, %s83
    %s85 = sphi 0, %s83
    %s86 = sphi 0, %s85
    %s100 = sphi 0, %s86
    %s104 = sphi 0, %s104
    %s106 = sphi 0, %s104
    %s107 = sphi 0, %s106
    %s121 = sphi 0, %s107
    %s125 = sphi 0, %s125
    %s127 = sphi 0, %s125
    %s128 = sphi 0, %s127
    %s142 = sphi 0, %s128
    %s146 = sphi 0, %s146
    %s148 = sphi 0, %s146
    %s149 = sphi 0, %s148
    %s163 = sphi 0, %s149
    %s167 = sphi 0, %s167
    %s169 = sphi 0, %s167
    %s170 = sphi 0, %s169
    %s184 = sphi 0, %s170
    %s188 = sphi 0, %s188
    %s190 = sphi 0, %s188
    %s191 = sphi 0, %s190
    %s205 = sphi 0, %s191
    %s213 = sphi 0, %s215
    %s216 = sphi 0, %s213
    %s217 = sphi 0, %s216
    %s233 = sphi 0, %s217
  $region4: #{image2report_forward.14} parent=0 // loop_header_branch
    %17 = sbr.rel (%p15) target = $region8
  $region5: #{image2report_forward.14} parent=0 // loop_body
    %s19 = ssub.s32 %s14, 1
    %s20 = ssub.s32 %s14, 2
    %s27 = sadd.s32 1, %s22
    %p28 = scmp.ge.s32.totalorder %s27, 1
    %s29 = scalar_select %p28, 0, %s27
    %s30 = sadd.s32 1, %s21
    %s31 = scalar_select %p28, %s30, %s21
    %p32 = scmp.ge.s32.totalorder %s31, 2
    %s33 = scalar_select %p32, 0, %s31
    %s34 = ssub.s32 %s21, %s33
    %s35 = ssub.s32 %s22, %s29
    %s36 = sor.u32 %s34, %s35
    %p37 = scmp.eq.s32.totalorder %s36, 0
    %s39 = sadd.s32 %s38, 1
    %s40 = scalar_select %p37, %s38, %s39
    %p43 = pneg %p37
    %p44 = scmp.eq.s32.totalorder %s14, 1
    %p45 = por %p43, %p44
    %p46 = scmp.ne.s32.totalorder %s38, %s41
    %p47 = scmp.eq.s32.totalorder %s14, 0
    %p48 = por %p46, %p47
    %p49 = scmp.ne.s32.totalorder %s38, %s41
    %p50 = scmp.eq.s32.totalorder %s19, 1
    %p51 = por %p49, %p50
    %p52 = scmp.ne.s32.totalorder %s41, %s42
    %p53 = scmp.eq.s32.totalorder %s19, 0
    %p54 = por %p52, %p53
    %p55 = scmp.ne.s32.totalorder %s41, %s42
    %p56 = scmp.eq.s32.totalorder %s20, 1
    %p57 = por %p55, %p56
    %p59 = scmp.ne.s32.totalorder %s42, %s58
    %p60 = scmp.eq.s32.totalorder %s20, 0
    %p61 = por %p59, %p60
    %s63 = sadd.s32 %s62, 1
    %p66 = scmp.eq.s32.totalorder %s14, 1
    %p67 = scmp.ne.s32.totalorder %s62, %s64
    %p68 = scmp.eq.s32.totalorder %s14, 0
    %p69 = por %p67, %p68
    %p70 = scmp.ne.s32.totalorder %s62, %s64
    %p71 = scmp.eq.s32.totalorder %s19, 1
    %p72 = por %p70, %p71
    %p73 = scmp.ne.s32.totalorder %s64, %s65
    %p74 = scmp.eq.s32.totalorder %s19, 0
    %p75 = por %p73, %p74
    %p76 = scmp.ne.s32.totalorder %s64, %s65
    %p77 = scmp.eq.s32.totalorder %s20, 1
    %p78 = por %p76, %p77
    %p80 = scmp.ne.s32.totalorder %s65, %s79
    %p81 = scmp.eq.s32.totalorder %s20, 0
    %p82 = por %p80, %p81
    %s84 = sadd.s32 %s83, 1
    %p87 = scmp.eq.s32.totalorder %s14, 1
    %p88 = scmp.ne.s32.totalorder %s83, %s85
    %p89 = scmp.eq.s32.totalorder %s14, 0
    %p90 = por %p88, %p89
    %p91 = scmp.ne.s32.totalorder %s83, %s85
    %p92 = scmp.eq.s32.totalorder %s19, 1
    %p93 = por %p91, %p92
    %p94 = scmp.ne.s32.totalorder %s85, %s86
    %p95 = scmp.eq.s32.totalorder %s19, 0
    %p96 = por %p94, %p95
    %p97 = scmp.ne.s32.totalorder %s85, %s86
    %p98 = scmp.eq.s32.totalorder %s20, 1
    %p99 = por %p97, %p98
    %p101 = scmp.ne.s32.totalorder %s86, %s100
    %p102 = scmp.eq.s32.totalorder %s20, 0
    %p103 = por %p101, %p102
    %s105 = sadd.s32 %s104, 1
    %p108 = scmp.eq.s32.totalorder %s14, 1
    %p109 = scmp.ne.s32.totalorder %s104, %s106
    %p110 = scmp.eq.s32.totalorder %s14, 0
    %p111 = por %p109, %p110
    %p112 = scmp.ne.s32.totalorder %s104, %s106
    %p113 = scmp.eq.s32.totalorder %s19, 1
    %p114 = por %p112, %p113
    %p115 = scmp.ne.s32.totalorder %s106, %s107
    %p116 = scmp.eq.s32.totalorder %s19, 0
    %p117 = por %p115, %p116
    %p118 = scmp.ne.s32.totalorder %s106, %s107
    %p119 = scmp.eq.s32.totalorder %s20, 1
    %p120 = por %p118, %p119
    %p122 = scmp.ne.s32.totalorder %s107, %s121
    %p123 = scmp.eq.s32.totalorder %s20, 0
    %p124 = por %p122, %p123
    %s126 = sadd.s32 %s125, 1
    %p129 = scmp.eq.s32.totalorder %s14, 1
    %p130 = scmp.ne.s32.totalorder %s125, %s127
    %p131 = scmp.eq.s32.totalorder %s14, 0
    %p132 = por %p130, %p131
    %p133 = scmp.ne.s32.totalorder %s125, %s127
    %p134 = scmp.eq.s32.totalorder %s19, 1
    %p135 = por %p133, %p134
    %p136 = scmp.ne.s32.totalorder %s127, %s128
    %p137 = scmp.eq.s32.totalorder %s19, 0
    %p138 = por %p136, %p137
    %p139 = scmp.ne.s32.totalorder %s127, %s128
    %p140 = scmp.eq.s32.totalorder %s20, 1
    %p141 = por %p139, %p140
    %p143 = scmp.ne.s32.totalorder %s128, %s142
    %p144 = scmp.eq.s32.totalorder %s20, 0
    %p145 = por %p143, %p144
    %s147 = sadd.s32 %s146, 1
    %p150 = scmp.eq.s32.totalorder %s14, 1
    %p151 = scmp.ne.s32.totalorder %s146, %s148
    %p152 = scmp.eq.s32.totalorder %s14, 0
    %p153 = por %p151, %p152
    %p154 = scmp.ne.s32.totalorder %s146, %s148
    %p155 = scmp.eq.s32.totalorder %s19, 1
    %p156 = por %p154, %p155
    %p157 = scmp.ne.s32.totalorder %s148, %s149
    %p158 = scmp.eq.s32.totalorder %s19, 0
    %p159 = por %p157, %p158
    %p160 = scmp.ne.s32.totalorder %s148, %s149
    %p161 = scmp.eq.s32.totalorder %s20, 1
    %p162 = por %p160, %p161
    %p164 = scmp.ne.s32.totalorder %s149, %s163
    %p165 = scmp.eq.s32.totalorder %s20, 0
    %p166 = por %p164, %p165
    %s168 = sadd.s32 %s167, 1
    %p171 = scmp.eq.s32.totalorder %s14, 1
    %p172 = scmp.ne.s32.totalorder %s167, %s169
    %p173 = scmp.eq.s32.totalorder %s14, 0
    %p174 = por %p172, %p173
    %p175 = scmp.ne.s32.totalorder %s167, %s169
    %p176 = scmp.eq.s32.totalorder %s19, 1
    %p177 = por %p175, %p176
    %p178 = scmp.ne.s32.totalorder %s169, %s170
    %p179 = scmp.eq.s32.totalorder %s19, 0
    %p180 = por %p178, %p179
    %p181 = scmp.ne.s32.totalorder %s169, %s170
    %p182 = scmp.eq.s32.totalorder %s20, 1
    %p183 = por %p181, %p182
    %p185 = scmp.ne.s32.totalorder %s170, %s184
    %p186 = scmp.eq.s32.totalorder %s20, 0
    %p187 = por %p185, %p186
    %s189 = sadd.s32 %s188, 1
    %p192 = scmp.eq.s32.totalorder %s14, 1
    %p193 = scmp.ne.s32.totalorder %s188, %s190
    %p194 = scmp.eq.s32.totalorder %s14, 0
    %p195 = por %p193, %p194
    %p196 = scmp.ne.s32.totalorder %s188, %s190
    %p197 = scmp.eq.s32.totalorder %s19, 1
    %p198 = por %p196, %p197
    %p199 = scmp.ne.s32.totalorder %s190, %s191
    %p200 = scmp.eq.s32.totalorder %s19, 0
    %p201 = por %p199, %p200
    %p202 = scmp.ne.s32.totalorder %s190, %s191
    %p203 = scmp.eq.s32.totalorder %s20, 1
    %p204 = por %p202, %p203
    %p206 = scmp.ne.s32.totalorder %s191, %s205
    %p207 = scmp.eq.s32.totalorder %s20, 0
    %p208 = por %p206, %p207
    %s209 = ssub.s32 %s21, %s33
    %s210 = ssub.s32 %s22, %s29
    %s211 = sor.u32 %s209, %s210
    %p212 = scmp.eq.s32.totalorder %s211, 0
    %s214 = sadd.s32 %s213, 1
    %s215 = scalar_select %p212, %s213, %s214
    %p218 = pneg %p212
    %p219 = scmp.eq.s32.totalorder %s14, 1
    %p220 = por %p218, %p219
    %p221 = scmp.ne.s32.totalorder %s213, %s216
    %p222 = scmp.eq.s32.totalorder %s14, 0
    %p223 = por %p221, %p222
    %p224 = scmp.ne.s32.totalorder %s213, %s216
    %p225 = scmp.eq.s32.totalorder %s19, 1
    %p226 = por %p224, %p225
    %p227 = scmp.ne.s32.totalorder %s216, %s217
    %p228 = scmp.eq.s32.totalorder %s19, 0
    %p229 = por %p227, %p228
    %p230 = scmp.ne.s32.totalorder %s216, %s217
    %p231 = scmp.eq.s32.totalorder %s20, 1
    %p232 = por %p230, %p231
    %p234 = scmp.ne.s32.totalorder %s217, %s233
    %p235 = scmp.eq.s32.totalorder %s20, 0
    %p236 = por %p234, %p235
    %p237 = scmp.le.s32.totalorder 1, %s14
    %p238 = scmp.lt.s32.totalorder %s14, 3
    %p239 = pnand %p237, %p238
    %p240 = pneg %p239
    // Predicated region
    $region9: #{image2report_forward.14} parent=5 // pred_check
      _
    $region10: #{image2report_forward.14} parent=5 // pred_check_branch
      %242 = sbr.rel (%p239) target = $region12
    $region11: #{image2report_forward.14} parent=5 // pred_region
      %s243 = ssub.s32 %s14, 1
      // Predicated region
      $region13: #{image2report_forward.14} parent=11 // pred_check
        %p244 = pneg %p75
      $region14: #{image2report_forward.14} parent=11 // pred_check_branch
        %246 = sbr.rel (%p244) target = $region16
      $region15: #{image2report_forward.14} parent=11 // pred_region
        _
      $region16: #{image2report_forward.14} parent=11 // pred_fallthru
        _
      // Predicated region
      $region17: #{image2report_forward.14} parent=11 // pred_check
        %p247 = pneg %p96
      $region18: #{image2report_forward.14} parent=11 // pred_check_branch
        %249 = sbr.rel (%p247) target = $region20
      $region19: #{image2report_forward.14} parent=11 // pred_region
        _
      $region20: #{image2report_forward.14} parent=11 // pred_fallthru
        _
      // Predicated region
      $region21: #{image2report_forward.14} parent=11 // pred_check
        %p250 = pneg %p117
      $region22: #{image2report_forward.14} parent=11 // pred_check_branch
        %252 = sbr.rel (%p250) target = $region24
      $region23: #{image2report_forward.14} parent=11 // pred_region
        _
      $region24: #{image2report_forward.14} parent=11 // pred_fallthru
        _
      // Predicated region
      $region25: #{image2report_forward.14} parent=11 // pred_check
        %p253 = pneg %p138
      $region26: #{image2report_forward.14} parent=11 // pred_check_branch
        %255 = sbr.rel (%p253) target = $region28
      $region27: #{image2report_forward.14} parent=11 // pred_region
        _
      $region28: #{image2report_forward.14} parent=11 // pred_fallthru
        _
      // Predicated region
      $region29: #{image2report_forward.14} parent=11 // pred_check
        %p256 = pneg %p159
      $region30: #{image2report_forward.14} parent=11 // pred_check_branch
        %258 = sbr.rel (%p256) target = $region32
      $region31: #{image2report_forward.14} parent=11 // pred_region
        _
      $region32: #{image2report_forward.14} parent=11 // pred_fallthru
        _
      // Predicated region
      $region33: #{image2report_forward.14} parent=11 // pred_check
        %p259 = pneg %p180
      $region34: #{image2report_forward.14} parent=11 // pred_check_branch
        %261 = sbr.rel (%p259) target = $region36
      $region35: #{image2report_forward.14} parent=11 // pred_region
        _
      $region36: #{image2report_forward.14} parent=11 // pred_fallthru
        _
      // Predicated region
      $region37: #{image2report_forward.14} parent=11 // pred_check
        %p262 = pneg %p201
      $region38: #{image2report_forward.14} parent=11 // pred_check_branch
        %264 = sbr.rel (%p262) target = $region40
      $region39: #{image2report_forward.14} parent=11 // pred_region
        _
      $region40: #{image2report_forward.14} parent=11 // pred_fallthru
        _
    $region12: #{image2report_forward.14} parent=5 // pred_fallthru
      _
    %p265 = scmp.lt.s32.totalorder %s14, 2
    // Predicated region
    $region41: #{image2report_forward.14} parent=5 // pred_check
      %p266 = pneg %p265
    $region42: #{image2report_forward.14} parent=5 // pred_check_branch
      %268 = sbr.rel (%p266) target = $region44
    $region43: #{image2report_forward.14} parent=5 // pred_region
      // Predicated region
      $region45: #{image2report_forward.14} parent=43 // pred_check
        %p269 = pneg %p48
      $region46: #{image2report_forward.14} parent=43 // pred_check_branch
        %271 = sbr.rel (%p269) target = $region48
      $region47: #{image2report_forward.14} parent=43 // pred_region
        %p272 = scmp.lt.s32.totalorder %s21, 1
        %s273 = scalar_select %p272, %s21, 1
        %p274 = scmp.lt.s32.totalorder %s22, 0
        %s275 = scalar_select %p274, %s22, 0
        %s276 = sadd.s32 %s275, %s273
        %s277 = smul.addr %s276, 8
        %s278 = scalar_lea.vmem %s0, %s277
      $region48: #{image2report_forward.14} parent=43 // pred_fallthru
        _
    $region44: #{image2report_forward.14} parent=5 // pred_fallthru
      _
    %p279 = scmp.le.s32.totalorder 1, %s14
    %p280 = scmp.lt.s32.totalorder %s14, 3
    %p281 = pnand %p279, %p280
    %p282 = pneg %p281
    // Predicated region
    $region49: #{image2report_forward.14} parent=5 // pred_check
      _
    $region50: #{image2report_forward.14} parent=5 // pred_check_branch
      %284 = sbr.rel (%p281) target = $region52
    $region51: #{image2report_forward.14} parent=5 // pred_region
      %s285 = ssub.s32 %s14, 1
      %p286 = scmp.lt.s32.totalorder %s23, 1
      %s287 = scalar_select %p286, %s23, 1
      %p288 = scmp.lt.s32.totalorder %s24, 0
      %s289 = scalar_select %p288, %s24, 0
      %s290 = sadd.s32 %s289, %s287
      %s291 = smul.addr %s290, 8
      %s292 = scalar_lea.vmem %s0, %s291
      %p293 = pneg %p54
      %p294 = pneg %p51
      %p295 = pneg %p75
      %p296 = pneg %p72
      %p297 = pneg %p96
      %p298 = pneg %p93
      %p299 = pneg %p117
      %p300 = pneg %p114
      %p301 = pneg %p138
      %p302 = pneg %p135
      %p303 = pneg %p159
      %p304 = pneg %p156
      %p305 = pneg %p180
      %p306 = pneg %p177
      %p307 = pneg %p201
      %p308 = pneg %p198
      %p309 = pneg %p229
      %p310 = pneg %p226
      %p311 = scmp.lt.s32.totalorder %s23, 1
      %s312 = scalar_select %p311, %s23, 1
      %p313 = scmp.lt.s32.totalorder %s24, 0
      %s314 = scalar_select %p313, %s24, 0
      %s315 = sadd.s32 %s314, %s312
      %s316 = smul.addr %s315, 8
      %s317 = scalar_lea.vmem %s8, %s316
      %p318 = scmp.lt.s32.totalorder %s23, 1
      %s319 = scalar_select %p318, %s23, 1
      %p320 = scmp.lt.s32.totalorder %s24, 0
      %s321 = scalar_select %p320, %s24, 0
      %s322 = sadd.s32 %s321, %s319
      %s323 = smul.addr %s322, 8
      %s324 = scalar_lea.vmem %s0, %s323
      %p325 = scmp.lt.s32.totalorder %s23, 1
      %s326 = scalar_select %p325, %s23, 1
      %p327 = scmp.lt.s32.totalorder %s24, 0
      %s328 = scalar_select %p327, %s24, 0
      %s329 = sadd.s32 %s328, %s326
      %s330 = smul.addr %s329, 8
      %s331 = scalar_lea.vmem %s8, %s330
      %v333 = vld [vmem:[%s324] sm:$0xff]
      %v334 = vpack.c.bf16 %v333, %v333
      %v335 = vld [vmem:[%s1] sm:$0xf]
      %v336 = vld [vmem:[%s1 + $0x4] sm:$0xf]
      %v337 = vld [vmem:[%s1 + $0x8] sm:$0xf]
      %v338 = vld [vmem:[%s1 + $0xc] sm:$0xf]
      %v339 = vld [vmem:[%s2] sm:$0x1]
      %v341 = vlaneseq
      %v342 = vshrl.u32 %v341, 7
      %v343 = vsub.s32 0, %v342
      %v344 = vrot.slane %v339, %v343
      %v350 = vunpack.c.l.b16 %v335
      %v351 = vunpack.c.l.b16 %v336
      %v352 = vunpack.c.l.b16 %v337
      %v353 = vunpack.c.l.b16 %v338
      %v354 = vpack.c.b16 %v351, %v350
      %v355 = vpack.c.b16 %v353, %v352
      %vm358 = vcmask 261120
      %v360 = vsel %vm358, %v334, 0
      %362 = vmatprep.subr.bf16.mxu0 0
      %363 = vmatpush1.bf16.msra.mxu0 %v354
      %364 = vmatprep.subr.bf16.mxu0 0
      %365 = vmatpush1.bf16.msra.mxu0 %v355
      %366 = vmatprep.subr.bf16.mxu0 0
      %367 = vmatpush1.bf16.msra.mxu0 0
      %368 = vmatprep.subr.bf16.mxu0 0
      %369 = vmatpush1.bf16.msra.mxu0 0
      %370 = vmatprep.subr.bf16.mxu0 0
      %371 = vmatpush1.bf16.msra.mxu0 0
      %372 = vmatprep.subr.bf16.mxu0 0
      %373 = vmatpush1.bf16.msra.mxu0 0
      %374 = vmatprep.subr.bf16.mxu0 0
      %375 = vmatpush1.bf16.msra.mxu0 0
      %376 = vmatprep.subr.bf16.mxu0 0
      %377 = vmatpush1.bf16.msra.mxu0 0
      %378 = vmatprep.subr.bf16.mxu0 0
      %379 = vmatpush1.bf16.msra.mxu0 0
      %380 = vmatprep.subr.bf16.mxu0 0
      %381 = vmatpush1.bf16.msra.mxu0 0
      %382 = vmatprep.subr.bf16.mxu0 0
      %383 = vmatpush1.bf16.msra.mxu0 0
      %384 = vmatprep.subr.bf16.mxu0 0
      %385 = vmatpush1.bf16.msra.mxu0 0
      %386 = vmatprep.subr.bf16.mxu0 0
      %387 = vmatpush1.bf16.msra.mxu0 0
      %388 = vmatprep.subr.bf16.mxu0 0
      %389 = vmatpush1.bf16.msra.mxu0 0
      %390 = vmatprep.subr.bf16.mxu0 0
      %391 = vmatpush1.bf16.msra.mxu0 0
      %392 = vmatprep.subr.bf16.mxu0 0
      %393 = vmatpush1.bf16.msra.mxu0 0
      %394 = vmatprep.mubr.bf16.mxu0 0
      %395 = vmatmul.mubr.bf16.gmra.mrb[0].mxu0 %v360
      %v396 = vpop.f32.mrb[0].mxu0
      %v397 = vadd.f32 %v344, %v396
      %v398 = vpop.f32.mrb[0].mxu0
      %v399 = vpop.f32.mrb[0].mxu0
      %v400 = vpop.f32.mrb[0].mxu0
      %401 = vdwg.mxu0
      %v402 = vpack.c.bf16 %v397, %v397
      %v403 = vld [vmem:[%s3] sm:$0x3]
      %v404 = vld [vmem:[%s4] sm:$0xf]
      %v405 = vld [vmem:[%s4 + $0x4] sm:$0xf]
      %v406 = vld [vmem:[%s4 + $0x8] sm:$0xf]
      %v407 = vld [vmem:[%s4 + $0xc] sm:$0xf]
      %vm408 = vcmask 31744
      %v410 = vsel %vm408, %v402, 0
      %v413 = vsel %vm408, %v403, 0
      %415 = vmatprep.subr.bf16.mxu0 0
      %416 = vmatpush1.bf16.xpose.msra.mxu0 %v413
      %417 = vmatprep.subr.bf16.mxu0 0
      %418 = vmatpush1.bf16.xpose.msra.mxu0 0
      %419 = vmatprep.subr.bf16.mxu0 0
      %420 = vmatpush1.bf16.xpose.msra.mxu0 0
      %421 = vmatprep.subr.bf16.mxu0 0
      %422 = vmatpush1.bf16.xpose.msra.mxu0 0
      %423 = vmatprep.subr.bf16.mxu0 0
      %424 = vmatpush1.bf16.xpose.msra.mxu0 0
      %425 = vmatprep.subr.bf16.mxu0 0
      %426 = vmatpush1.bf16.xpose.msra.mxu0 0
      %427 = vmatprep.subr.bf16.mxu0 0
      %428 = vmatpush1.bf16.xpose.msra.mxu0 0
      %429 = vmatprep.subr.bf16.mxu0 0
      %430 = vmatpush1.bf16.xpose.msra.mxu0 0
      %431 = vmatprep.subr.bf16.mxu0 0
      %432 = vmatpush1.bf16.xpose.msra.mxu0 0
      %433 = vmatprep.subr.bf16.mxu0 0
      %434 = vmatpush1.bf16.xpose.msra.mxu0 0
      %435 = vmatprep.subr.bf16.mxu0 0
      %436 = vmatpush1.bf16.xpose.msra.mxu0 0
      %437 = vmatprep.subr.bf16.mxu0 0
      %438 = vmatpush1.bf16.xpose.msra.mxu0 0
      %439 = vmatprep.subr.bf16.mxu0 0
      %440 = vmatpush1.bf16.xpose.msra.mxu0 0
      %441 = vmatprep.subr.bf16.mxu0 0
      %442 = vmatpush1.bf16.xpose.msra.mxu0 0
      %443 = vmatprep.subr.bf16.mxu0 0
      %444 = vmatpush1.bf16.xpose.msra.mxu0 0
      %445 = vmatprep.subr.bf16.mxu0 0
      %446 = vmatpush1.bf16.xpose.msra.mxu0 0
      %447 = vmatprep.mubr.bf16.mxu0 0
      %448 = vmatmul.mubr.bf16.gmra.mrb[0].mxu0 %v410
      %v449 = vpop.f32.mrb[0].mxu0
      %v450 = vadd.f32 0.0, %v449
      %v451 = vpop.f32.mrb[0].mxu0
      %v452 = vpop.f32.mrb[0].mxu0
      %v453 = vpop.f32.mrb[0].mxu0
      %454 = vdwg.mxu0
      %v455 = vsel %vm408, %v450, -inf
      %456 = vmax.xlane.f32.xlu0 %v455
      %v457 = vpop.xlane.xlu0 %456
      %v458 = vsub.f32 %v450, %v457
      %v459 = vmul.f32 %v458, 1.442695
      %v460 = vpow.pop %v459
      %v461 = vsel %vm408, %v460, 0.0
      %462 = vadd.xlane.f32.xlu0 %v461
      %v463 = vpop.xlane.xlu0 %462
      %v464 = vrcp.pop %v463
      %v465 = vmul.f32 %v460, %v464
      %v466 = vpack.c.bf16 %v465, %v465
      %v469 = vunpack.c.l.s4 1983009808
      %v470 = vunpack.c.0.s8 %v469
      %v471 = vlaneseq
      %v472 = vshrl.u32 %v471, 7
      %v473 = vsub.s32 %v470, %v472
      %v474 = vrot.slane %v403, %v473
      %475 = vrot.lane.b32.xlu0 %v474, 96
      %v476 = vpop.permute.xlu0 %475
      %v478 = vsel %vm408, %v466, 0
      %vm480 = vcmask 1041408
      %v482 = vsel %vm480, %v476, 0
      %484 = vmatprep.subr.bf16.mxu0 0
      %485 = vmatpush1.bf16.msra.mxu0 %v482
      %486 = vmatprep.subr.bf16.mxu0 0
      %487 = vmatpush1.bf16.msra.mxu0 0
      %488 = vmatprep.subr.bf16.mxu0 0
      %489 = vmatpush1.bf16.msra.mxu0 0
      %490 = vmatprep.subr.bf16.mxu0 0
      %491 = vmatpush1.bf16.msra.mxu0 0
      %492 = vmatprep.subr.bf16.mxu0 0
      %493 = vmatpush1.bf16.msra.mxu0 0
      %494 = vmatprep.subr.bf16.mxu0 0
      %495 = vmatpush1.bf16.msra.mxu0 0
      %496 = vmatprep.subr.bf16.mxu0 0
      %497 = vmatpush1.bf16.msra.mxu0 0
      %498 = vmatprep.subr.bf16.mxu0 0
      %499 = vmatpush1.bf16.msra.mxu0 0
      %500 = vmatprep.subr.bf16.mxu0 0
      %501 = vmatpush1.bf16.msra.mxu0 0
      %502 = vmatprep.subr.bf16.mxu0 0
      %503 = vmatpush1.bf16.msra.mxu0 0
      %504 = vmatprep.subr.bf16.mxu0 0
      %505 = vmatpush1.bf16.msra.mxu0 0
      %506 = vmatprep.subr.bf16.mxu0 0
      %507 = vmatpush1.bf16.msra.mxu0 0
      %508 = vmatprep.subr.bf16.mxu0 0
      %509 = vmatpush1.bf16.msra.mxu0 0
      %510 = vmatprep.subr.bf16.mxu0 0
      %511 = vmatpush1.bf16.msra.mxu0 0
      %512 = vmatprep.subr.bf16.mxu0 0
      %513 = vmatpush1.bf16.msra.mxu0 0
      %514 = vmatprep.subr.bf16.mxu0 0
      %515 = vmatpush1.bf16.msra.mxu0 0
      %516 = vmatprep.mubr.bf16.mxu0 0
      %517 = vmatmul.mubr.bf16.gmra.mrb[0].mxu0 %v478
      %v518 = vpop.f32.mrb[0].mxu0
      %v519 = vadd.f32 0.0, %v518
      %v520 = vpop.f32.mrb[0].mxu0
      %v521 = vpop.f32.mrb[0].mxu0
      %v522 = vpop.f32.mrb[0].mxu0
      %523 = vdwg.mxu0
      %v524 = vpack.c.bf16 %v519, %v519
      %526 = vrot.lane.b32.xlu0 %v402, 124
      %v527 = vpop.permute.xlu0 %526
      %528 = vrot.lane.b32.xlu0 %v474, 124
      %v529 = vpop.permute.xlu0 %528
      %v531 = vsel %vm408, %v527, 0
      %v534 = vsel %vm408, %v529, 0
      %536 = vmatprep.subr.bf16.mxu0 0
      %537 = vmatpush1.bf16.xpose.msra.mxu0 %v534
      %538 = vmatprep.subr.bf16.mxu0 0
      %539 = vmatpush1.bf16.xpose.msra.mxu0 0
      %540 = vmatprep.subr.bf16.mxu0 0
      %541 = vmatpush1.bf16.xpose.msra.mxu0 0
      %542 = vmatprep.subr.bf16.mxu0 0
      %543 = vmatpush1.bf16.xpose.msra.mxu0 0
      %544 = vmatprep.subr.bf16.mxu0 0
      %545 = vmatpush1.bf16.xpose.msra.mxu0 0
      %546 = vmatprep.subr.bf16.mxu0 0
      %547 = vmatpush1.bf16.xpose.msra.mxu0 0
      %548 = vmatprep.subr.bf16.mxu0 0
      %549 = vmatpush1.bf16.xpose.msra.mxu0 0
      %550 = vmatprep.subr.bf16.mxu0 0
      %551 = vmatpush1.bf16.xpose.msra.mxu0 0
      %552 = vmatprep.subr.bf16.mxu0 0
      %553 = vmatpush1.bf16.xpose.msra.mxu0 0
      %554 = vmatprep.subr.bf16.mxu0 0
      %555 = vmatpush1.bf16.xpose.msra.mxu0 0
      %556 = vmatprep.subr.bf16.mxu0 0
      %557 = vmatpush1.bf16.xpose.msra.mxu0 0
      %558 = vmatprep.subr.bf16.mxu0 0
      %559 = vmatpush1.bf16.xpose.msra.mxu0 0
      %560 = vmatprep.subr.bf16.mxu0 0
      %561 = vmatpush1.bf16.xpose.msra.mxu0 0
      %562 = vmatprep.subr.bf16.mxu0 0
      %563 = vmatpush1.bf16.xpose.msra.mxu0 0
      %564 = vmatprep.subr.bf16.mxu0 0
      %565 = vmatpush1.bf16.xpose.msra.mxu0 0
      %566 = vmatprep.subr.bf16.mxu0 0
      %567 = vmatpush1.bf16.xpose.msra.mxu0 0
      %568 = vmatprep.mubr.bf16.mxu0 0
      %569 = vmatmul.mubr.bf16.gmra.mrb[0].mxu0 %v531
      %v570 = vpop.f32.mrb[0].mxu0
      %v571 = vadd.f32 0.0, %v570
      %v572 = vpop.f32.mrb[0].mxu0
      %v573 = vpop.f32.mrb[0].mxu0
      %v574 = vpop.f32.mrb[0].mxu0
      %575 = vdwg.mxu0
      %v576 = vsel %vm408, %v571, -inf
      %577 = vmax.xlane.f32.xlu0 %v576
      %v578 = vpop.xlane.xlu0 %577
      %v579 = vsub.f32 %v571, %v578
      %v580 = vmul.f32 %v579, 1.442695
      %v581 = vpow.pop %v580
      %v582 = vsel %vm408, %v581, 0.0
      %583 = vadd.xlane.f32.xlu0 %v582
      %v584 = vpop.xlane.xlu0 %583
      %v585 = vrcp.pop %v584
      %v586 = vmul.f32 %v581, %v585
      %v587 = vpack.c.bf16 %v586, %v586
      %588 = vrot.lane.b32.xlu0 %v474, 92
      %v589 = vpop.permute.xlu0 %588
      %v591 = vsel %vm408, %v587, 0
      %v594 = vsel %vm480, %v589, 0
      %596 = vmatprep.subr.bf16.mxu0 0
      %597 = vmatpush1.bf16.msra.mxu0 %v594
      %598 = vmatprep.subr.bf16.mxu0 0
      %599 = vmatpush1.bf16.msra.mxu0 0
      %600 = vmatprep.subr.bf16.mxu0 0
      %601 = vmatpush1.bf16.msra.mxu0 0
      %602 = vmatprep.subr.bf16.mxu0 0
      %603 = vmatpush1.bf16.msra.mxu0 0
      %604 = vmatprep.subr.bf16.mxu0 0
      %605 = vmatpush1.bf16.msra.mxu0 0
      %606 = vmatprep.subr.bf16.mxu0 0
      %607 = vmatpush1.bf16.msra.mxu0 0
      %608 = vmatprep.subr.bf16.mxu0 0
      %609 = vmatpush1.bf16.msra.mxu0 0
      %610 = vmatprep.subr.bf16.mxu0 0
      %611 = vmatpush1.bf16.msra.mxu0 0
      %612 = vmatprep.subr.bf16.mxu0 0
      %613 = vmatpush1.bf16.msra.mxu0 0
      %614 = vmatprep.subr.bf16.mxu0 0
      %615 = vmatpush1.bf16.msra.mxu0 0
      %616 = vmatprep.subr.bf16.mxu0 0
      %617 = vmatpush1.bf16.msra.mxu0 0
      %618 = vmatprep.subr.bf16.mxu0 0
      %619 = vmatpush1.bf16.msra.mxu0 0
      %620 = vmatprep.subr.bf16.mxu0 0
      %621 = vmatpush1.bf16.msra.mxu0 0
      %622 = vmatprep.subr.bf16.mxu0 0
      %623 = vmatpush1.bf16.msra.mxu0 0
      %624 = vmatprep.subr.bf16.mxu0 0
      %625 = vmatpush1.bf16.msra.mxu0 0
      %626 = vmatprep.subr.bf16.mxu0 0
      %627 = vmatpush1.bf16.msra.mxu0 0
      %628 = vmatprep.mubr.bf16.mxu0 0
      %629 = vmatmul.mubr.bf16.gmra.mrb[0].mxu0 %v591
      %v630 = vpop.f32.mrb[0].mxu0
      %v631 = vadd.f32 0.0, %v630
      %v632 = vpop.f32.mrb[0].mxu0
      %v633 = vpop.f32.mrb[0].mxu0
      %v634 = vpop.f32.mrb[0].mxu0
      %635 = vdwg.mxu0
      %v636 = vpack.c.bf16 %v631, %v631
      %v638 = vunpack.c.l.b16 %v404
      %v639 = vpack.c.b16 %v638, %v638
      %v640 = vrot.slane %v639, 2
      %v642 = vsel %vm408, %v636, 0
      %v645 = vsel %vm480, %v640, 0
      %647 = vmatprep.subr.bf16.mxu0 0
      %648 = vmatpush1.bf16.msra.mxu0 %v645
      %649 = vmatprep.subr.bf16.mxu0 0
      %650 = vmatpush1.bf16.msra.mxu0 0
      %651 = vmatprep.subr.bf16.mxu0 0
      %652 = vmatpush1.bf16.msra.mxu0 0
      %653 = vmatprep.subr.bf16.mxu0 0
      %654 = vmatpush1.bf16.msra.mxu0 0
      %655 = vmatprep.subr.bf16.mxu0 0
      %656 = vmatpush1.bf16.msra.mxu0 0
      %657 = vmatprep.subr.bf16.mxu0 0
      %658 = vmatpush1.bf16.msra.mxu0 0
      %659 = vmatprep.subr.bf16.mxu0 0
      %660 = vmatpush1.bf16.msra.mxu0 0
      %661 = vmatprep.subr.bf16.mxu0 0
      %662 = vmatpush1.bf16.msra.mxu0 0
      %663 = vmatprep.subr.bf16.mxu0 0
      %664 = vmatpush1.bf16.msra.mxu0 0
      %665 = vmatprep.subr.bf16.mxu0 0
      %666 = vmatpush1.bf16.msra.mxu0 0
      %667 = vmatprep.subr.bf16.mxu0 0
      %668 = vmatpush1.bf16.msra.mxu0 0
      %669 = vmatprep.subr.bf16.mxu0 0
      %670 = vmatpush1.bf16.msra.mxu0 0
      %671 = vmatprep.subr.bf16.mxu0 0
      %672 = vmatpush1.bf16.msra.mxu0 0
      %673 = vmatprep.subr.bf16.mxu0 0
      %674 = vmatpush1.bf16.msra.mxu0 0
      %675 = vmatprep.subr.bf16.mxu0 0
      %676 = vmatpush1.bf16.msra.mxu0 0
      %677 = vmatprep.subr.bf16.mxu0 0
      %678 = vmatpush1.bf16.msra.mxu0 0
      %679 = vmatprep.mubr.bf16.mxu0 0
      %680 = vmatmul.mubr.bf16.gmra.mrb[0].mxu0 %v642
      %v681 = vpop.f32.mrb[0].mxu0
      %v682 = vadd.f32 0.0, %v681
      %v683 = vpop.f32.mrb[0].mxu0
      %v684 = vpop.f32.mrb[0].mxu0
      %v685 = vpop.f32.mrb[0].mxu0
      %686 = vdwg.mxu0
      %v688 = vsel %vm408, %v524, 0
      %v691 = vsel %vm480, %v404, 0
      %693 = vmatprep.subr.bf16.mxu0 0
      %694 = vmatpush1.bf16.msra.mxu0 %v691
      %695 = vmatprep.subr.bf16.mxu0 0
      %696 = vmatpush1.bf16.msra.mxu0 0
      %697 = vmatprep.subr.bf16.mxu0 0
      %698 = vmatpush1.bf16.msra.mxu0 0
      %699 = vmatprep.subr.bf16.mxu0 0
      %700 = vmatpush1.bf16.msra.mxu0 0
      %701 = vmatprep.subr.bf16.mxu0 0
      %702 = vmatpush1.bf16.msra.mxu0 0
      %703 = vmatprep.subr.bf16.mxu0 0
      %704 = vmatpush1.bf16.msra.mxu0 0
      %705 = vmatprep.subr.bf16.mxu0 0
      %706 = vmatpush1.bf16.msra.mxu0 0
      %707 = vmatprep.subr.bf16.mxu0 0
      %708 = vmatpush1.bf16.msra.mxu0 0
      %709 = vmatprep.subr.bf16.mxu0 0
      %710 = vmatpush1.bf16.msra.mxu0 0
      %711 = vmatprep.subr.bf16.mxu0 0
      %712 = vmatpush1.bf16.msra.mxu0 0
      %713 = vmatprep.subr.bf16.mxu0 0
      %714 = vmatpush1.bf16.msra.mxu0 0
      %715 = vmatprep.subr.bf16.mxu0 0
      %716 = vmatpush1.bf16.msra.mxu0 0
      %717 = vmatprep.subr.bf16.mxu0 0
      %718 = vmatpush1.bf16.msra.mxu0 0
      %719 = vmatprep.subr.bf16.mxu0 0
      %720 = vmatpush1.bf16.msra.mxu0 0
      %721 = vmatprep.subr.bf16.mxu0 0
      %722 = vmatpush1.bf16.msra.mxu0 0
      %723 = vmatprep.subr.bf16.mxu0 0
      %724 = vmatpush1.bf16.msra.mxu0 0
      %725 = vmatprep.mubr.bf16.mxu0 0
      %726 = vmatmul.mubr.bf16.gmra.mrb[0].mxu0 %v688
      %v727 = vpop.f32.mrb[0].mxu0
      %v728 = vadd.f32 %v682, %v727
      %v729 = vpop.f32.mrb[0].mxu0
      %v730 = vpop.f32.mrb[0].mxu0
      %v731 = vpop.f32.mrb[0].mxu0
      %732 = vdwg.mxu0
      %733 = vrot.lane.b32.xlu0 %v402, 120
      %v734 = vpop.permute.xlu0 %733
      %735 = vrot.lane.b32.xlu0 %v474, 120
      %v736 = vpop.permute.xlu0 %735
      %v738 = vsel %vm408, %v734, 0
      %v741 = vsel %vm408, %v736, 0
      %743 = vmatprep.subr.bf16.mxu0 0
      %744 = vmatpush1.bf16.xpose.msra.mxu0 %v741
      %745 = vmatprep.subr.bf16.mxu0 0
      %746 = vmatpush1.bf16.xpose.msra.mxu0 0
      %747 = vmatprep.subr.bf16.mxu0 0
      %748 = vmatpush1.bf16.xpose.msra.mxu0 0
      %749 = vmatprep.subr.bf16.mxu0 0
      %750 = vmatpush1.bf16.xpose.msra.mxu0 0
      %751 = vmatprep.subr.bf16.mxu0 0
      %752 = vmatpush1.bf16.xpose.msra.mxu0 0
      %753 = vmatprep.subr.bf16.mxu0 0
      %754 = vmatpush1.bf16.xpose.msra.mxu0 0
      %755 = vmatprep.subr.bf16.mxu0 0
      %756 = vmatpush1.bf16.xpose.msra.mxu0 0
      %757 = vmatprep.subr.bf16.mxu0 0
      %758 = vmatpush1.bf16.xpose.msra.mxu0 0
      %759 = vmatprep.subr.bf16.mxu0 0
      %760 = vmatpush1.bf16.xpose.msra.mxu0 0
      %761 = vmatprep.subr.bf16.mxu0 0
      %762 = vmatpush1.bf16.xpose.msra.mxu0 0
      %763 = vmatprep.subr.bf16.mxu0 0
      %764 = vmatpush1.bf16.xpose.msra.mxu0 0
      %765 = vmatprep.subr.bf16.mxu0 0
      %766 = vmatpush1.bf16.xpose.msra.mxu0 0
      %767 = vmatprep.subr.bf16.mxu0 0
      %768 = vmatpush1.bf16.xpose.msra.mxu0 0
      %769 = vmatprep.subr.bf16.mxu0 0
      %770 = vmatpush1.bf16.xpose.msra.mxu0 0
      %771 = vmatprep.subr.bf16.mxu0 0
      %772 = vmatpush1.bf16.xpose.msra.mxu0 0
      %773 = vmatprep.subr.bf16.mxu0 0
      %774 = vmatpush1.bf16.xpose.msra.mxu0 0
      %775 = vmatprep.mubr.bf16.mxu0 0
      %776 = vmatmul.mubr.bf16.gmra.mrb[0].mxu0 %v738
      %v777 = vpop.f32.mrb[0].mxu0
      %v778 = vadd.f32 0.0, %v777
      %v779 = vpop.f32.mrb[0].mxu0
      %v780 = vpop.f32.mrb[0].mxu0
      %v781 = vpop.f32.mrb[0].mxu0
      %782 = vdwg.mxu0
      %v783 = vsel %vm408, %v778, -inf
      %784 = vmax.xlane.f32.xlu0 %v783
      %v785 = vpop.xlane.xlu0 %784
      %v786 = vsub.f32 %v778, %v785
      %v787 = vmul.f32 %v786, 1.442695
      %v788 = vpow.pop %v787
      %v789 = vsel %vm408, %v788, 0.0
      %790 = vadd.xlane.f32.xlu0 %v789
      %v791 = vpop.xlane.xlu0 %790
      %v792 = vrcp.pop %v791
      %v793 = vmul.f32 %v788, %v792
      %v794 = vpack.c.bf16 %v793, %v793
      %795 = vrot.lane.b32.xlu0 %v474, 88
      %v796 = vpop.permute.xlu0 %795
      %v798 = vsel %vm408, %v794, 0
      %v801 = vsel %vm480, %v796, 0
      %803 = vmatprep.subr.bf16.mxu0 0
      %804 = vmatpush1.bf16.msra.mxu0 %v801
      %805 = vmatprep.subr.bf16.mxu0 0
      %806 = vmatpush1.bf16.msra.mxu0 0
      %807 = vmatprep.subr.bf16.mxu0 0
      %808 = vmatpush1.bf16.msra.mxu0 0
      %809 = vmatprep.subr.bf16.mxu0 0
      %810 = vmatpush1.bf16.msra.mxu0 0
      %811 = vmatprep.subr.bf16.mxu0 0
      %812 = vmatpush1.bf16.msra.mxu0 0
      %813 = vmatprep.subr.bf16.mxu0 0
      %814 = vmatpush1.bf16.msra.mxu0 0
      %815 = vmatprep.subr.bf16.mxu0 0
      %816 = vmatpush1.bf16.msra.mxu0 0
      %817 = vmatprep.subr.bf16.mxu0 0
      %818 = vmatpush1.bf16.msra.mxu0 0
      %819 = vmatprep.subr.bf16.mxu0 0
      %820 = vmatpush1.bf16.msra.mxu0 0
      %821 = vmatprep.subr.bf16.mxu0 0
      %822 = vmatpush1.bf16.msra.mxu0 0
      %823 = vmatprep.subr.bf16.mxu0 0
      %824 = vmatpush1.bf16.msra.mxu0 0
      %825 = vmatprep.subr.bf16.mxu0 0
      %826 = vmatpush1.bf16.msra.mxu0 0
      %827 = vmatprep.subr.bf16.mxu0 0
      %828 = vmatpush1.bf16.msra.mxu0 0
      %829 = vmatprep.subr.bf16.mxu0 0
      %830 = vmatpush1.bf16.msra.mxu0 0
      %831 = vmatprep.subr.bf16.mxu0 0
      %832 = vmatpush1.bf16.msra.mxu0 0
      %833 = vmatprep.subr.bf16.mxu0 0
      %834 = vmatpush1.bf16.msra.mxu0 0
      %835 = vmatprep.mubr.bf16.mxu0 0
      %836 = vmatmul.mubr.bf16.gmra.mrb[0].mxu0 %v798
      %v837 = vpop.f32.mrb[0].mxu0
      %v838 = vadd.f32 0.0, %v837
      %v839 = vpop.f32.mrb[0].mxu0
      %v840 = vpop.f32.mrb[0].mxu0
      %v841 = vpop.f32.mrb[0].mxu0
      %842 = vdwg.mxu0
      %v843 = vpack.c.bf16 %v838, %v838
      %v845 = vsel %vm408, %v843, 0
      %v848 = vsel %vm480, %v405, 0
      %850 = vmatprep.subr.bf16.mxu0 0
      %851 = vmatpush1.bf16.msra.mxu0 %v848
      %852 = vmatprep.subr.bf16.mxu0 0
      %853 = vmatpush1.bf16.msra.mxu0 0
      %854 = vmatprep.subr.bf16.mxu0 0
      %855 = vmatpush1.bf16.msra.mxu0 0
      %856 = vmatprep.subr.bf16.mxu0 0
      %857 = vmatpush1.bf16.msra.mxu0 0
      %858 = vmatprep.subr.bf16.mxu0 0
      %859 = vmatpush1.bf16.msra.mxu0 0
      %860 = vmatprep.subr.bf16.mxu0 0
      %861 = vmatpush1.bf16.msra.mxu0 0
      %862 = vmatprep.subr.bf16.mxu0 0
      %863 = vmatpush1.bf16.msra.mxu0 0
      %864 = vmatprep.subr.bf16.mxu0 0
      %865 = vmatpush1.bf16.msra.mxu0 0
      %866 = vmatprep.subr.bf16.mxu0 0
      %867 = vmatpush1.bf16.msra.mxu0 0
      %868 = vmatprep.subr.bf16.mxu0 0
      %869 = vmatpush1.bf16.msra.mxu0 0
      %870 = vmatprep.subr.bf16.mxu0 0
      %871 = vmatpush1.bf16.msra.mxu0 0
      %872 = vmatprep.subr.bf16.mxu0 0
      %873 = vmatpush1.bf16.msra.mxu0 0
      %874 = vmatprep.subr.bf16.mxu0 0
      %875 = vmatpush1.bf16.msra.mxu0 0
      %876 = vmatprep.subr.bf16.mxu0 0
      %877 = vmatpush1.bf16.msra.mxu0 0
      %878 = vmatprep.subr.bf16.mxu0 0
      %879 = vmatpush1.bf16.msra.mxu0 0
      %880 = vmatprep.subr.bf16.mxu0 0
      %881 = vmatpush1.bf16.msra.mxu0 0
      %882 = vmatprep.mubr.bf16.mxu0 0
      %883 = vmatmul.mubr.bf16.gmra.mrb[0].mxu0 %v845
      %v884 = vpop.f32.mrb[0].mxu0
      %v885 = vadd.f32 0.0, %v884
      %v886 = vpop.f32.mrb[0].mxu0
      %v887 = vpop.f32.mrb[0].mxu0
      %v888 = vpop.f32.mrb[0].mxu0
      %889 = vdwg.mxu0
      %v890 = vadd.f32 %v728, %v885
      %891 = vrot.lane.b32.xlu0 %v402, 116
      %v892 = vpop.permute.xlu0 %891
      %893 = vrot.lane.b32.xlu0 %v474, 116
      %v894 = vpop.permute.xlu0 %893
      %v896 = vsel %vm408, %v892, 0
      %v899 = vsel %vm408, %v894, 0
      %901 = vmatprep.subr.bf16.mxu0 0
      %902 = vmatpush1.bf16.xpose.msra.mxu0 %v899
      %903 = vmatprep.subr.bf16.mxu0 0
      %904 = vmatpush1.bf16.xpose.msra.mxu0 0
      %905 = vmatprep.subr.bf16.mxu0 0
      %906 = vmatpush1.bf16.xpose.msra.mxu0 0
      %907 = vmatprep.subr.bf16.mxu0 0
      %908 = vmatpush1.bf16.xpose.msra.mxu0 0
      %909 = vmatprep.subr.bf16.mxu0 0
      %910 = vmatpush1.bf16.xpose.msra.mxu0 0
      %911 = vmatprep.subr.bf16.mxu0 0
      %912 = vmatpush1.bf16.xpose.msra.mxu0 0
      %913 = vmatprep.subr.bf16.mxu0 0
      %914 = vmatpush1.bf16.xpose.msra.mxu0 0
      %915 = vmatprep.subr.bf16.mxu0 0
      %916 = vmatpush1.bf16.xpose.msra.mxu0 0
      %917 = vmatprep.subr.bf16.mxu0 0
      %918 = vmatpush1.bf16.xpose.msra.mxu0 0
      %919 = vmatprep.subr.bf16.mxu0 0
      %920 = vmatpush1.bf16.xpose.msra.mxu0 0
      %921 = vmatprep.subr.bf16.mxu0 0
      %922 = vmatpush1.bf16.xpose.msra.mxu0 0
      %923 = vmatprep.subr.bf16.mxu0 0
      %924 = vmatpush1.bf16.xpose.msra.mxu0 0
      %925 = vmatprep.subr.bf16.mxu0 0
      %926 = vmatpush1.bf16.xpose.msra.mxu0 0
      %927 = vmatprep.subr.bf16.mxu0 0
      %928 = vmatpush1.bf16.xpose.msra.mxu0 0
      %929 = vmatprep.subr.bf16.mxu0 0
      %930 = vmatpush1.bf16.xpose.msra.mxu0 0
      %931 = vmatprep.subr.bf16.mxu0 0
      %932 = vmatpush1.bf16.xpose.msra.mxu0 0
      %933 = vmatprep.mubr.bf16.mxu0 0
      %934 = vmatmul.mubr.bf16.gmra.mrb[0].mxu0 %v896
      %v935 = vpop.f32.mrb[0].mxu0
      %v936 = vadd.f32 0.0, %v935
      %v937 = vpop.f32.mrb[0].mxu0
      %v938 = vpop.f32.mrb[0].mxu0
      %v939 = vpop.f32.mrb[0].mxu0
      %940 = vdwg.mxu0
      %v941 = vsel %vm408, %v936, -inf
      %942 = vmax.xlane.f32.xlu0 %v941
      %v943 = vpop.xlane.xlu0 %942
      %v944 = vsub.f32 %v936, %v943
      %v945 = vmul.f32 %v944, 1.442695
      %v946 = vpow.pop %v945
      %v947 = vsel %vm408, %v946, 0.0
      %948 = vadd.xlane.f32.xlu0 %v947
      %v949 = vpop.xlane.xlu0 %948
      %v950 = vrcp.pop %v949
      %v951 = vmul.f32 %v946, %v950
      %v952 = vpack.c.bf16 %v951, %v951
      %953 = vrot.lane.b32.xlu0 %v474, 84
      %v954 = vpop.permute.xlu0 %953
      %v956 = vsel %vm408, %v952, 0
      %v959 = vsel %vm480, %v954, 0
      %961 = vmatprep.subr.bf16.mxu0 0
      %962 = vmatpush1.bf16.msra.mxu0 %v959
      %963 = vmatprep.subr.bf16.mxu0 0
      %964 = vmatpush1.bf16.msra.mxu0 0
      %965 = vmatprep.subr.bf16.mxu0 0
      %966 = vmatpush1.bf16.msra.mxu0 0
      %967 = vmatprep.subr.bf16.mxu0 0
      %968 = vmatpush1.bf16.msra.mxu0 0
      %969 = vmatprep.subr.bf16.mxu0 0
      %970 = vmatpush1.bf16.msra.mxu0 0
      %971 = vmatprep.subr.bf16.mxu0 0
      %972 = vmatpush1.bf16.msra.mxu0 0
      %973 = vmatprep.subr.bf16.mxu0 0
      %974 = vmatpush1.bf16.msra.mxu0 0
      %975 = vmatprep.subr.bf16.mxu0 0
      %976 = vmatpush1.bf16.msra.mxu0 0
      %977 = vmatprep.subr.bf16.mxu0 0
      %978 = vmatpush1.bf16.msra.mxu0 0
      %979 = vmatprep.subr.bf16.mxu0 0
      %980 = vmatpush1.bf16.msra.mxu0 0
      %981 = vmatprep.subr.bf16.mxu0 0
      %982 = vmatpush1.bf16.msra.mxu0 0
      %983 = vmatprep.subr.bf16.mxu0 0
      %984 = vmatpush1.bf16.msra.mxu0 0
      %985 = vmatprep.subr.bf16.mxu0 0
      %986 = vmatpush1.bf16.msra.mxu0 0
      %987 = vmatprep.subr.bf16.mxu0 0
      %988 = vmatpush1.bf16.msra.mxu0 0
      %989 = vmatprep.subr.bf16.mxu0 0
      %990 = vmatpush1.bf16.msra.mxu0 0
      %991 = vmatprep.subr.bf16.mxu0 0
      %992 = vmatpush1.bf16.msra.mxu0 0
      %993 = vmatprep.mubr.bf16.mxu0 0
      %994 = vmatmul.mubr.bf16.gmra.mrb[0].mxu0 %v956
      %v995 = vpop.f32.mrb[0].mxu0
      %v996 = vadd.f32 0.0, %v995
      %v997 = vpop.f32.mrb[0].mxu0
      %v998 = vpop.f32.mrb[0].mxu0
      %v999 = vpop.f32.mrb[0].mxu0
      %1000 = vdwg.mxu0
      %v1001 = vpack.c.bf16 %v996, %v996
      %v1003 = vunpack.c.l.b16 %v405
      %v1004 = vpack.c.b16 %v1003, %v1003
      %v1005 = vrot.slane %v1004, 2
      %v1007 = vsel %vm408, %v1001, 0
      %v1010 = vsel %vm480, %v1005, 0
      %1012 = vmatprep.subr.bf16.mxu0 0
      %1013 = vmatpush1.bf16.msra.mxu0 %v1010
      %1014 = vmatprep.subr.bf16.mxu0 0
      %1015 = vmatpush1.bf16.msra.mxu0 0
      %1016 = vmatprep.subr.bf16.mxu0 0
      %1017 = vmatpush1.bf16.msra.mxu0 0
      %1018 = vmatprep.subr.bf16.mxu0 0
      %1019 = vmatpush1.bf16.msra.mxu0 0
      %1020 = vmatprep.subr.bf16.mxu0 0
      %1021 = vmatpush1.bf16.msra.mxu0 0
      %1022 = vmatprep.subr.bf16.mxu0 0
      %1023 = vmatpush1.bf16.msra.mxu0 0
      %1024 = vmatprep.subr.bf16.mxu0 0
      %1025 = vmatpush1.bf16.msra.mxu0 0
      %1026 = vmatprep.subr.bf16.mxu0 0
      %1027 = vmatpush1.bf16.msra.mxu0 0
      %1028 = vmatprep.subr.bf16.mxu0 0
      %1029 = vmatpush1.bf16.msra.mxu0 0
      %1030 = vmatprep.subr.bf16.mxu0 0
      %1031 = vmatpush1.bf16.msra.mxu0 0
      %1032 = vmatprep.subr.bf16.mxu0 0
      %1033 = vmatpush1.bf16.msra.mxu0 0
      %1034 = vmatprep.subr.bf16.mxu0 0
      %1035 = vmatpush1.bf16.msra.mxu0 0
      %1036 = vmatprep.subr.bf16.mxu0 0
      %1037 = vmatpush1.bf16.msra.mxu0 0
      %1038 = vmatprep.subr.bf16.mxu0 0
      %1039 = vmatpush1.bf16.msra.mxu0 0
      %1040 = vmatprep.subr.bf16.mxu0 0
      %1041 = vmatpush1.bf16.msra.mxu0 0
      %1042 = vmatprep.subr.bf16.mxu0 0
      %1043 = vmatpush1.bf16.msra.mxu0 0
      %1044 = vmatprep.mubr.bf16.mxu0 0
      %1045 = vmatmul.mubr.bf16.gmra.mrb[0].mxu0 %v1007
      %v1046 = vpop.f32.mrb[0].mxu0
      %v1047 = vadd.f32 0.0, %v1046
      %v1048 = vpop.f32.mrb[0].mxu0
      %v1049 = vpop.f32.mrb[0].mxu0
      %v1050 = vpop.f32.mrb[0].mxu0
      %1051 = vdwg.mxu0
      %v1052 = vadd.f32 %v890, %v1047
      %1053 = vrot.lane.b32.xlu0 %v402, 112
      %v1054 = vpop.permute.xlu0 %1053
      %1055 = vrot.lane.b32.xlu0 %v474, 112
      %v1056 = vpop.permute.xlu0 %1055
      %v1058 = vsel %vm408, %v1054, 0
      %v1061 = vsel %vm408, %v1056, 0
      %1063 = vmatprep.subr.bf16.mxu0 0
      %1064 = vmatpush1.bf16.xpose.msra.mxu0 %v1061
      %1065 = vmatprep.subr.bf16.mxu0 0
      %1066 = vmatpush1.bf16.xpose.msra.mxu0 0
      %1067 = vmatprep.subr.bf16.mxu0 0
      %1068 = vmatpush1.bf16.xpose.msra.mxu0 0
      %1069 = vmatprep.subr.bf16.mxu0 0
      %1070 = vmatpush1.bf16.xpose.msra.mxu0 0
      %1071 = vmatprep.subr.bf16.mxu0 0
      %1072 = vmatpush1.bf16.xpose.msra.mxu0 0
      %1073 = vmatprep.subr.bf16.mxu0 0
      %1074 = vmatpush1.bf16.xpose.msra.mxu0 0
      %1075 = vmatprep.subr.bf16.mxu0 0
      %1076 = vmatpush1.bf16.xpose.msra.mxu0 0
      %1077 = vmatprep.subr.bf16.mxu0 0
      %1078 = vmatpush1.bf16.xpose.msra.mxu0 0
      %1079 = vmatprep.subr.bf16.mxu0 0
      %1080 = vmatpush1.bf16.xpose.msra.mxu0 0
      %1081 = vmatprep.subr.bf16.mxu0 0
      %1082 = vmatpush1.bf16.xpose.msra.mxu0 0
      %1083 = vmatprep.subr.bf16.mxu0 0
      %1084 = vmatpush1.bf16.xpose.msra.mxu0 0
      %1085 = vmatprep.subr.bf16.mxu0 0
      %1086 = vmatpush1.bf16.xpose.msra.mxu0 0
      %1087 = vmatprep.subr.bf16.mxu0 0
      %1088 = vmatpush1.bf16.xpose.msra.mxu0 0
      %1089 = vmatprep.subr.bf16.mxu0 0
      %1090 = vmatpush1.bf16.xpose.msra.mxu0 0
      %1091 = vmatprep.subr.bf16.mxu0 0
      %1092 = vmatpush1.bf16.xpose.msra.mxu0 0
      %1093 = vmatprep.subr.bf16.mxu0 0
      %1094 = vmatpush1.bf16.xpose.msra.mxu0 0
      %1095 = vmatprep.mubr.bf16.mxu0 0
      %1096 = vmatmul.mubr.bf16.gmra.mrb[0].mxu0 %v1058
      %v1097 = vpop.f32.mrb[0].mxu0
      %v1098 = vadd.f32 0.0, %v1097
      %v1099 = vpop.f32.mrb[0].mxu0
      %v1100 = vpop.f32.mrb[0].mxu0
      %v1101 = vpop.f32.mrb[0].mxu0
      %1102 = vdwg.mxu0
      %v1103 = vsel %vm408, %v1098, -inf
      %1104 = vmax.xlane.f32.xlu0 %v1103
      %v1105 = vpop.xlane.xlu0 %1104
      %v1106 = vsub.f32 %v1098, %v1105
      %v1107 = vmul.f32 %v1106, 1.442695
      %v1108 = vpow.pop %v1107
      %v1109 = vsel %vm408, %v1108, 0.0
      %1110 = vadd.xlane.f32.xlu0 %v1109
      %v1111 = vpop.xlane.xlu0 %1110
      %v1112 = vrcp.pop %v1111
      %v1113 = vmul.f32 %v1108, %v1112
      %v1114 = vpack.c.bf16 %v1113, %v1113
      %1115 = vrot.lane.b32.xlu0 %v474, 80
      %v1116 = vpop.permute.xlu0 %1115
      %v1118 = vsel %vm408, %v1114, 0
      %v1121 = vsel %vm480, %v1116, 0
      %1123 = vmatprep.subr.bf16.mxu0 0
      %1124 = vmatpush1.bf16.msra.mxu0 %v1121
      %1125 = vmatprep.subr.bf16.mxu0 0
      %1126 = vmatpush1.bf16.msra.mxu0 0
      %1127 = vmatprep.subr.bf16.mxu0 0
      %1128 = vmatpush1.bf16.msra.mxu0 0
      %1129 = vmatprep.subr.bf16.mxu0 0
      %1130 = vmatpush1.bf16.msra.mxu0 0
      %1131 = vmatprep.subr.bf16.mxu0 0
      %1132 = vmatpush1.bf16.msra.mxu0 0
      %1133 = vmatprep.subr.bf16.mxu0 0
      %1134 = vmatpush1.bf16.msra.mxu0 0
      %1135 = vmatprep.subr.bf16.mxu0 0
      %1136 = vmatpush1.bf16.msra.mxu0 0
      %1137 = vmatprep.subr.bf16.mxu0 0
      %1138 = vmatpush1.bf16.msra.mxu0 0
      %1139 = vmatprep.subr.bf16.mxu0 0
      %1140 = vmatpush1.bf16.msra.mxu0 0
      %1141 = vmatprep.subr.bf16.mxu0 0
      %1142 = vmatpush1.bf16.msra.mxu0 0
      %1143 = vmatprep.subr.bf16.mxu0 0
      %1144 = vmatpush1.bf16.msra.mxu0 0
      %1145 = vmatprep.subr.bf16.mxu0 0
      %1146 = vmatpush1.bf16.msra.mxu0 0
      %1147 = vmatprep.subr.bf16.mxu0 0
      %1148 = vmatpush1.bf16.msra.mxu0 0
      %1149 = vmatprep.subr.bf16.mxu0 0
      %1150 = vmatpush1.bf16.msra.mxu0 0
      %1151 = vmatprep.subr.bf16.mxu0 0
      %1152 = vmatpush1.bf16.msra.mxu0 0
      %1153 = vmatprep.subr.bf16.mxu0 0
      %1154 = vmatpush1.bf16.msra.mxu0 0
      %1155 = vmatprep.mubr.bf16.mxu0 0
      %1156 = vmatmul.mubr.bf16.gmra.mrb[0].mxu0 %v1118
      %v1157 = vpop.f32.mrb[0].mxu0
      %v1158 = vadd.f32 0.0, %v1157
      %v1159 = vpop.f32.mrb[0].mxu0
      %v1160 = vpop.f32.mrb[0].mxu0
      %v1161 = vpop.f32.mrb[0].mxu0
      %1162 = vdwg.mxu0
      %v1163 = vpack.c.bf16 %v1158, %v1158
      %v1165 = vsel %vm408, %v1163, 0
      %v1168 = vsel %vm480, %v406, 0
      %1170 = vmatprep.subr.bf16.mxu0 0
      %1171 = vmatpush1.bf16.msra.mxu0 %v1168
      %1172 = vmatprep.subr.bf16.mxu0 0
      %1173 = vmatpush1.bf16.msra.mxu0 0
      %1174 = vmatprep.subr.bf16.mxu0 0
      %1175 = vmatpush1.bf16.msra.mxu0 0
      %1176 = vmatprep.subr.bf16.mxu0 0
      %1177 = vmatpush1.bf16.msra.mxu0 0
      %1178 = vmatprep.subr.bf16.mxu0 0
      %1179 = vmatpush1.bf16.msra.mxu0 0
      %1180 = vmatprep.subr.bf16.mxu0 0
      %1181 = vmatpush1.bf16.msra.mxu0 0
      %1182 = vmatprep.subr.bf16.mxu0 0
      %1183 = vmatpush1.bf16.msra.mxu0 0
      %1184 = vmatprep.subr.bf16.mxu0 0
      %1185 = vmatpush1.bf16.msra.mxu0 0
      %1186 = vmatprep.subr.bf16.mxu0 0
      %1187 = vmatpush1.bf16.msra.mxu0 0
      %1188 = vmatprep.subr.bf16.mxu0 0
      %1189 = vmatpush1.bf16.msra.mxu0 0
      %1190 = vmatprep.subr.bf16.mxu0 0
      %1191 = vmatpush1.bf16.msra.mxu0 0
      %1192 = vmatprep.subr.bf16.mxu0 0
      %1193 = vmatpush1.bf16.msra.mxu0 0
      %1194 = vmatprep.subr.bf16.mxu0 0
      %1195 = vmatpush1.bf16.msra.mxu0 0
      %1196 = vmatprep.subr.bf16.mxu0 0
      %1197 = vmatpush1.bf16.msra.mxu0 0
      %1198 = vmatprep.subr.bf16.mxu0 0
      %1199 = vmatpush1.bf16.msra.mxu0 0
      %1200 = vmatprep.subr.bf16.mxu0 0
      %1201 = vmatpush1.bf16.msra.mxu0 0
      %1202 = vmatprep.mubr.bf16.mxu0 0
      %1203 = vmatmul.mubr.bf16.gmra.mrb[0].mxu0 %v1165
      %v1204 = vpop.f32.mrb[0].mxu0
      %v1205 = vadd.f32 0.0, %v1204
      %v1206 = vpop.f32.mrb[0].mxu0
      %v1207 = vpop.f32.mrb[0].mxu0
      %v1208 = vpop.f32.mrb[0].mxu0
      %1209 = vdwg.mxu0
      %v1210 = vadd.f32 %v1052, %v1205
      %1211 = vrot.lane.b32.xlu0 %v402, 108
      %v1212 = vpop.permute.xlu0 %1211
      %1213 = vrot.lane.b32.xlu0 %v474, 108
      %v1214 = vpop.permute.xlu0 %1213
      %v1216 = vsel %vm408, %v1212, 0
      %v1219 = vsel %vm408, %v1214, 0
      %1221 = vmatprep.subr.bf16.mxu0 0
      %1222 = vmatpush1.bf16.xpose.msra.mxu0 %v1219
      %1223 = vmatprep.subr.bf16.mxu0 0
      %1224 = vmatpush1.bf16.xpose.msra.mxu0 0
      %1225 = vmatprep.subr.bf16.mxu0 0
      %1226 = vmatpush1.bf16.xpose.msra.mxu0 0
      %1227 = vmatprep.subr.bf16.mxu0 0
      %1228 = vmatpush1.bf16.xpose.msra.mxu0 0
      %1229 = vmatprep.subr.bf16.mxu0 0
      %1230 = vmatpush1.bf16.xpose.msra.mxu0 0
      %1231 = vmatprep.subr.bf16.mxu0 0
      %1232 = vmatpush1.bf16.xpose.msra.mxu0 0
      %1233 = vmatprep.subr.bf16.mxu0 0
      %1234 = vmatpush1.bf16.xpose.msra.mxu0 0
      %1235 = vmatprep.subr.bf16.mxu0 0
      %1236 = vmatpush1.bf16.xpose.msra.mxu0 0
      %1237 = vmatprep.subr.bf16.mxu0 0
      %1238 = vmatpush1.bf16.xpose.msra.mxu0 0
      %1239 = vmatprep.subr.bf16.mxu0 0
      %1240 = vmatpush1.bf16.xpose.msra.mxu0 0
      %1241 = vmatprep.subr.bf16.mxu0 0
      %1242 = vmatpush1.bf16.xpose.msra.mxu0 0
      %1243 = vmatprep.subr.bf16.mxu0 0
      %1244 = vmatpush1.bf16.xpose.msra.mxu0 0
      %1245 = vmatprep.subr.bf16.mxu0 0
      %1246 = vmatpush1.bf16.xpose.msra.mxu0 0
      %1247 = vmatprep.subr.bf16.mxu0 0
      %1248 = vmatpush1.bf16.xpose.msra.mxu0 0
      %1249 = vmatprep.subr.bf16.mxu0 0
      %1250 = vmatpush1.bf16.xpose.msra.mxu0 0
      %1251 = vmatprep.subr.bf16.mxu0 0
      %1252 = vmatpush1.bf16.xpose.msra.mxu0 0
      %1253 = vmatprep.mubr.bf16.mxu0 0
      %1254 = vmatmul.mubr.bf16.gmra.mrb[0].mxu0 %v1216
      %v1255 = vpop.f32.mrb[0].mxu0
      %v1256 = vadd.f32 0.0, %v1255
      %v1257 = vpop.f32.mrb[0].mxu0
      %v1258 = vpop.f32.mrb[0].mxu0
      %v1259 = vpop.f32.mrb[0].mxu0
      %1260 = vdwg.mxu0
      %v1261 = vsel %vm408, %v1256, -inf
      %1262 = vmax.xlane.f32.xlu0 %v1261
      %v1263 = vpop.xlane.xlu0 %1262
      %v1264 = vsub.f32 %v1256, %v1263
      %v1265 = vmul.f32 %v1264, 1.442695
      %v1266 = vpow.pop %v1265
      %v1267 = vsel %vm408, %v1266, 0.0
      %1268 = vadd.xlane.f32.xlu0 %v1267
      %v1269 = vpop.xlane.xlu0 %1268
      %v1270 = vrcp.pop %v1269
      %v1271 = vmul.f32 %v1266, %v1270
      %v1272 = vpack.c.bf16 %v1271, %v1271
      %1273 = vrot.lane.b32.xlu0 %v474, 76
      %v1274 = vpop.permute.xlu0 %1273
      %v1276 = vsel %vm408, %v1272, 0
      %v1279 = vsel %vm480, %v1274, 0
      %1281 = vmatprep.subr.bf16.mxu0 0
      %1282 = vmatpush1.bf16.msra.mxu0 %v1279
      %1283 = vmatprep.subr.bf16.mxu0 0
      %1284 = vmatpush1.bf16.msra.mxu0 0
      %1285 = vmatprep.subr.bf16.mxu0 0
      %1286 = vmatpush1.bf16.msra.mxu0 0
      %1287 = vmatprep.subr.bf16.mxu0 0
      %1288 = vmatpush1.bf16.msra.mxu0 0
      %1289 = vmatprep.subr.bf16.mxu0 0
      %1290 = vmatpush1.bf16.msra.mxu0 0
      %1291 = vmatprep.subr.bf16.mxu0 0
      %1292 = vmatpush1.bf16.msra.mxu0 0
      %1293 = vmatprep.subr.bf16.mxu0 0
      %1294 = vmatpush1.bf16.msra.mxu0 0
      %1295 = vmatprep.subr.bf16.mxu0 0
      %1296 = vmatpush1.bf16.msra.mxu0 0
      %1297 = vmatprep.subr.bf16.mxu0 0
      %1298 = vmatpush1.bf16.msra.mxu0 0
      %1299 = vmatprep.subr.bf16.mxu0 0
      %1300 = vmatpush1.bf16.msra.mxu0 0
      %1301 = vmatprep.subr.bf16.mxu0 0
      %1302 = vmatpush1.bf16.msra.mxu0 0
      %1303 = vmatprep.subr.bf16.mxu0 0
      %1304 = vmatpush1.bf16.msra.mxu0 0
      %1305 = vmatprep.subr.bf16.mxu0 0
      %1306 = vmatpush1.bf16.msra.mxu0 0
      %1307 = vmatprep.subr.bf16.mxu0 0
      %1308 = vmatpush1.bf16.msra.mxu0 0
      %1309 = vmatprep.subr.bf16.mxu0 0
      %1310 = vmatpush1.bf16.msra.mxu0 0
      %1311 = vmatprep.subr.bf16.mxu0 0
      %1312 = vmatpush1.bf16.msra.mxu0 0
      %1313 = vmatprep.mubr.bf16.mxu0 0
      %1314 = vmatmul.mubr.bf16.gmra.mrb[0].mxu0 %v1276
      %v1315 = vpop.f32.mrb[0].mxu0
      %v1316 = vadd.f32 0.0, %v1315
      %v1317 = vpop.f32.mrb[0].mxu0
      %v1318 = vpop.f32.mrb[0].mxu0
      %v1319 = vpop.f32.mrb[0].mxu0
      %1320 = vdwg.mxu0
      %v1321 = vpack.c.bf16 %v1316, %v1316
      %v1323 = vunpack.c.l.b16 %v406
      %v1324 = vpack.c.b16 %v1323, %v1323
      %v1325 = vrot.slane %v1324, 2
      %v1327 = vsel %vm408, %v1321, 0
      %v1330 = vsel %vm480, %v1325, 0
      %1332 = vmatprep.subr.bf16.mxu0 0
      %1333 = vmatpush1.bf16.msra.mxu0 %v1330
      %1334 = vmatprep.subr.bf16.mxu0 0
      %1335 = vmatpush1.bf16.msra.mxu0 0
      %1336 = vmatprep.subr.bf16.mxu0 0
      %1337 = vmatpush1.bf16.msra.mxu0 0
      %1338 = vmatprep.subr.bf16.mxu0 0
      %1339 = vmatpush1.bf16.msra.mxu0 0
      %1340 = vmatprep.subr.bf16.mxu0 0
      %1341 = vmatpush1.bf16.msra.mxu0 0
      %1342 = vmatprep.subr.bf16.mxu0 0
      %1343 = vmatpush1.bf16.msra.mxu0 0
      %1344 = vmatprep.subr.bf16.mxu0 0
      %1345 = vmatpush1.bf16.msra.mxu0 0
      %1346 = vmatprep.subr.bf16.mxu0 0
      %1347 = vmatpush1.bf16.msra.mxu0 0
      %1348 = vmatprep.subr.bf16.mxu0 0
      %1349 = vmatpush1.bf16.msra.mxu0 0
      %1350 = vmatprep.subr.bf16.mxu0 0
      %1351 = vmatpush1.bf16.msra.mxu0 0
      %1352 = vmatprep.subr.bf16.mxu0 0
      %1353 = vmatpush1.bf16.msra.mxu0 0
      %1354 = vmatprep.subr.bf16.mxu0 0
      %1355 = vmatpush1.bf16.msra.mxu0 0
      %1356 = vmatprep.subr.bf16.mxu0 0
      %1357 = vmatpush1.bf16.msra.mxu0 0
      %1358 = vmatprep.subr.bf16.mxu0 0
      %1359 = vmatpush1.bf16.msra.mxu0 0
      %1360 = vmatprep.subr.bf16.mxu0 0
      %1361 = vmatpush1.bf16.msra.mxu0 0
      %1362 = vmatprep.subr.bf16.mxu0 0
      %1363 = vmatpush1.bf16.msra.mxu0 0
      %1364 = vmatprep.mubr.bf16.mxu0 0
      %1365 = vmatmul.mubr.bf16.gmra.mrb[0].mxu0 %v1327
      %v1366 = vpop.f32.mrb[0].mxu0
      %v1367 = vadd.f32 0.0, %v1366
      %v1368 = vpop.f32.mrb[0].mxu0
      %v1369 = vpop.f32.mrb[0].mxu0
      %v1370 = vpop.f32.mrb[0].mxu0
      %1371 = vdwg.mxu0
      %v1372 = vadd.f32 %v1210, %v1367
      %1373 = vrot.lane.b32.xlu0 %v402, 104
      %v1374 = vpop.permute.xlu0 %1373
      %1375 = vrot.lane.b32.xlu0 %v474, 104
      %v1376 = vpop.permute.xlu0 %1375
      %v1378 = vsel %vm408, %v1374, 0
      %v1381 = vsel %vm408, %v1376, 0
      %1383 = vmatprep.subr.bf16.mxu0 0
      %1384 = vmatpush1.bf16.xpose.msra.mxu0 %v1381
      %1385 = vmatprep.subr.bf16.mxu0 0
      %1386 = vmatpush1.bf16.xpose.msra.mxu0 0
      %1387 = vmatprep.subr.bf16.mxu0 0
      %1388 = vmatpush1.bf16.xpose.msra.mxu0 0
      %1389 = vmatprep.subr.bf16.mxu0 0
      %1390 = vmatpush1.bf16.xpose.msra.mxu0 0
      %1391 = vmatprep.subr.bf16.mxu0 0
      %1392 = vmatpush1.bf16.xpose.msra.mxu0 0
      %1393 = vmatprep.subr.bf16.mxu0 0
      %1394 = vmatpush1.bf16.xpose.msra.mxu0 0
      %1395 = vmatprep.subr.bf16.mxu0 0
      %1396 = vmatpush1.bf16.xpose.msra.mxu0 0
      %1397 = vmatprep.subr.bf16.mxu0 0
      %1398 = vmatpush1.bf16.xpose.msra.mxu0 0
      %1399 = vmatprep.subr.bf16.mxu0 0
      %1400 = vmatpush1.bf16.xpose.msra.mxu0 0
      %1401 = vmatprep.subr.bf16.mxu0 0
      %1402 = vmatpush1.bf16.xpose.msra.mxu0 0
      %1403 = vmatprep.subr.bf16.mxu0 0
      %1404 = vmatpush1.bf16.xpose.msra.mxu0 0
      %1405 = vmatprep.subr.bf16.mxu0 0
      %1406 = vmatpush1.bf16.xpose.msra.mxu0 0
      %1407 = vmatprep.subr.bf16.mxu0 0
      %1408 = vmatpush1.bf16.xpose.msra.mxu0 0
      %1409 = vmatprep.subr.bf16.mxu0 0
      %1410 = vmatpush1.bf16.xpose.msra.mxu0 0
      %1411 = vmatprep.subr.bf16.mxu0 0
      %1412 = vmatpush1.bf16.xpose.msra.mxu0 0
      %1413 = vmatprep.subr.bf16.mxu0 0
      %1414 = vmatpush1.bf16.xpose.msra.mxu0 0
      %1415 = vmatprep.mubr.bf16.mxu0 0
      %1416 = vmatmul.mubr.bf16.gmra.mrb[0].mxu0 %v1378
      %v1417 = vpop.f32.mrb[0].mxu0
      %v1418 = vadd.f32 0.0, %v1417
      %v1419 = vpop.f32.mrb[0].mxu0
      %v1420 = vpop.f32.mrb[0].mxu0
      %v1421 = vpop.f32.mrb[0].mxu0
      %1422 = vdwg.mxu0
      %v1423 = vsel %vm408, %v1418, -inf
      %1424 = vmax.xlane.f32.xlu0 %v1423
      %v1425 = vpop.xlane.xlu0 %1424
      %v1426 = vsub.f32 %v1418, %v1425
      %v1427 = vmul.f32 %v1426, 1.442695
      %v1428 = vpow.pop %v1427
      %v1429 = vsel %vm408, %v1428, 0.0
      %1430 = vadd.xlane.f32.xlu0 %v1429
      %v1431 = vpop.xlane.xlu0 %1430
      %v1432 = vrcp.pop %v1431
      %v1433 = vmul.f32 %v1428, %v1432
      %v1434 = vpack.c.bf16 %v1433, %v1433
      %1435 = vrot.lane.b32.xlu0 %v474, 72
      %v1436 = vpop.permute.xlu0 %1435
      %v1438 = vsel %vm408, %v1434, 0
      %v1441 = vsel %vm480, %v1436, 0
      %1443 = vmatprep.subr.bf16.mxu0 0
      %1444 = vmatpush1.bf16.msra.mxu0 %v1441
      %1445 = vmatprep.subr.bf16.mxu0 0
      %1446 = vmatpush1.bf16.msra.mxu0 0
      %1447 = vmatprep.subr.bf16.mxu0 0
      %1448 = vmatpush1.bf16.msra.mxu0 0
      %1449 = vmatprep.subr.bf16.mxu0 0
      %1450 = vmatpush1.bf16.msra.mxu0 0
      %1451 = vmatprep.subr.bf16.mxu0 0
      %1452 = vmatpush1.bf16.msra.mxu0 0
      %1453 = vmatprep.subr.bf16.mxu0 0
      %1454 = vmatpush1.bf16.msra.mxu0 0
      %1455 = vmatprep.subr.bf16.mxu0 0
      %1456 = vmatpush1.bf16.msra.mxu0 0
      %1457 = vmatprep.subr.bf16.mxu0 0
      %1458 = vmatpush1.bf16.msra.mxu0 0
      %1459 = vmatprep.subr.bf16.mxu0 0
      %1460 = vmatpush1.bf16.msra.mxu0 0
      %1461 = vmatprep.subr.bf16.mxu0 0
      %1462 = vmatpush1.bf16.msra.mxu0 0
      %1463 = vmatprep.subr.bf16.mxu0 0
      %1464 = vmatpush1.bf16.msra.mxu0 0
      %1465 = vmatprep.subr.bf16.mxu0 0
      %1466 = vmatpush1.bf16.msra.mxu0 0
      %1467 = vmatprep.subr.bf16.mxu0 0
      %1468 = vmatpush1.bf16.msra.mxu0 0
      %1469 = vmatprep.subr.bf16.mxu0 0
      %1470 = vmatpush1.bf16.msra.mxu0 0
      %1471 = vmatprep.subr.bf16.mxu0 0
      %1472 = vmatpush1.bf16.msra.mxu0 0
      %1473 = vmatprep.subr.bf16.mxu0 0
      %1474 = vmatpush1.bf16.msra.mxu0 0
      %1475 = vmatprep.mubr.bf16.mxu0 0
      %1476 = vmatmul.mubr.bf16.gmra.mrb[0].mxu0 %v1438
      %v1477 = vpop.f32.mrb[0].mxu0
      %v1478 = vadd.f32 0.0, %v1477
      %v1479 = vpop.f32.mrb[0].mxu0
      %v1480 = vpop.f32.mrb[0].mxu0
      %v1481 = vpop.f32.mrb[0].mxu0
      %1482 = vdwg.mxu0
      %v1483 = vpack.c.bf16 %v1478, %v1478
      %v1485 = vsel %vm408, %v1483, 0
      %v1488 = vsel %vm480, %v407, 0
      %1490 = vmatprep.subr.bf16.mxu0 0
      %1491 = vmatpush1.bf16.msra.mxu0 %v1488
      %1492 = vmatprep.subr.bf16.mxu0 0
      %1493 = vmatpush1.bf16.msra.mxu0 0
      %1494 = vmatprep.subr.bf16.mxu0 0
      %1495 = vmatpush1.bf16.msra.mxu0 0
      %1496 = vmatprep.subr.bf16.mxu0 0
      %1497 = vmatpush1.bf16.msra.mxu0 0
      %1498 = vmatprep.subr.bf16.mxu0 0
      %1499 = vmatpush1.bf16.msra.mxu0 0
      %1500 = vmatprep.subr.bf16.mxu0 0
      %1501 = vmatpush1.bf16.msra.mxu0 0
      %1502 = vmatprep.subr.bf16.mxu0 0
      %1503 = vmatpush1.bf16.msra.mxu0 0
      %1504 = vmatprep.subr.bf16.mxu0 0
      %1505 = vmatpush1.bf16.msra.mxu0 0
      %1506 = vmatprep.subr.bf16.mxu0 0
      %1507 = vmatpush1.bf16.msra.mxu0 0
      %1508 = vmatprep.subr.bf16.mxu0 0
      %1509 = vmatpush1.bf16.msra.mxu0 0
      %1510 = vmatprep.subr.bf16.mxu0 0
      %1511 = vmatpush1.bf16.msra.mxu0 0
      %1512 = vmatprep.subr.bf16.mxu0 0
      %1513 = vmatpush1.bf16.msra.mxu0 0
      %1514 = vmatprep.subr.bf16.mxu0 0
      %1515 = vmatpush1.bf16.msra.mxu0 0
      %1516 = vmatprep.subr.bf16.mxu0 0
      %1517 = vmatpush1.bf16.msra.mxu0 0
      %1518 = vmatprep.subr.bf16.mxu0 0
      %1519 = vmatpush1.bf16.msra.mxu0 0
      %1520 = vmatprep.subr.bf16.mxu0 0
      %1521 = vmatpush1.bf16.msra.mxu0 0
      %1522 = vmatprep.mubr.bf16.mxu0 0
      %1523 = vmatmul.mubr.bf16.gmra.mrb[0].mxu0 %v1485
      %v1524 = vpop.f32.mrb[0].mxu0
      %v1525 = vadd.f32 0.0, %v1524
      %v1526 = vpop.f32.mrb[0].mxu0
      %v1527 = vpop.f32.mrb[0].mxu0
      %v1528 = vpop.f32.mrb[0].mxu0
      %1529 = vdwg.mxu0
      %v1530 = vadd.f32 %v1372, %v1525
      %1531 = vrot.lane.b32.xlu0 %v402, 100
      %v1532 = vpop.permute.xlu0 %1531
      %1533 = vrot.lane.b32.xlu0 %v474, 100
      %v1534 = vpop.permute.xlu0 %1533
      %v1536 = vsel %vm408, %v1532, 0
      %v1539 = vsel %vm408, %v1534, 0
      %1541 = vmatprep.subr.bf16.mxu0 0
      %1542 = vmatpush1.bf16.xpose.msra.mxu0 %v1539
      %1543 = vmatprep.subr.bf16.mxu0 0
      %1544 = vmatpush1.bf16.xpose.msra.mxu0 0
      %1545 = vmatprep.subr.bf16.mxu0 0
      %1546 = vmatpush1.bf16.xpose.msra.mxu0 0
      %1547 = vmatprep.subr.bf16.mxu0 0
      %1548 = vmatpush1.bf16.xpose.msra.mxu0 0
      %1549 = vmatprep.subr.bf16.mxu0 0
      %1550 = vmatpush1.bf16.xpose.msra.mxu0 0
      %1551 = vmatprep.subr.bf16.mxu0 0
      %1552 = vmatpush1.bf16.xpose.msra.mxu0 0
      %1553 = vmatprep.subr.bf16.mxu0 0
      %1554 = vmatpush1.bf16.xpose.msra.mxu0 0
      %1555 = vmatprep.subr.bf16.mxu0 0
      %1556 = vmatpush1.bf16.xpose.msra.mxu0 0
      %1557 = vmatprep.subr.bf16.mxu0 0
      %1558 = vmatpush1.bf16.xpose.msra.mxu0 0
      %1559 = vmatprep.subr.bf16.mxu0 0
      %1560 = vmatpush1.bf16.xpose.msra.mxu0 0
      %1561 = vmatprep.subr.bf16.mxu0 0
      %1562 = vmatpush1.bf16.xpose.msra.mxu0 0
      %1563 = vmatprep.subr.bf16.mxu0 0
      %1564 = vmatpush1.bf16.xpose.msra.mxu0 0
      %1565 = vmatprep.subr.bf16.mxu0 0
      %1566 = vmatpush1.bf16.xpose.msra.mxu0 0
      %1567 = vmatprep.subr.bf16.mxu0 0
      %1568 = vmatpush1.bf16.xpose.msra.mxu0 0
      %1569 = vmatprep.subr.bf16.mxu0 0
      %1570 = vmatpush1.bf16.xpose.msra.mxu0 0
      %1571 = vmatprep.subr.bf16.mxu0 0
      %1572 = vmatpush1.bf16.xpose.msra.mxu0 0
      %1573 = vmatprep.mubr.bf16.mxu0 0
      %1574 = vmatmul.mubr.bf16.gmra.mrb[0].mxu0 %v1536
      %v1575 = vpop.f32.mrb[0].mxu0
      %v1576 = vadd.f32 0.0, %v1575
      %v1577 = vpop.f32.mrb[0].mxu0
      %v1578 = vpop.f32.mrb[0].mxu0
      %v1579 = vpop.f32.mrb[0].mxu0
      %1580 = vdwg.mxu0
      %v1581 = vsel %vm408, %v1576, -inf
      %1582 = vmax.xlane.f32.xlu0 %v1581
      %v1583 = vpop.xlane.xlu0 %1582
      %v1584 = vsub.f32 %v1576, %v1583
      %v1585 = vmul.f32 %v1584, 1.442695
      %v1586 = vpow.pop %v1585
      %v1587 = vsel %vm408, %v1586, 0.0
      %1588 = vadd.xlane.f32.xlu0 %v1587
      %v1589 = vpop.xlane.xlu0 %1588
      %v1590 = vrcp.pop %v1589
      %v1591 = vmul.f32 %v1586, %v1590
      %v1592 = vpack.c.bf16 %v1591, %v1591
      %1593 = vrot.lane.b32.xlu0 %v474, 68
      %v1594 = vpop.permute.xlu0 %1593
      %v1596 = vsel %vm408, %v1592, 0
      %v1599 = vsel %vm480, %v1594, 0
      %1601 = vmatprep.subr.bf16.mxu0 0
      %1602 = vmatpush1.bf16.msra.mxu0 %v1599
      %1603 = vmatprep.subr.bf16.mxu0 0
      %1604 = vmatpush1.bf16.msra.mxu0 0
      %1605 = vmatprep.subr.bf16.mxu0 0
      %1606 = vmatpush1.bf16.msra.mxu0 0
      %1607 = vmatprep.subr.bf16.mxu0 0
      %1608 = vmatpush1.bf16.msra.mxu0 0
      %1609 = vmatprep.subr.bf16.mxu0 0
      %1610 = vmatpush1.bf16.msra.mxu0 0
      %1611 = vmatprep.subr.bf16.mxu0 0
      %1612 = vmatpush1.bf16.msra.mxu0 0
      %1613 = vmatprep.subr.bf16.mxu0 0
      %1614 = vmatpush1.bf16.msra.mxu0 0
      %1615 = vmatprep.subr.bf16.mxu0 0
      %1616 = vmatpush1.bf16.msra.mxu0 0
      %1617 = vmatprep.subr.bf16.mxu0 0
      %1618 = vmatpush1.bf16.msra.mxu0 0
      %1619 = vmatprep.subr.bf16.mxu0 0
      %1620 = vmatpush1.bf16.msra.mxu0 0
      %1621 = vmatprep.subr.bf16.mxu0 0
      %1622 = vmatpush1.bf16.msra.mxu0 0
      %1623 = vmatprep.subr.bf16.mxu0 0
      %1624 = vmatpush1.bf16.msra.mxu0 0
      %1625 = vmatprep.subr.bf16.mxu0 0
      %1626 = vmatpush1.bf16.msra.mxu0 0
      %1627 = vmatprep.subr.bf16.mxu0 0
      %1628 = vmatpush1.bf16.msra.mxu0 0
      %1629 = vmatprep.subr.bf16.mxu0 0
      %1630 = vmatpush1.bf16.msra.mxu0 0
      %1631 = vmatprep.subr.bf16.mxu0 0
      %1632 = vmatpush1.bf16.msra.mxu0 0
      %1633 = vmatprep.mubr.bf16.mxu0 0
      %1634 = vmatmul.mubr.bf16.gmra.mrb[0].mxu0 %v1596
      %v1635 = vpop.f32.mrb[0].mxu0
      %v1636 = vadd.f32 0.0, %v1635
      %v1637 = vpop.f32.mrb[0].mxu0
      %v1638 = vpop.f32.mrb[0].mxu0
      %v1639 = vpop.f32.mrb[0].mxu0
      %1640 = vdwg.mxu0
      %v1641 = vpack.c.bf16 %v1636, %v1636
      %v1643 = vunpack.c.l.b16 %v407
      %v1644 = vpack.c.b16 %v1643, %v1643
      %v1645 = vrot.slane %v1644, 2
      %v1647 = vsel %vm408, %v1641, 0
      %v1650 = vsel %vm480, %v1645, 0
      %1652 = vmatprep.subr.bf16.mxu0 0
      %1653 = vmatpush1.bf16.msra.mxu0 %v1650
      %1654 = vmatprep.subr.bf16.mxu0 0
      %1655 = vmatpush1.bf16.msra.mxu0 0
      %1656 = vmatprep.subr.bf16.mxu0 0
      %1657 = vmatpush1.bf16.msra.mxu0 0
      %1658 = vmatprep.subr.bf16.mxu0 0
      %1659 = vmatpush1.bf16.msra.mxu0 0
      %1660 = vmatprep.subr.bf16.mxu0 0
      %1661 = vmatpush1.bf16.msra.mxu0 0
      %1662 = vmatprep.subr.bf16.mxu0 0
      %1663 = vmatpush1.bf16.msra.mxu0 0
      %1664 = vmatprep.subr.bf16.mxu0 0
      %1665 = vmatpush1.bf16.msra.mxu0 0
      %1666 = vmatprep.subr.bf16.mxu0 0
      %1667 = vmatpush1.bf16.msra.mxu0 0
      %1668 = vmatprep.subr.bf16.mxu0 0
      %1669 = vmatpush1.bf16.msra.mxu0 0
      %1670 = vmatprep.subr.bf16.mxu0 0
      %1671 = vmatpush1.bf16.msra.mxu0 0
      %1672 = vmatprep.subr.bf16.mxu0 0
      %1673 = vmatpush1.bf16.msra.mxu0 0
      %1674 = vmatprep.subr.bf16.mxu0 0
      %1675 = vmatpush1.bf16.msra.mxu0 0
      %1676 = vmatprep.subr.bf16.mxu0 0
      %1677 = vmatpush1.bf16.msra.mxu0 0
      %1678 = vmatprep.subr.bf16.mxu0 0
      %1679 = vmatpush1.bf16.msra.mxu0 0
      %1680 = vmatprep.subr.bf16.mxu0 0
      %1681 = vmatpush1.bf16.msra.mxu0 0
      %1682 = vmatprep.subr.bf16.mxu0 0
      %1683 = vmatpush1.bf16.msra.mxu0 0
      %1684 = vmatprep.mubr.bf16.mxu0 0
      %1685 = vmatmul.mubr.bf16.gmra.mrb[0].mxu0 %v1647
      %v1686 = vpop.f32.mrb[0].mxu0
      %v1687 = vadd.f32 0.0, %v1686
      %v1688 = vpop.f32.mrb[0].mxu0
      %v1689 = vpop.f32.mrb[0].mxu0
      %v1690 = vpop.f32.mrb[0].mxu0
      %1691 = vdwg.mxu0
      %v1692 = vadd.f32 %v1530, %v1687
      %v1693 = vadd.f32 %v333, %v1692
      %v1694 = vld [vmem:[%s5] sm:$0x1]
      %v1696 = vlaneseq
      %v1697 = vshrl.u32 %v1696, 7
      %v1698 = vsub.s32 0, %v1697
      %v1699 = vrot.slane %v1694, %v1698
      %v1701 = vadd.f32 %v1693, %v1699
      %v1702 = vld [vmem:[%s6] sm:$0x1]
      %v1703 = vld [vmem:[%s7] sm:$0x1]
      %v1704 = vsel %vm358, %v1701, 0.0
      %1705 = vadd.xlane.f32.xlu0 %v1704
      %v1706 = vpop.xlane.xlu0 %1705
      %v1707 = vrcp.pop 32.0
      %v1708 = vmul.f32 %v1706, %v1707
      %v1709 = vsub.f32 %v1701, %v1708
      %v1710 = vmul.f32 %v1709, %v1709
      %v1711 = vsel %vm358, %v1710, 0.0
      %1712 = vadd.xlane.f32.xlu0 %v1711
      %v1713 = vpop.xlane.xlu0 %1712
      %v1714 = vmul.f32 %v1713, %v1707
      %v1715 = vadd.f32 %v1714, 1e-05
      %v1716 = vrsqrt.pop %v1715
      %v1717 = vmul.f32 %v1709, %v1716
      %v1719 = vlaneseq
      %v1720 = vshrl.u32 %v1719, 7
      %v1721 = vsub.s32 0, %v1720
      %v1722 = vrot.slane %v1702, %v1721
      %v1724 = vmul.f32 %v1717, %v1722
      %v1726 = vlaneseq
      %v1727 = vshrl.u32 %v1726, 7
      %v1728 = vsub.s32 0, %v1727
      %v1729 = vrot.slane %v1703, %v1728
      %v1731 = vadd.f32 %v1724, %v1729
      %1732 = vst.msk [vmem:[%s331] sm:$0xff] %vm358, %v1731
      %p1733 = scmp.lt.s32.totalorder %s23, 1
      %s1734 = scalar_select %p1733, %s23, 1
      %p1735 = scmp.lt.s32.totalorder %s24, 0
      %s1736 = scalar_select %p1735, %s24, 0
      %s1737 = sadd.s32 %s1736, %s1734
      %s1738 = smul.addr %s1737, 8
      %s1739 = scalar_lea.vmem %s8, %s1738
      // Predicated region
      $region53: #{image2report_forward.14} parent=51 // pred_check
        %p1740 = pneg %p226
      $region54: #{image2report_forward.14} parent=51 // pred_check_branch
        %1742 = sbr.rel (%p1740) target = $region56
      $region55: #{image2report_forward.14} parent=51 // pred_region
        _
      $region56: #{image2report_forward.14} parent=51 // pred_fallthru
        _
    $region52: #{image2report_forward.14} parent=5 // pred_fallthru
      _
    %p1743 = scmp.le.s32.totalorder 2, %s14
    // Predicated region
    $region57: #{image2report_forward.14} parent=5 // pred_check
      %p1744 = pneg %p1743
    $region58: #{image2report_forward.14} parent=5 // pred_check_branch
      %1746 = sbr.rel (%p1744) target = $region60
    $region59: #{image2report_forward.14} parent=5 // pred_region
      %s1747 = ssub.s32 %s14, 2
      // Predicated region
      $region61: #{image2report_forward.14} parent=59 // pred_check
        %p1748 = pneg %p232
      $region62: #{image2report_forward.14} parent=59 // pred_check_branch
        %1750 = sbr.rel (%p1748) target = $region64
      $region63: #{image2report_forward.14} parent=59 // pred_region
        %p1751 = scmp.lt.s32.totalorder %s25, 1
        %s1752 = scalar_select %p1751, %s25, 1
        %p1753 = scmp.lt.s32.totalorder %s26, 0
        %s1754 = scalar_select %p1753, %s26, 0
        %s1755 = sadd.s32 %s1754, %s1752
        %s1756 = smul.addr %s1755, 8
        %s1757 = scalar_lea.vmem %s8, %s1756
      $region64: #{image2report_forward.14} parent=59 // pred_fallthru
        _
    $region60: #{image2report_forward.14} parent=5 // pred_fallthru
      _
  $region6: #{image2report_forward.14} parent=0 // loop_footer
    %s18 = sadd.s32 1, %s14
  $region7: #{image2report_forward.14} parent=0 // loop_footer_branch
    %13 = sbr.rel target = $region3
  $region8: #{image2report_forward.14} parent=0 // loop_exit
    _

</llo_original>
